<compile_context>
chip_gen: v6e
topology: v6e:2x2x1
jax: 0.10.0
libtpu: 0.0.40
codegen_flags: <defaults>
</compile_context>

<pallas_src>
import functools
import numpy as np
import jax
import jax.numpy as jnp
from jax.experimental import pallas as pl
from jax.experimental.pallas import tpu as pltpu


# ----------------------------------------------------------------------------
# Pallas kernel: whole forward pass (all operands fit comfortably in VMEM).
# ----------------------------------------------------------------------------
def cnn_kernel(x1_ref,               # (B*T1, K*E)  bf16, conv1 im2col of embeds
               w1_ref,               # (K*E, C)     bf16
               w2_ref,               # (K*C, C)     bf16
               wfc_ref, bfc_ref,     # (T2*C, F1) bf16, (1, F1) f32
               wfc2_ref, bfc2_ref,   # (F1, F2) f32,   (1, F2) f32
               wout_ref, bout_ref,   # (F2, 1) f32,    (1, 1) f32
               out_ref,              # (B, 1) f32
               h1_s, x2_s, h2_s, hf_s,   # VMEM scratch
               *, B, T1, T2, K, C, eps):
    # ---- conv1: single im2col matmul (conv bias dropped; cancelled by bn1) ----
    h1 = jnp.dot(x1_ref[...], w1_ref[...], preferred_element_type=jnp.float32)

    # ---- bn1 (training batch stats, gamma=1, beta=0) + relu, stacked over B*T1
    m1 = jnp.mean(h1, axis=0, keepdims=True)
    v1 = jnp.maximum(jnp.mean(h1 * h1, axis=0, keepdims=True) - m1 * m1, 0.0)
    h1_s[...] = jnp.maximum((h1 - m1) * jax.lax.rsqrt(v1 + eps), 0.0)

    # ---- conv2 im2col into scratch: x2[b*T2+t, k*C+c] = h1[b*T1+t+k, c] ----
    # Static (T2, C) block-slab copies; B*K slabs total (tiny).
    for b in range(B):
        for k in range(K):
            x2_s[b * T2:(b + 1) * T2, k * C:(k + 1) * C] = \
                h1_s[b * T1 + k: b * T1 + k + T2, :]

    # ---- conv2: single matmul (B*T2, K*C)@(K*C, C) ----
    h2 = jnp.dot(x2_s[...].astype(jnp.bfloat16), w2_ref[...],
                 preferred_element_type=jnp.float32)

    # ---- bn2 + relu ----
    m2 = jnp.mean(h2, axis=0, keepdims=True)
    v2 = jnp.maximum(jnp.mean(h2 * h2, axis=0, keepdims=True) - m2 * m2, 0.0)
    h2_s[...] = jnp.maximum((h2 - m2) * jax.lax.rsqrt(v2 + eps), 0.0)

    # ---- flatten to (B, T2*C); torch's c*T2+t view order is absorbed into the
    #      pre-permuted fc weight, so row-major (t, c) packing is correct here.
    for b in range(B):
        for t in range(T2):
            hf_s[b:b + 1, t * C:(t + 1) * C] = \
                h2_s[b * T2 + t: b * T2 + t + 1, :]

    # ---- fc -> fc2 -> relu -> out, fully batched ----
    x3 = jnp.dot(hf_s[...].astype(jnp.bfloat16), wfc_ref[...],
                 preferred_element_type=jnp.float32) + bfc_ref[...]
    x4 = jnp.maximum(
        jnp.dot(x3, wfc2_ref[...], preferred_element_type=jnp.float32)
        + bfc2_ref[...], 0.0)
    out_ref[...] = (jnp.dot(x4, wout_ref[...], preferred_element_type=jnp.float32)
                    + bout_ref[...])


# ----------------------------------------------------------------------------
# One-time parameter preparation (hoisted out of the per-call path).
# ----------------------------------------------------------------------------
def prepare_params(params):
    (emb, w1_t, b1, w2_t, b2, wfc_t, bfc, wfc2_t, bfc2, wout_t, bout) = params
    del b1, b2  # cancelled exactly by the following BatchNorm (gamma=1, beta=0)
    C = w1_t.shape[0]
    E, K = w1_t.shape[2], w1_t.shape[3]
    F1 = wfc_t.shape[0]
    T2 = wfc_t.shape[1] // C
    F2 = wfc2_t.shape[0]

    # torch layouts -> kernel layouts (bf16 for MXU operands)
    w1 = jnp.transpose(w1_t[:, 0], (2, 1, 0)).reshape(K * E, C).astype(jnp.bfloat16)
    w2 = jnp.transpose(w2_t[:, :, 0, :], (2, 1, 0)).reshape(K * C, C).astype(jnp.bfloat16)
    # torch flatten index is c*T2 + t; build wfc row index t*C + c to match the
    # kernel's row-major (t, c) packing of h2.
    wfc = jnp.transpose(wfc_t.reshape(F1, C, T2), (2, 1, 0)) \
             .reshape(T2 * C, F1).astype(jnp.bfloat16)
    return dict(
        emb=emb, w1=w1, w2=w2, wfc=wfc,
        bfc=bfc.reshape(1, F1).astype(jnp.float32),
        wfc2=wfc2_t.T.astype(jnp.float32),
        bfc2=bfc2.reshape(1, F2).astype(jnp.float32),
        wout=wout_t.T.astype(jnp.float32),
        bout=bout.reshape(1, 1).astype(jnp.float32),
        K=int(K), E=int(E), C=int(C), T2=int(T2), F1=int(F1), F2=int(F2))


# ----------------------------------------------------------------------------
# Wrapper: embedding gather + conv1 im2col (glue), then pallas_call.
# ----------------------------------------------------------------------------
def cnn_forward(x_tokens, charges, kp):
    # `charges` accepted for signature parity; unused, exactly like forward()
    # (fc, not fc_charge, is applied).
    del charges
    B, L = x_tokens.shape
    K, E, C, T2 = kp["K"], kp["E"], kp["C"], kp["T2"]
    T1 = L - K + 1
    assert T2 == T1 - K + 1

    # embedding lookup (gather) — glue, done in plain JAX
    x_emb = kp["emb"][x_tokens].astype(jnp.float32)             # (B, L, E)
    # conv1 im2col (glue): x1[b*T1+t, k*E+e] = x_emb[b, t+k, e]
    x1 = jnp.concatenate([x_emb[:, k:k + T1, :] for k in range(K)], axis=-1)
    x1 = x1.reshape(B * T1, K * E).astype(jnp.bfloat16)

    kernel = functools.partial(cnn_kernel, B=B, T1=T1, T2=T2, K=K, C=C, eps=1e-5)
    vmem = pl.BlockSpec(memory_space=pltpu.MemorySpace.VMEM)

    # TODO(synk): at realistic batch sizes, grid over batch with
    # dimension_semantics=("parallel",) to use v7x's second TensorCore; needs a
    # two-pass / accumulator restructuring of the BatchNorm batch statistics.
    return pl.pallas_call(
        kernel,
        out_shape=jax.ShapeDtypeStruct((B, 1), jnp.float32),
        in_specs=[vmem] * 9,
        out_specs=vmem,
        scratch_shapes=[
            pltpu.VMEM((B * T1, C), jnp.float32),       # h1 (post bn1+relu)
            pltpu.VMEM((B * T2, K * C), jnp.float32),   # conv2 im2col
            pltpu.VMEM((B * T2, C), jnp.float32),       # h2 (post bn2+relu)
            pltpu.VMEM((B, T2 * C), jnp.float32),       # flattened for fc
        ],
    )(x1, kp["w1"], kp["w2"], kp["wfc"], kp["bfc"], kp["wfc2"], kp["bfc2"],
      kp["wout"], kp["bout"])


# ----------------------------------------------------------------------------
# Pure-JAX reference mirroring the PyTorch NCHW forward (for validation).
# ----------------------------------------------------------------------------
def cnn_reference(x_tokens, params, *, K):
    (emb, w1_t, b1, w2_t, b2, wfc_t, bfc, wfc2_t, bfc2, wout_t, bout) = params
    B = x_tokens.shape[0]
    x = emb[x_tokens].astype(jnp.float32)             # (B, L, E)
    x = jnp.transpose(x, (0, 2, 1))[:, None]          # (B, 1, E, L)  NCHW

    def bn_relu(y):
        mean = y.mean(axis=(0, 2, 3), keepdims=True)
        var = y.var(axis=(0, 2, 3), keepdims=True)    # biased, like BN training
        return jnp.maximum((y - mean) / jnp.sqrt(var + 1e-5), 0.0)

    dn = ('NCHW', 'OIHW', 'NCHW')
    y = jax.lax.conv_general_dilated(x, w1_t, (1, 1), 'VALID',
                                     dimension_numbers=dn)
    y = bn_relu(y + b1[None, :, None, None])
    y = jax.lax.conv_general_dilated(y, w2_t, (1, 1), 'VALID',
                                     dimension_numbers=dn)
    y = bn_relu(y + b2[None, :, None, None])
    y = y.reshape(B, -1)                               # (B, C*1*T2), torch order
    y = y @ wfc_t.T + bfc
    y = jnp.maximum(y @ wfc2_t.T + bfc2, 0.0)
    return y @ wout_t.T + bout


# ----------------------------------------------------------------------------
if __name__ == "__main__":
    # hyperparameters implied by the module
    vocab = {c: i for i, c in enumerate("-ACDEFGHIKLMNPQRSTVWY")}  # '-' = pad
    V = len(vocab)
    E = 20          # embedding_dim
    C = 256         # conv channels
    K = 3           # conv1_kernel
    L = 16          # wandb.config.max_length  (TODO(synk): wandb config replaced by constant)
    T2 = L - 2 * K + 2
    F1, F2 = 60, 20
    B = 2

    key = jax.random.PRNGKey(0)
    ks = jax.random.split(key, 14)

    emb = jax.random.normal(ks[0], (V, E), jnp.float32)
    emb = emb.at[vocab['-']].set(0.0)                      # padding_idx row = 0
    w1_t = jax.random.normal(ks[1], (C, 1, E, K), jnp.float32) / np.sqrt(E * K)
    b1 = 0.01 * jax.random.normal(ks[2], (C,), jnp.float32)
    b2_bias = 0.01 * jax.random.normal(ks[4], (C,), jnp.float32)
    w2_t = jax.random.normal(ks[3], (C, C, 1, K), jnp.float32) / np.sqrt(C * K)
    wfc_t = jax.random.normal(ks[5], (F1, C * T2), jnp.float32) / np.sqrt(C * T2)
    bfc = 0.01 * jax.random.normal(ks[6], (F1,), jnp.float32)
    wfc2_t = jax.random.normal(ks[7], (F2, F1), jnp.float32) / np.sqrt(F1)
    bfc2 = 0.01 * jax.random.normal(ks[8], (F2,), jnp.float32)
    wout_t = jax.random.normal(ks[9], (1, F2), jnp.float32) / np.sqrt(F2)
    bout = 0.01 * jax.random.normal(ks[10], (1,), jnp.float32)

    params = (emb, w1_t, b1, w2_t, b2_bias, wfc_t, bfc, wfc2_t, bfc2, wout_t, bout)

    x_tokens = jax.random.randint(ks[11], (B, L), 0, V, dtype=jnp.int32)
    charges = jax.random.uniform(ks[12], (B, 1), jnp.float32)   # unused by forward

    kparams = prepare_params(params)      # one-time weight layout transforms
    out = cnn_forward(x_tokens, charges, kparams)
    out = jax.block_until_ready(out)

    ref = jax.block_until_ready(cnn_reference(x_tokens, params, K=K))
    np.testing.assert_allclose(np.asarray(out), np.asarray(ref),
                               rtol=2e-2, atol=2e-2)
    assert out.shape == (B, 1)
    print("KERNEL_OK")
</pallas_src>

<mosaic_0001>
module attributes {stable_mosaic.version = 11 : i64} {
  func.func @cnn_kernel(%arg0: memref<28x60xbf16, #tpu.memory_space<vmem>>, %arg1: memref<60x256xbf16, #tpu.memory_space<vmem>>, %arg2: memref<768x256xbf16, #tpu.memory_space<vmem>>, %arg3: memref<3072x60xbf16, #tpu.memory_space<vmem>>, %arg4: memref<1x60xf32, #tpu.memory_space<vmem>>, %arg5: memref<60x20xf32, #tpu.memory_space<vmem>>, %arg6: memref<1x20xf32, #tpu.memory_space<vmem>>, %arg7: memref<20x1xf32, #tpu.memory_space<vmem>>, %arg8: memref<1x1xf32, #tpu.memory_space<vmem>>, %arg9: memref<2x1xf32, #tpu.memory_space<vmem>>, %arg10: memref<28x256xf32, #tpu.memory_space<vmem>>, %arg11: memref<24x768xf32, #tpu.memory_space<vmem>>, %arg12: memref<24x256xf32, #tpu.memory_space<vmem>>, %arg13: memref<2x3072xf32, #tpu.memory_space<vmem>>) attributes {dimension_semantics = [], scalar_prefetch = 0 : i64, scratch_operands = 4 : i64, tpu.core_type = #tpu.core_type<tc>} {
    %c0 = arith.constant 0 : index
    %c0_0 = arith.constant 0 : index
    %0 = vector.load %arg0[%c0, %c0_0] : memref<28x60xbf16, #tpu.memory_space<vmem>>, vector<28x60xbf16>
    %c0_1 = arith.constant 0 : index
    %c0_2 = arith.constant 0 : index
    %1 = vector.load %arg1[%c0_1, %c0_2] : memref<60x256xbf16, #tpu.memory_space<vmem>>, vector<60x256xbf16>
    %cst = arith.constant dense<0.000000e+00> : vector<28x256xf32>
    %2 = tpu.matmul %0, %1, %cst {dimension_numbers = #tpu.dot_dimension_numbers<[1], [0], [0], [1], [0, 0, 1, 1], [], []>} : vector<28x60xbf16>, vector<60x256xbf16>, vector<28x256xf32> -> vector<28x256xf32>
    %cst_3 = arith.constant dense<0.000000e+00> : vector<256xf32>
    %3 = vector.multi_reduction <add>, %2, %cst_3 [0] : vector<28x256xf32> to vector<256xf32>
    %4 = vector.shape_cast %3 : vector<256xf32> to vector<1x256xf32>
    %cst_4 = arith.constant 2.800000e+01 : f32
    %5 = vector.broadcast %cst_4 : f32 to vector<1x256xf32>
    %6 = arith.divf %4, %5 : vector<1x256xf32>
    %7 = arith.mulf %2, %2 : vector<28x256xf32>
    %cst_5 = arith.constant dense<0.000000e+00> : vector<256xf32>
    %8 = vector.multi_reduction <add>, %7, %cst_5 [0] : vector<28x256xf32> to vector<256xf32>
    %9 = vector.shape_cast %8 : vector<256xf32> to vector<1x256xf32>
    %cst_6 = arith.constant 2.800000e+01 : f32
    %10 = vector.broadcast %cst_6 : f32 to vector<1x256xf32>
    %11 = arith.divf %9, %10 : vector<1x256xf32>
    %12 = arith.mulf %6, %6 : vector<1x256xf32>
    %13 = arith.subf %11, %12 : vector<1x256xf32>
    %cst_7 = arith.constant 0.000000e+00 : f32
    %14 = vector.broadcast %cst_7 : f32 to vector<1x256xf32>
    %15 = arith.maximumf %13, %14 : vector<1x256xf32>
    %16 = vector.broadcast %6 : vector<1x256xf32> to vector<28x256xf32>
    %17 = arith.subf %2, %16 : vector<28x256xf32>
    %cst_8 = arith.constant 9.99999974E-6 : f32
    %18 = vector.broadcast %cst_8 : f32 to vector<1x256xf32>
    %19 = arith.addf %15, %18 : vector<1x256xf32>
    %20 = math.rsqrt %19 : vector<1x256xf32>
    %21 = vector.broadcast %20 : vector<1x256xf32> to vector<28x256xf32>
    %22 = arith.mulf %17, %21 : vector<28x256xf32>
    %cst_9 = arith.constant 0.000000e+00 : f32
    %23 = vector.broadcast %cst_9 : f32 to vector<28x256xf32>
    %24 = arith.maximumf %22, %23 : vector<28x256xf32>
    %c0_10 = arith.constant 0 : index
    %c0_11 = arith.constant 0 : index
    %25 = vector.load %arg10[%c0_10, %c0_11] : memref<28x256xf32, #tpu.memory_space<vmem>>, vector<28x256xf32>
    tpu.vector_store %arg10[%c0_10, %c0_11], %24 {strides = array<i32>} : memref<28x256xf32, #tpu.memory_space<vmem>>, vector<28x256xf32>,
    %c0_12 = arith.constant 0 : index
    %c0_13 = arith.constant 0 : index
    %26 = vector.load %arg10[%c0_12, %c0_13] : memref<28x256xf32, #tpu.memory_space<vmem>>, vector<12x256xf32>
    %c0_14 = arith.constant 0 : index
    %c0_15 = arith.constant 0 : index
    %27 = vector.load %arg11[%c0_14, %c0_15] : memref<24x768xf32, #tpu.memory_space<vmem>>, vector<12x256xf32>
    tpu.vector_store %arg11[%c0_14, %c0_15], %26 {strides = array<i32>} : memref<24x768xf32, #tpu.memory_space<vmem>>, vector<12x256xf32>,
    %c1 = arith.constant 1 : index
    %c0_16 = arith.constant 0 : index
    %28 = vector.load %arg10[%c1, %c0_16] : memref<28x256xf32, #tpu.memory_space<vmem>>, vector<12x256xf32>
    %c0_17 = arith.constant 0 : index
    %c256 = arith.constant 256 : index
    %29 = vector.load %arg11[%c0_17, %c256] : memref<24x768xf32, #tpu.memory_space<vmem>>, vector<12x256xf32>
    tpu.vector_store %arg11[%c0_17, %c256], %28 {strides = array<i32>} : memref<24x768xf32, #tpu.memory_space<vmem>>, vector<12x256xf32>,
    %c2 = arith.constant 2 : index
    %c0_18 = arith.constant 0 : index
    %30 = vector.load %arg10[%c2, %c0_18] : memref<28x256xf32, #tpu.memory_space<vmem>>, vector<12x256xf32>
    %c0_19 = arith.constant 0 : index
    %c512 = arith.constant 512 : index
    %31 = vector.load %arg11[%c0_19, %c512] : memref<24x768xf32, #tpu.memory_space<vmem>>, vector<12x256xf32>
    tpu.vector_store %arg11[%c0_19, %c512], %30 {strides = array<i32>} : memref<24x768xf32, #tpu.memory_space<vmem>>, vector<12x256xf32>,
    %c14 = arith.constant 14 : index
    %c0_20 = arith.constant 0 : index
    %32 = vector.load %arg10[%c14, %c0_20] : memref<28x256xf32, #tpu.memory_space<vmem>>, vector<12x256xf32>
    %c12 = arith.constant 12 : index
    %c0_21 = arith.constant 0 : index
    %33 = vector.load %arg11[%c12, %c0_21] : memref<24x768xf32, #tpu.memory_space<vmem>>, vector<12x256xf32>
    tpu.vector_store %arg11[%c12, %c0_21], %32 {strides = array<i32>} : memref<24x768xf32, #tpu.memory_space<vmem>>, vector<12x256xf32>,
    %c15 = arith.constant 15 : index
    %c0_22 = arith.constant 0 : index
    %34 = vector.load %arg10[%c15, %c0_22] : memref<28x256xf32, #tpu.memory_space<vmem>>, vector<12x256xf32>
    %c12_23 = arith.constant 12 : index
    %c256_24 = arith.constant 256 : index
    %35 = vector.load %arg11[%c12_23, %c256_24] : memref<24x768xf32, #tpu.memory_space<vmem>>, vector<12x256xf32>
    tpu.vector_store %arg11[%c12_23, %c256_24], %34 {strides = array<i32>} : memref<24x768xf32, #tpu.memory_space<vmem>>, vector<12x256xf32>,
    %c16 = arith.constant 16 : index
    %c0_25 = arith.constant 0 : index
    %36 = vector.load %arg10[%c16, %c0_25] : memref<28x256xf32, #tpu.memory_space<vmem>>, vector<12x256xf32>
    %c12_26 = arith.constant 12 : index
    %c512_27 = arith.constant 512 : index
    %37 = vector.load %arg11[%c12_26, %c512_27] : memref<24x768xf32, #tpu.memory_space<vmem>>, vector<12x256xf32>
    tpu.vector_store %arg11[%c12_26, %c512_27], %36 {strides = array<i32>} : memref<24x768xf32, #tpu.memory_space<vmem>>, vector<12x256xf32>,
    %c0_28 = arith.constant 0 : index
    %c0_29 = arith.constant 0 : index
    %38 = vector.load %arg11[%c0_28, %c0_29] : memref<24x768xf32, #tpu.memory_space<vmem>>, vector<24x768xf32>
    %39 = arith.truncf %38 : vector<24x768xf32> to vector<24x768xbf16>
    %c0_30 = arith.constant 0 : index
    %c0_31 = arith.constant 0 : index
    %40 = vector.load %arg2[%c0_30, %c0_31] : memref<768x256xbf16, #tpu.memory_space<vmem>>, vector<768x256xbf16>
    %cst_32 = arith.constant dense<0.000000e+00> : vector<24x256xf32>
    %41 = tpu.matmul %39, %40, %cst_32 {dimension_numbers = #tpu.dot_dimension_numbers<[1], [0], [0], [1], [0, 0, 1, 1], [], []>} : vector<24x768xbf16>, vector<768x256xbf16>, vector<24x256xf32> -> vector<24x256xf32>
    %cst_33 = arith.constant dense<0.000000e+00> : vector<256xf32>
    %42 = vector.multi_reduction <add>, %41, %cst_33 [0] : vector<24x256xf32> to vector<256xf32>
    %43 = vector.shape_cast %42 : vector<256xf32> to vector<1x256xf32>
    %cst_34 = arith.constant 2.400000e+01 : f32
    %44 = vector.broadcast %cst_34 : f32 to vector<1x256xf32>
    %45 = arith.divf %43, %44 : vector<1x256xf32>
    %46 = arith.mulf %41, %41 : vector<24x256xf32>
    %cst_35 = arith.constant dense<0.000000e+00> : vector<256xf32>
    %47 = vector.multi_reduction <add>, %46, %cst_35 [0] : vector<24x256xf32> to vector<256xf32>
    %48 = vector.shape_cast %47 : vector<256xf32> to vector<1x256xf32>
    %cst_36 = arith.constant 2.400000e+01 : f32
    %49 = vector.broadcast %cst_36 : f32 to vector<1x256xf32>
    %50 = arith.divf %48, %49 : vector<1x256xf32>
    %51 = arith.mulf %45, %45 : vector<1x256xf32>
    %52 = arith.subf %50, %51 : vector<1x256xf32>
    %cst_37 = arith.constant 0.000000e+00 : f32
    %53 = vector.broadcast %cst_37 : f32 to vector<1x256xf32>
    %54 = arith.maximumf %52, %53 : vector<1x256xf32>
    %55 = vector.broadcast %45 : vector<1x256xf32> to vector<24x256xf32>
    %56 = arith.subf %41, %55 : vector<24x256xf32>
    %cst_38 = arith.constant 9.99999974E-6 : f32
    %57 = vector.broadcast %cst_38 : f32 to vector<1x256xf32>
    %58 = arith.addf %54, %57 : vector<1x256xf32>
    %59 = math.rsqrt %58 : vector<1x256xf32>
    %60 = vector.broadcast %59 : vector<1x256xf32> to vector<24x256xf32>
    %61 = arith.mulf %56, %60 : vector<24x256xf32>
    %cst_39 = arith.constant 0.000000e+00 : f32
    %62 = vector.broadcast %cst_39 : f32 to vector<24x256xf32>
    %63 = arith.maximumf %61, %62 : vector<24x256xf32>
    %c0_40 = arith.constant 0 : index
    %c0_41 = arith.constant 0 : index
    %64 = vector.load %arg12[%c0_40, %c0_41] : memref<24x256xf32, #tpu.memory_space<vmem>>, vector<24x256xf32>
    tpu.vector_store %arg12[%c0_40, %c0_41], %63 {strides = array<i32>} : memref<24x256xf32, #tpu.memory_space<vmem>>, vector<24x256xf32>,
    %c0_42 = arith.constant 0 : index
    %c0_43 = arith.constant 0 : index
    %65 = vector.load %arg12[%c0_42, %c0_43] : memref<24x256xf32, #tpu.memory_space<vmem>>, vector<1x256xf32>
    %c0_44 = arith.constant 0 : index
    %c0_45 = arith.constant 0 : index
    %66 = vector.load %arg13[%c0_44, %c0_45] : memref<2x3072xf32, #tpu.memory_space<vmem>>, vector<1x256xf32>
    tpu.vector_store %arg13[%c0_44, %c0_45], %65 {strides = array<i32>} : memref<2x3072xf32, #tpu.memory_space<vmem>>, vector<1x256xf32>,
    %c1_46 = arith.constant 1 : index
    %c0_47 = arith.constant 0 : index
    %67 = vector.load %arg12[%c1_46, %c0_47] : memref<24x256xf32, #tpu.memory_space<vmem>>, vector<1x256xf32>
    %c0_48 = arith.constant 0 : index
    %c256_49 = arith.constant 256 : index
    %68 = vector.load %arg13[%c0_48, %c256_49] : memref<2x3072xf32, #tpu.memory_space<vmem>>, vector<1x256xf32>
    tpu.vector_store %arg13[%c0_48, %c256_49], %67 {strides = array<i32>} : memref<2x3072xf32, #tpu.memory_space<vmem>>, vector<1x256xf32>,
    %c2_50 = arith.constant 2 : index
    %c0_51 = arith.constant 0 : index
    %69 = vector.load %arg12[%c2_50, %c0_51] : memref<24x256xf32, #tpu.memory_space<vmem>>, vector<1x256xf32>
    %c0_52 = arith.constant 0 : index
    %c512_53 = arith.constant 512 : index
    %70 = vector.load %arg13[%c0_52, %c512_53] : memref<2x3072xf32, #tpu.memory_space<vmem>>, vector<1x256xf32>
    tpu.vector_store %arg13[%c0_52, %c512_53], %69 {strides = array<i32>} : memref<2x3072xf32, #tpu.memory_space<vmem>>, vector<1x256xf32>,
    %c3 = arith.constant 3 : index
    %c0_54 = arith.constant 0 : index
    %71 = vector.load %arg12[%c3, %c0_54] : memref<24x256xf32, #tpu.memory_space<vmem>>, vector<1x256xf32>
    %c0_55 = arith.constant 0 : index
    %c768 = arith.constant 768 : index
    %72 = vector.load %arg13[%c0_55, %c768] : memref<2x3072xf32, #tpu.memory_space<vmem>>, vector<1x256xf32>
    tpu.vector_store %arg13[%c0_55, %c768], %71 {strides = array<i32>} : memref<2x3072xf32, #tpu.memory_space<vmem>>, vector<1x256xf32>,
    %c4 = arith.constant 4 : index
    %c0_56 = arith.constant 0 : index
    %73 = vector.load %arg12[%c4, %c0_56] : memref<24x256xf32, #tpu.memory_space<vmem>>, vector<1x256xf32>
    %c0_57 = arith.constant 0 : index
    %c1024 = arith.constant 1024 : index
    %74 = vector.load %arg13[%c0_57, %c1024] : memref<2x3072xf32, #tpu.memory_space<vmem>>, vector<1x256xf32>
    tpu.vector_store %arg13[%c0_57, %c1024], %73 {strides = array<i32>} : memref<2x3072xf32, #tpu.memory_space<vmem>>, vector<1x256xf32>,
    %c5 = arith.constant 5 : index
    %c0_58 = arith.constant 0 : index
    %75 = vector.load %arg12[%c5, %c0_58] : memref<24x256xf32, #tpu.memory_space<vmem>>, vector<1x256xf32>
    %c0_59 = arith.constant 0 : index
    %c1280 = arith.constant 1280 : index
    %76 = vector.load %arg13[%c0_59, %c1280] : memref<2x3072xf32, #tpu.memory_space<vmem>>, vector<1x256xf32>
    tpu.vector_store %arg13[%c0_59, %c1280], %75 {strides = array<i32>} : memref<2x3072xf32, #tpu.memory_space<vmem>>, vector<1x256xf32>,
    %c6 = arith.constant 6 : index
    %c0_60 = arith.constant 0 : index
    %77 = vector.load %arg12[%c6, %c0_60] : memref<24x256xf32, #tpu.memory_space<vmem>>, vector<1x256xf32>
    %c0_61 = arith.constant 0 : index
    %c1536 = arith.constant 1536 : index
    %78 = vector.load %arg13[%c0_61, %c1536] : memref<2x3072xf32, #tpu.memory_space<vmem>>, vector<1x256xf32>
    tpu.vector_store %arg13[%c0_61, %c1536], %77 {strides = array<i32>} : memref<2x3072xf32, #tpu.memory_space<vmem>>, vector<1x256xf32>,
    %c7 = arith.constant 7 : index
    %c0_62 = arith.constant 0 : index
    %79 = vector.load %arg12[%c7, %c0_62] : memref<24x256xf32, #tpu.memory_space<vmem>>, vector<1x256xf32>
    %c0_63 = arith.constant 0 : index
    %c1792 = arith.constant 1792 : index
    %80 = vector.load %arg13[%c0_63, %c1792] : memref<2x3072xf32, #tpu.memory_space<vmem>>, vector<1x256xf32>
    tpu.vector_store %arg13[%c0_63, %c1792], %79 {strides = array<i32>} : memref<2x3072xf32, #tpu.memory_space<vmem>>, vector<1x256xf32>,
    %c8 = arith.constant 8 : index
    %c0_64 = arith.constant 0 : index
    %81 = vector.load %arg12[%c8, %c0_64] : memref<24x256xf32, #tpu.memory_space<vmem>>, vector<1x256xf32>
    %c0_65 = arith.constant 0 : index
    %c2048 = arith.constant 2048 : index
    %82 = vector.load %arg13[%c0_65, %c2048] : memref<2x3072xf32, #tpu.memory_space<vmem>>, vector<1x256xf32>
    tpu.vector_store %arg13[%c0_65, %c2048], %81 {strides = array<i32>} : memref<2x3072xf32, #tpu.memory_space<vmem>>, vector<1x256xf32>,
    %c9 = arith.constant 9 : index
    %c0_66 = arith.constant 0 : index
    %83 = vector.load %arg12[%c9, %c0_66] : memref<24x256xf32, #tpu.memory_space<vmem>>, vector<1x256xf32>
    %c0_67 = arith.constant 0 : index
    %c2304 = arith.constant 2304 : index
    %84 = vector.load %arg13[%c0_67, %c2304] : memref<2x3072xf32, #tpu.memory_space<vmem>>, vector<1x256xf32>
    tpu.vector_store %arg13[%c0_67, %c2304], %83 {strides = array<i32>} : memref<2x3072xf32, #tpu.memory_space<vmem>>, vector<1x256xf32>,
    %c10 = arith.constant 10 : index
    %c0_68 = arith.constant 0 : index
    %85 = vector.load %arg12[%c10, %c0_68] : memref<24x256xf32, #tpu.memory_space<vmem>>, vector<1x256xf32>
    %c0_69 = arith.constant 0 : index
    %c2560 = arith.constant 2560 : index
    %86 = vector.load %arg13[%c0_69, %c2560] : memref<2x3072xf32, #tpu.memory_space<vmem>>, vector<1x256xf32>
    tpu.vector_store %arg13[%c0_69, %c2560], %85 {strides = array<i32>} : memref<2x3072xf32, #tpu.memory_space<vmem>>, vector<1x256xf32>,
    %c11 = arith.constant 11 : index
    %c0_70 = arith.constant 0 : index
    %87 = vector.load %arg12[%c11, %c0_70] : memref<24x256xf32, #tpu.memory_space<vmem>>, vector<1x256xf32>
    %c0_71 = arith.constant 0 : index
    %c2816 = arith.constant 2816 : index
    %88 = vector.load %arg13[%c0_71, %c2816] : memref<2x3072xf32, #tpu.memory_space<vmem>>, vector<1x256xf32>
    tpu.vector_store %arg13[%c0_71, %c2816], %87 {strides = array<i32>} : memref<2x3072xf32, #tpu.memory_space<vmem>>, vector<1x256xf32>,
    %c12_72 = arith.constant 12 : index
    %c0_73 = arith.constant 0 : index
    %89 = vector.load %arg12[%c12_72, %c0_73] : memref<24x256xf32, #tpu.memory_space<vmem>>, vector<1x256xf32>
    %c1_74 = arith.constant 1 : index
    %c0_75 = arith.constant 0 : index
    %90 = vector.load %arg13[%c1_74, %c0_75] : memref<2x3072xf32, #tpu.memory_space<vmem>>, vector<1x256xf32>
    tpu.vector_store %arg13[%c1_74, %c0_75], %89 {strides = array<i32>} : memref<2x3072xf32, #tpu.memory_space<vmem>>, vector<1x256xf32>,
    %c13 = arith.constant 13 : index
    %c0_76 = arith.constant 0 : index
    %91 = vector.load %arg12[%c13, %c0_76] : memref<24x256xf32, #tpu.memory_space<vmem>>, vector<1x256xf32>
    %c1_77 = arith.constant 1 : index
    %c256_78 = arith.constant 256 : index
    %92 = vector.load %arg13[%c1_77, %c256_78] : memref<2x3072xf32, #tpu.memory_space<vmem>>, vector<1x256xf32>
    tpu.vector_store %arg13[%c1_77, %c256_78], %91 {strides = array<i32>} : memref<2x3072xf32, #tpu.memory_space<vmem>>, vector<1x256xf32>,
    %c14_79 = arith.constant 14 : index
    %c0_80 = arith.constant 0 : index
    %93 = vector.load %arg12[%c14_79, %c0_80] : memref<24x256xf32, #tpu.memory_space<vmem>>, vector<1x256xf32>
    %c1_81 = arith.constant 1 : index
    %c512_82 = arith.constant 512 : index
    %94 = vector.load %arg13[%c1_81, %c512_82] : memref<2x3072xf32, #tpu.memory_space<vmem>>, vector<1x256xf32>
    tpu.vector_store %arg13[%c1_81, %c512_82], %93 {strides = array<i32>} : memref<2x3072xf32, #tpu.memory_space<vmem>>, vector<1x256xf32>,
    %c15_83 = arith.constant 15 : index
    %c0_84 = arith.constant 0 : index
    %95 = vector.load %arg12[%c15_83, %c0_84] : memref<24x256xf32, #tpu.memory_space<vmem>>, vector<1x256xf32>
    %c1_85 = arith.constant 1 : index
    %c768_86 = arith.constant 768 : index
    %96 = vector.load %arg13[%c1_85, %c768_86] : memref<2x3072xf32, #tpu.memory_space<vmem>>, vector<1x256xf32>
    tpu.vector_store %arg13[%c1_85, %c768_86], %95 {strides = array<i32>} : memref<2x3072xf32, #tpu.memory_space<vmem>>, vector<1x256xf32>,
    %c16_87 = arith.constant 16 : index
    %c0_88 = arith.constant 0 : index
    %97 = vector.load %arg12[%c16_87, %c0_88] : memref<24x256xf32, #tpu.memory_space<vmem>>, vector<1x256xf32>
    %c1_89 = arith.constant 1 : index
    %c1024_90 = arith.constant 1024 : index
    %98 = vector.load %arg13[%c1_89, %c1024_90] : memref<2x3072xf32, #tpu.memory_space<vmem>>, vector<1x256xf32>
    tpu.vector_store %arg13[%c1_89, %c1024_90], %97 {strides = array<i32>} : memref<2x3072xf32, #tpu.memory_space<vmem>>, vector<1x256xf32>,
    %c17 = arith.constant 17 : index
    %c0_91 = arith.constant 0 : index
    %99 = vector.load %arg12[%c17, %c0_91] : memref<24x256xf32, #tpu.memory_space<vmem>>, vector<1x256xf32>
    %c1_92 = arith.constant 1 : index
    %c1280_93 = arith.constant 1280 : index
    %100 = vector.load %arg13[%c1_92, %c1280_93] : memref<2x3072xf32, #tpu.memory_space<vmem>>, vector<1x256xf32>
    tpu.vector_store %arg13[%c1_92, %c1280_93], %99 {strides = array<i32>} : memref<2x3072xf32, #tpu.memory_space<vmem>>, vector<1x256xf32>,
    %c18 = arith.constant 18 : index
    %c0_94 = arith.constant 0 : index
    %101 = vector.load %arg12[%c18, %c0_94] : memref<24x256xf32, #tpu.memory_space<vmem>>, vector<1x256xf32>
    %c1_95 = arith.constant 1 : index
    %c1536_96 = arith.constant 1536 : index
    %102 = vector.load %arg13[%c1_95, %c1536_96] : memref<2x3072xf32, #tpu.memory_space<vmem>>, vector<1x256xf32>
    tpu.vector_store %arg13[%c1_95, %c1536_96], %101 {strides = array<i32>} : memref<2x3072xf32, #tpu.memory_space<vmem>>, vector<1x256xf32>,
    %c19 = arith.constant 19 : index
    %c0_97 = arith.constant 0 : index
    %103 = vector.load %arg12[%c19, %c0_97] : memref<24x256xf32, #tpu.memory_space<vmem>>, vector<1x256xf32>
    %c1_98 = arith.constant 1 : index
    %c1792_99 = arith.constant 1792 : index
    %104 = vector.load %arg13[%c1_98, %c1792_99] : memref<2x3072xf32, #tpu.memory_space<vmem>>, vector<1x256xf32>
    tpu.vector_store %arg13[%c1_98, %c1792_99], %103 {strides = array<i32>} : memref<2x3072xf32, #tpu.memory_space<vmem>>, vector<1x256xf32>,
    %c20 = arith.constant 20 : index
    %c0_100 = arith.constant 0 : index
    %105 = vector.load %arg12[%c20, %c0_100] : memref<24x256xf32, #tpu.memory_space<vmem>>, vector<1x256xf32>
    %c1_101 = arith.constant 1 : index
    %c2048_102 = arith.constant 2048 : index
    %106 = vector.load %arg13[%c1_101, %c2048_102] : memref<2x3072xf32, #tpu.memory_space<vmem>>, vector<1x256xf32>
    tpu.vector_store %arg13[%c1_101, %c2048_102], %105 {strides = array<i32>} : memref<2x3072xf32, #tpu.memory_space<vmem>>, vector<1x256xf32>,
    %c21 = arith.constant 21 : index
    %c0_103 = arith.constant 0 : index
    %107 = vector.load %arg12[%c21, %c0_103] : memref<24x256xf32, #tpu.memory_space<vmem>>, vector<1x256xf32>
    %c1_104 = arith.constant 1 : index
    %c2304_105 = arith.constant 2304 : index
    %108 = vector.load %arg13[%c1_104, %c2304_105] : memref<2x3072xf32, #tpu.memory_space<vmem>>, vector<1x256xf32>
    tpu.vector_store %arg13[%c1_104, %c2304_105], %107 {strides = array<i32>} : memref<2x3072xf32, #tpu.memory_space<vmem>>, vector<1x256xf32>,
    %c22 = arith.constant 22 : index
    %c0_106 = arith.constant 0 : index
    %109 = vector.load %arg12[%c22, %c0_106] : memref<24x256xf32, #tpu.memory_space<vmem>>, vector<1x256xf32>
    %c1_107 = arith.constant 1 : index
    %c2560_108 = arith.constant 2560 : index
    %110 = vector.load %arg13[%c1_107, %c2560_108] : memref<2x3072xf32, #tpu.memory_space<vmem>>, vector<1x256xf32>
    tpu.vector_store %arg13[%c1_107, %c2560_108], %109 {strides = array<i32>} : memref<2x3072xf32, #tpu.memory_space<vmem>>, vector<1x256xf32>,
    %c23 = arith.constant 23 : index
    %c0_109 = arith.constant 0 : index
    %111 = vector.load %arg12[%c23, %c0_109] : memref<24x256xf32, #tpu.memory_space<vmem>>, vector<1x256xf32>
    %c1_110 = arith.constant 1 : index
    %c2816_111 = arith.constant 2816 : index
    %112 = vector.load %arg13[%c1_110, %c2816_111] : memref<2x3072xf32, #tpu.memory_space<vmem>>, vector<1x256xf32>
    tpu.vector_store %arg13[%c1_110, %c2816_111], %111 {strides = array<i32>} : memref<2x3072xf32, #tpu.memory_space<vmem>>, vector<1x256xf32>,
    %c0_112 = arith.constant 0 : index
    %c0_113 = arith.constant 0 : index
    %113 = vector.load %arg13[%c0_112, %c0_113] : memref<2x3072xf32, #tpu.memory_space<vmem>>, vector<2x3072xf32>
    %114 = arith.truncf %113 : vector<2x3072xf32> to vector<2x3072xbf16>
    %c0_114 = arith.constant 0 : index
    %c0_115 = arith.constant 0 : index
    %115 = vector.load %arg3[%c0_114, %c0_115] : memref<3072x60xbf16, #tpu.memory_space<vmem>>, vector<3072x60xbf16>
    %cst_116 = arith.constant dense<0.000000e+00> : vector<2x60xf32>
    %116 = tpu.matmul %114, %115, %cst_116 {dimension_numbers = #tpu.dot_dimension_numbers<[1], [0], [0], [1], [0, 0, 1, 1], [], []>} : vector<2x3072xbf16>, vector<3072x60xbf16>, vector<2x60xf32> -> vector<2x60xf32>
    %c0_117 = arith.constant 0 : index
    %c0_118 = arith.constant 0 : index
    %117 = vector.load %arg4[%c0_117, %c0_118] : memref<1x60xf32, #tpu.memory_space<vmem>>, vector<1x60xf32>
    %118 = vector.broadcast %117 : vector<1x60xf32> to vector<2x60xf32>
    %119 = arith.addf %116, %118 : vector<2x60xf32>
    %c0_119 = arith.constant 0 : index
    %c0_120 = arith.constant 0 : index
    %120 = vector.load %arg5[%c0_119, %c0_120] : memref<60x20xf32, #tpu.memory_space<vmem>>, vector<60x20xf32>
    %cst_121 = arith.constant dense<0.000000e+00> : vector<2x20xf32>
    %121 = tpu.matmul %119, %120, %cst_121 {dimension_numbers = #tpu.dot_dimension_numbers<[1], [0], [0], [1], [0, 0, 1, 1], [], []>} : vector<2x60xf32>, vector<60x20xf32>, vector<2x20xf32> -> vector<2x20xf32>
    %c0_122 = arith.constant 0 : index
    %c0_123 = arith.constant 0 : index
    %122 = vector.load %arg6[%c0_122, %c0_123] : memref<1x20xf32, #tpu.memory_space<vmem>>, vector<1x20xf32>
    %123 = vector.broadcast %122 : vector<1x20xf32> to vector<2x20xf32>
    %124 = arith.addf %121, %123 : vector<2x20xf32>
    %cst_124 = arith.constant 0.000000e+00 : f32
    %125 = vector.broadcast %cst_124 : f32 to vector<2x20xf32>
    %126 = arith.maximumf %124, %125 : vector<2x20xf32>
    %c0_125 = arith.constant 0 : index
    %c0_126 = arith.constant 0 : index
    %127 = vector.load %arg7[%c0_125, %c0_126] : memref<20x1xf32, #tpu.memory_space<vmem>>, vector<20x1xf32>
    %cst_127 = arith.constant dense<0.000000e+00> : vector<2x1xf32>
    %128 = tpu.matmul %126, %127, %cst_127 {dimension_numbers = #tpu.dot_dimension_numbers<[1], [0], [0], [1], [0, 0, 1, 1], [], []>} : vector<2x20xf32>, vector<20x1xf32>, vector<2x1xf32> -> vector<2x1xf32>
    %c0_128 = arith.constant 0 : index
    %c0_129 = arith.constant 0 : index
    %129 = vector.load %arg8[%c0_128, %c0_129] : memref<1x1xf32, #tpu.memory_space<vmem>>, vector<1x1xf32>
    %130 = vector.broadcast %129 : vector<1x1xf32> to vector<2x1xf32>
    %131 = arith.addf %128, %130 : vector<2x1xf32>
    %c0_130 = arith.constant 0 : index
    %c0_131 = arith.constant 0 : index
    %132 = vector.load %arg9[%c0_130, %c0_131] : memref<2x1xf32, #tpu.memory_space<vmem>>, vector<2x1xf32>
    tpu.vector_store %arg9[%c0_130, %c0_131], %131 {strides = array<i32>} : memref<2x1xf32, #tpu.memory_space<vmem>>, vector<2x1xf32>,
    return
  }
}

</mosaic_0001>

<llo_original>
// kernel: tpu_custom_call.1
$region0: #{tpu_custom_call.1}
  #allocation0 [shape = 'u32[]', space=smem, size = 0x4, offset = 0x4, fixed_abs, tag = 'smem constant byte address 0x4 - core index']
  #allocation1 [shape = 'u32[144,128]{1,0:T(1,128)}', space=vmem, size = 0x12000, scoped, tag = 'internal scratch']
  #allocation2 [shape = 'f32[28,256]{1,0:T(8,128)}', space=vmem, size = 0x8000, scoped, tag = 'scratch operand']
  #allocation3 [shape = 'f32[24,768]{1,0:T(8,128)}', space=vmem, size = 0x12000, scoped, tag = 'scratch operand']
  #allocation4 [shape = 'f32[24,256]{1,0:T(8,128)}', space=vmem, size = 0x6000, scoped, tag = 'scratch operand']
  #allocation5 [shape = 'f32[2,3072]{1,0:T(2,128)}', space=vmem, size = 0x6000, scoped, tag = 'scratch operand']
  #allocation6 [shape = 'f32[1,1]{1,0:T(1,128)S(1)}', space=vmem, size = 0x200, scoped, tag = 'scoped memory for tpu_custom_call.1']
  %s0 = inlined_call_operand.vmem [shape: bf16[28,60], index: 0, kind: input, shape index: {}]
  %s1 = inlined_call_operand.vmem [shape: bf16[60,256], index: 1, kind: input, shape index: {}]
  %s2 = inlined_call_operand.vmem [shape: bf16[768,256], index: 2, kind: input, shape index: {}]
  %s3 = inlined_call_operand.vmem [shape: bf16[3072,60], index: 3, kind: input, shape index: {}]
  %s4 = inlined_call_operand.vmem [shape: f32[1,60], index: 4, kind: input, shape index: {}]
  %s5 = inlined_call_operand.vmem [shape: f32[60,20], index: 5, kind: input, shape index: {}]
  %s6 = inlined_call_operand.vmem [shape: f32[1,20], index: 6, kind: input, shape index: {}]
  %s7 = inlined_call_operand.vmem [shape: f32[20,1], index: 7, kind: input, shape index: {}]
  %s8 = inlined_call_operand.<no memory space> [shape: f32[1,1], index: 8, kind: input, shape index: {}]
  %s9 = inlined_call_operand.vmem [shape: f32[2,1], index: 9, kind: output, shape index: {}]
  %s10 = sld [smem:[#allocation0]]
  $region46: #{tpu_custom_call.1} parent=0
    _
  %s12 = ssub.s32 1, %s10
  %s13 = scalar_select 0, %s12, %s10
  %v14 = vstv %s8
  %15 = vst [vmem:[#allocation6] sm:$0x1] %v14
  // Predicated region
  $region2: #{tpu_custom_call.1} parent=0 // pred_check
    _
  $region3: #{tpu_custom_call.1} parent=0 // pred_check_branch
    %17 = sbr.rel (0) target = $region5
  $region4: #{tpu_custom_call.1} parent=0 // pred_region
    _
  $region5: #{tpu_custom_call.1} parent=0 // pred_fallthru
    _
  // Predicated region
  $region6: #{tpu_custom_call.1} parent=0 // pred_check
    _
  $region7: #{tpu_custom_call.1} parent=0 // pred_check_branch
    %19 = sbr.rel (0) target = $region9
  $region8: #{tpu_custom_call.1} parent=0 // pred_region
    _
  $region9: #{tpu_custom_call.1} parent=0 // pred_fallthru
    _
  // Predicated region
  $region10: #{tpu_custom_call.1} parent=0 // pred_check
    _
  $region11: #{tpu_custom_call.1} parent=0 // pred_check_branch
    %21 = sbr.rel (0) target = $region13
  $region12: #{tpu_custom_call.1} parent=0 // pred_region
    _
  $region13: #{tpu_custom_call.1} parent=0 // pred_fallthru
    _
  // Predicated region
  $region14: #{tpu_custom_call.1} parent=0 // pred_check
    _
  $region15: #{tpu_custom_call.1} parent=0 // pred_check_branch
    %23 = sbr.rel (0) target = $region17
  $region16: #{tpu_custom_call.1} parent=0 // pred_region
    _
  $region17: #{tpu_custom_call.1} parent=0 // pred_fallthru
    _
  // Predicated region
  $region18: #{tpu_custom_call.1} parent=0 // pred_check
    _
  $region19: #{tpu_custom_call.1} parent=0 // pred_check_branch
    %25 = sbr.rel (0) target = $region21
  $region20: #{tpu_custom_call.1} parent=0 // pred_region
    _
  $region21: #{tpu_custom_call.1} parent=0 // pred_fallthru
    _
  // Predicated region
  $region22: #{tpu_custom_call.1} parent=0 // pred_check
    _
  $region23: #{tpu_custom_call.1} parent=0 // pred_check_branch
    %27 = sbr.rel (0) target = $region25
  $region24: #{tpu_custom_call.1} parent=0 // pred_region
    _
  $region25: #{tpu_custom_call.1} parent=0 // pred_fallthru
    _
  // Predicated region
  $region26: #{tpu_custom_call.1} parent=0 // pred_check
    _
  $region27: #{tpu_custom_call.1} parent=0 // pred_check_branch
    %29 = sbr.rel (0) target = $region29
  $region28: #{tpu_custom_call.1} parent=0 // pred_region
    _
  $region29: #{tpu_custom_call.1} parent=0 // pred_fallthru
    _
  // Predicated region
  $region30: #{tpu_custom_call.1} parent=0 // pred_check
    _
  $region31: #{tpu_custom_call.1} parent=0 // pred_check_branch
    %31 = sbr.rel (0) target = $region33
  $region32: #{tpu_custom_call.1} parent=0 // pred_region
    _
  $region33: #{tpu_custom_call.1} parent=0 // pred_fallthru
    _
  // Predicated region
  $region34: #{tpu_custom_call.1} parent=0 // pred_check
    _
  $region35: #{tpu_custom_call.1} parent=0 // pred_check_branch
    %33 = sbr.rel (0) target = $region37
  $region36: #{tpu_custom_call.1} parent=0 // pred_region
    _
  $region37: #{tpu_custom_call.1} parent=0 // pred_fallthru
    _
  %v35 = vld [vmem:[%s0] sm:$0xf]
  %v36 = vld [vmem:[%s0 + $0x4] sm:$0xf]
  %v37 = vld [vmem:[%s0 + $0x8] sm:$0xf]
  %v38 = vld [vmem:[%s0 + $0xc] sm:$0x3]
  %v39 = vld [vmem:[%s1] sm:$0xff]
  %v40 = vld [vmem:[%s1 + $0x8] sm:$0xff]
  %v41 = vld [vmem:[%s1 + $0x10] sm:$0xff]
  %v42 = vld [vmem:[%s1 + $0x18] sm:$0xff]
  %v43 = vld [vmem:[%s1 + $0x20] sm:$0xff]
  %v44 = vld [vmem:[%s1 + $0x28] sm:$0xff]
  %v45 = vld [vmem:[%s1 + $0x30] sm:$0xff]
  %v46 = vld [vmem:[%s1 + $0x38] sm:$0x33]
  %v51 = vunpack.c.l.b16 %v35
  %v52 = vunpack.c.l.b16 %v36
  %v53 = vunpack.c.l.b16 %v37
  %v54 = vunpack.c.l.b16 %v38
  %v55 = vpack.c.b16 %v52, %v51
  %v56 = vpack.c.b16 %v54, %v53
  %v65 = vunpack.c.l.b16 %v39
  %v66 = vunpack.c.h.b16 %v39
  %v67 = vunpack.c.l.b16 %v40
  %v68 = vunpack.c.h.b16 %v40
  %v69 = vunpack.c.l.b16 %v41
  %v70 = vunpack.c.h.b16 %v41
  %v71 = vunpack.c.l.b16 %v42
  %v72 = vunpack.c.h.b16 %v42
  %v73 = vunpack.c.l.b16 %v43
  %v74 = vunpack.c.h.b16 %v43
  %v75 = vunpack.c.l.b16 %v44
  %v76 = vunpack.c.h.b16 %v44
  %v77 = vunpack.c.l.b16 %v45
  %v78 = vunpack.c.h.b16 %v45
  %v79 = vunpack.c.l.b16 %v46
  %v80 = vunpack.c.h.b16 %v46
  %v81 = vpack.c.b16 %v67, %v65
  %v82 = vpack.c.b16 %v68, %v66
  %v83 = vpack.c.b16 %v71, %v69
  %v84 = vpack.c.b16 %v72, %v70
  %v85 = vpack.c.b16 %v75, %v73
  %v86 = vpack.c.b16 %v76, %v74
  %v87 = vpack.c.b16 %v79, %v77
  %v88 = vpack.c.b16 %v80, %v78
  %vm95 = vcmask 490496
  %v97 = vsel %vm95, %v55, 0
  %v100 = vsel %vm95, %v56, 0
  %vm102 = vcmask 1045504
  %v104 = vsel %vm102, %v87, 0
  %v107 = vsel %vm102, %v88, 0
  %109 = vmatprep.subr.bf16.mxu0 0
  %110 = vmatpush1.bf16.msra.mxu0 0
  %111 = vmatprep.subr.bf16.mxu0 0
  %112 = vmatpush1.bf16.msra.mxu0 0
  %113 = vmatprep.subr.bf16.mxu0 0
  %114 = vmatpush1.bf16.msra.mxu0 0
  %115 = vmatprep.subr.bf16.mxu0 0
  %116 = vmatpush1.bf16.msra.mxu0 0
  %117 = vmatprep.subr.bf16.mxu0 %v107
  %118 = vmatpush1.bf16.msra.mxu0 %v104
  %119 = vmatprep.subr.bf16.mxu0 %v86
  %120 = vmatpush1.bf16.msra.mxu0 %v85
  %121 = vmatprep.subr.bf16.mxu0 %v84
  %122 = vmatpush1.bf16.msra.mxu0 %v83
  %123 = vmatprep.subr.bf16.mxu0 %v82
  %124 = vmatpush1.bf16.msra.mxu0 %v81
  %125 = vmatprep.subr.bf16.mxu0 0
  %126 = vmatpush2.bf16.msra.mxu0 0
  %127 = vmatprep.subr.bf16.mxu0 0
  %128 = vmatpush2.bf16.msra.mxu0 0
  %129 = vmatprep.subr.bf16.mxu0 0
  %130 = vmatpush2.bf16.msra.mxu0 0
  %131 = vmatprep.subr.bf16.mxu0 0
  %132 = vmatpush2.bf16.msra.mxu0 0
  %133 = vmatprep.subr.bf16.mxu0 0
  %134 = vmatpush2.bf16.msra.mxu0 0
  %135 = vmatprep.subr.bf16.mxu0 0
  %136 = vmatpush2.bf16.msra.mxu0 0
  %137 = vmatprep.subr.bf16.mxu0 0
  %138 = vmatpush2.bf16.msra.mxu0 0
  %139 = vmatprep.subr.bf16.mxu0 0
  %140 = vmatpush2.bf16.msra.mxu0 0
  %141 = vmatprep.mubr.bf16.mxu0 0
  %142 = vmatmul.mubr.bf16.gmra.mxu0 %v97
  %v143 = vpop.f32.mrf.mxu0
  %v144 = vadd.f32 0.0, %v143
  %v145 = vpop.f32.mrf.mxu0
  %v146 = vadd.f32 0.0, %v145
  %v147 = vpop.f32.mrf.mxu0
  %v148 = vadd.f32 0.0, %v147
  %v149 = vpop.f32.mrf.mxu0
  %v150 = vadd.f32 0.0, %v149
  %151 = vmatprep.mubr.bf16.mxu0 0
  %152 = vmatmul.mubr.bf16.gmra.mxu0 %v100
  %v153 = vpop.f32.mrf.mxu0
  %v154 = vadd.f32 0.0, %v153
  %v155 = vpop.f32.mrf.mxu0
  %v156 = vadd.f32 0.0, %v155
  %v157 = vpop.f32.mrf.mxu0
  %v158 = vadd.f32 0.0, %v157
  %v159 = vpop.f32.mrf.mxu0
  %v160 = vadd.f32 0.0, %v159
  %161 = vdwg.mxu0
  %v162 = vadd.f32 %v144, %v148
  %v163 = vadd.f32 %v162, %v154
  %vm164 = vcmask 1043456
  %v165 = vsel %vm164, %v158, 0.0
  %v166 = vadd.f32 %v163, %v165
  %v167 = vrot.slane %v166, 4
  %v168 = vadd.f32 %v166, %v167
  %v169 = vrot.slane %v168, 2
  %v170 = vadd.f32 %v168, %v169
  %v171 = vrot.slane %v170, 1
  %v172 = vadd.f32 %v170, %v171
  %v173 = vadd.f32 %v146, %v150
  %v174 = vadd.f32 %v173, %v156
  %v175 = vsel %vm164, %v160, 0.0
  %v176 = vadd.f32 %v174, %v175
  %v177 = vrot.slane %v176, 4
  %v178 = vadd.f32 %v176, %v177
  %v179 = vrot.slane %v178, 2
  %v180 = vadd.f32 %v178, %v179
  %v181 = vrot.slane %v180, 1
  %v182 = vadd.f32 %v180, %v181
  %v183 = vrcp.pop 28.0
  %v184 = vmul.f32 %v172, %v183
  %v185 = vmul.f32 %v182, %v183
  %v186 = vmul.f32 %v144, %v144
  %v187 = vmul.f32 %v146, %v146
  %v188 = vmul.f32 %v148, %v148
  %v189 = vmul.f32 %v150, %v150
  %v190 = vmul.f32 %v154, %v154
  %v191 = vmul.f32 %v156, %v156
  %v192 = vmul.f32 %v158, %v158
  %v193 = vmul.f32 %v160, %v160
  %v194 = vadd.f32 %v186, %v188
  %v195 = vadd.f32 %v194, %v190
  %v196 = vsel %vm164, %v192, 0.0
  %v197 = vadd.f32 %v195, %v196
  %v198 = vrot.slane %v197, 4
  %v199 = vadd.f32 %v197, %v198
  %v200 = vrot.slane %v199, 2
  %v201 = vadd.f32 %v199, %v200
  %v202 = vrot.slane %v201, 1
  %v203 = vadd.f32 %v201, %v202
  %v204 = vadd.f32 %v187, %v189
  %v205 = vadd.f32 %v204, %v191
  %v206 = vsel %vm164, %v193, 0.0
  %v207 = vadd.f32 %v205, %v206
  %v208 = vrot.slane %v207, 4
  %v209 = vadd.f32 %v207, %v208
  %v210 = vrot.slane %v209, 2
  %v211 = vadd.f32 %v209, %v210
  %v212 = vrot.slane %v211, 1
  %v213 = vadd.f32 %v211, %v212
  %v214 = vmul.f32 %v203, %v183
  %v215 = vmul.f32 %v213, %v183
  %v216 = vmul.f32 %v184, %v184
  %v217 = vmul.f32 %v185, %v185
  %v218 = vsub.f32 %v214, %v216
  %v219 = vsub.f32 %v215, %v217
  %v220 = vmax.f32 %v218, 0.0
  %v221 = vmax.f32 %v219, 0.0
  %v222 = vsub.f32 %v144, %v184
  %v223 = vsub.f32 %v146, %v185
  %v224 = vsub.f32 %v148, %v184
  %v225 = vsub.f32 %v150, %v185
  %v226 = vsub.f32 %v154, %v184
  %v227 = vsub.f32 %v156, %v185
  %v228 = vsub.f32 %v158, %v184
  %v229 = vsub.f32 %v160, %v185
  %v230 = vadd.f32 %v220, 1e-05
  %v231 = vadd.f32 %v221, 1e-05
  %v232 = vrsqrt.pop %v230
  %v233 = vrsqrt.pop %v231
  %v234 = vmul.f32 %v222, %v232
  %v235 = vmul.f32 %v223, %v233
  %v236 = vmul.f32 %v224, %v232
  %v237 = vmul.f32 %v225, %v233
  %v238 = vmul.f32 %v226, %v232
  %v239 = vmul.f32 %v227, %v233
  %v240 = vmul.f32 %v228, %v232
  %v241 = vmul.f32 %v229, %v233
  %v242 = vmax.f32 %v234, 0.0
  %v243 = vmax.f32 %v235, 0.0
  %v244 = vmax.f32 %v236, 0.0
  %v245 = vmax.f32 %v237, 0.0
  %v246 = vmax.f32 %v238, 0.0
  %v247 = vmax.f32 %v239, 0.0
  %v248 = vmax.f32 %v240, 0.0
  %v249 = vmax.f32 %v241, 0.0
  %250 = vst [vmem:[#allocation2] sm:$0xff] %v242
  %251 = vst [vmem:[#allocation2 + $0x8] sm:$0xff] %v243
  %252 = vst [vmem:[#allocation2 + $0x10] sm:$0xff] %v244
  %253 = vst [vmem:[#allocation2 + $0x18] sm:$0xff] %v245
  %254 = vst [vmem:[#allocation2 + $0x20] sm:$0xff] %v246
  %255 = vst [vmem:[#allocation2 + $0x28] sm:$0xff] %v247
  %256 = vst [vmem:[#allocation2 + $0x30] sm:$0xf] %v248
  %257 = vst [vmem:[#allocation2 + $0x38] sm:$0xf] %v249
  %v258 = vld [vmem:[#allocation2] sm:$0xff]
  %v259 = vld [vmem:[#allocation2 + $0x8] sm:$0xff]
  %v260 = vld [vmem:[#allocation2 + $0x10] sm:$0xf]
  %v261 = vld [vmem:[#allocation2 + $0x18] sm:$0xf]
  %262 = vst [vmem:[#allocation3] sm:$0xff] %v258
  %263 = vst [vmem:[#allocation3 + $0x8] sm:$0xff] %v259
  %264 = vst [vmem:[#allocation3 + $0x30] sm:$0xf] %v260
  %265 = vst [vmem:[#allocation3 + $0x38] sm:$0xf] %v261
  %v266 = vld [vmem:[#allocation2] sm:$0xfe]
  %v267 = vld [vmem:[#allocation2 + $0x8] sm:$0xfe]
  %v268 = vld [vmem:[#allocation2 + $0x10] sm:$0x1f]
  %v269 = vld [vmem:[#allocation2 + $0x18] sm:$0x1f]
  %vm274 = vcmask 1046528
  %v275 = vrot.slane %v266, 1
  %v276 = vrot.slane %v268, 1
  %v277 = vsel %vm274, %v275, %v276
  %v278 = vrot.slane %v267, 1
  %v279 = vrot.slane %v269, 1
  %v280 = vsel %vm274, %v278, %v279
  %285 = vst [vmem:[#allocation3 + $0x10] sm:$0xff] %v277
  %286 = vst [vmem:[#allocation3 + $0x18] sm:$0xff] %v280
  %287 = vst [vmem:[#allocation3 + $0x40] sm:$0xf] %v276
  %288 = vst [vmem:[#allocation3 + $0x48] sm:$0xf] %v279
  %v289 = vld [vmem:[#allocation2] sm:$0xfc]
  %v290 = vld [vmem:[#allocation2 + $0x8] sm:$0xfc]
  %v291 = vld [vmem:[#allocation2 + $0x10] sm:$0x3f]
  %v292 = vld [vmem:[#allocation2 + $0x18] sm:$0x3f]
  %v297 = vrot.slane %v289, 2
  %v298 = vrot.slane %v291, 2
  %v299 = vsel %vm102, %v297, %v298
  %v300 = vrot.slane %v290, 2
  %v301 = vrot.slane %v292, 2
  %v302 = vsel %vm102, %v300, %v301
  %307 = vst [vmem:[#allocation3 + $0x20] sm:$0xff] %v299
  %308 = vst [vmem:[#allocation3 + $0x28] sm:$0xff] %v302
  %309 = vst [vmem:[#allocation3 + $0x50] sm:$0xf] %v298
  %310 = vst [vmem:[#allocation3 + $0x58] sm:$0xf] %v301
  %v311 = vld [vmem:[#allocation2 + $0x10] sm:$0xc0]
  %v312 = vld [vmem:[#allocation2 + $0x18] sm:$0xc0]
  %v313 = vld [vmem:[#allocation2 + $0x20] sm:$0xff]
  %v314 = vld [vmem:[#allocation2 + $0x28] sm:$0xff]
  %v315 = vld [vmem:[#allocation2 + $0x30] sm:$0x3]
  %v316 = vld [vmem:[#allocation2 + $0x38] sm:$0x3]
  %v323 = vrot.slane %v311, 2
  %v324 = vrot.slane %v313, 2
  %v325 = vsel %vm102, %v323, %v324
  %v326 = vrot.slane %v312, 2
  %v327 = vrot.slane %v314, 2
  %v328 = vsel %vm102, %v326, %v327
  %v329 = vrot.slane %v315, 2
  %v330 = vsel %vm102, %v324, %v329
  %v331 = vrot.slane %v316, 2
  %v332 = vsel %vm102, %v327, %v331
  %337 = vst [vmem:[#allocation3 + $0x30] sm:$0xf0] %v325
  %338 = vst [vmem:[#allocation3 + $0x38] sm:$0xf0] %v328
  %339 = vst [vmem:[#allocation3 + $0x60] sm:$0xff] %v330
  %340 = vst [vmem:[#allocation3 + $0x68] sm:$0xff] %v332
  %v341 = vld [vmem:[#allocation2 + $0x10] sm:$0x80]
  %v342 = vld [vmem:[#allocation2 + $0x18] sm:$0x80]
  %v343 = vld [vmem:[#allocation2 + $0x20] sm:$0xff]
  %v344 = vld [vmem:[#allocation2 + $0x28] sm:$0xff]
  %v345 = vld [vmem:[#allocation2 + $0x30] sm:$0x7]
  %v346 = vld [vmem:[#allocation2 + $0x38] sm:$0x7]
  %vm353 = vcmask 1044480
  %v354 = vrot.slane %v341, 3
  %v355 = vrot.slane %v343, 3
  %v356 = vsel %vm353, %v354, %v355
  %v357 = vrot.slane %v342, 3
  %v358 = vrot.slane %v344, 3
  %v359 = vsel %vm353, %v357, %v358
  %v360 = vrot.slane %v345, 3
  %v361 = vsel %vm353, %v355, %v360
  %v362 = vrot.slane %v346, 3
  %v363 = vsel %vm353, %v358, %v362
  %368 = vst [vmem:[#allocation3 + $0x40] sm:$0xf0] %v356
  %369 = vst [vmem:[#allocation3 + $0x48] sm:$0xf0] %v359
  %370 = vst [vmem:[#allocation3 + $0x70] sm:$0xff] %v361
  %371 = vst [vmem:[#allocation3 + $0x78] sm:$0xff] %v363
  %v372 = vld [vmem:[#allocation2 + $0x20] sm:$0xff]
  %v373 = vld [vmem:[#allocation2 + $0x28] sm:$0xff]
  %v374 = vld [vmem:[#allocation2 + $0x30] sm:$0xf]
  %v375 = vld [vmem:[#allocation2 + $0x38] sm:$0xf]
  %v380 = vrot.slane %v372, 4
  %v381 = vrot.slane %v373, 4
  %v382 = vrot.slane %v374, 4
  %v383 = vsel %vm164, %v380, %v382
  %v384 = vrot.slane %v375, 4
  %v385 = vsel %vm164, %v381, %v384
  %390 = vst [vmem:[#allocation3 + $0x50] sm:$0xf0] %v380
  %391 = vst [vmem:[#allocation3 + $0x58] sm:$0xf0] %v381
  %392 = vst [vmem:[#allocation3 + $0x80] sm:$0xff] %v383
  %393 = vst [vmem:[#allocation3 + $0x88] sm:$0xff] %v385
  %v394 = vld [vmem:[#allocation3] sm:$0xff]
  %v395 = vld [vmem:[#allocation3 + $0x8] sm:$0xff]
  %v396 = vld [vmem:[#allocation3 + $0x10] sm:$0xff]
  %v397 = vld [vmem:[#allocation3 + $0x18] sm:$0xff]
  %v398 = vld [vmem:[#allocation3 + $0x20] sm:$0xff]
  %v399 = vld [vmem:[#allocation3 + $0x28] sm:$0xff]
  %v400 = vld [vmem:[#allocation3 + $0x30] sm:$0xff]
  %v401 = vld [vmem:[#allocation3 + $0x38] sm:$0xff]
  %v402 = vld [vmem:[#allocation3 + $0x40] sm:$0xff]
  %v403 = vld [vmem:[#allocation3 + $0x48] sm:$0xff]
  %v404 = vld [vmem:[#allocation3 + $0x50] sm:$0xff]
  %v405 = vld [vmem:[#allocation3 + $0x58] sm:$0xff]
  %v406 = vld [vmem:[#allocation3 + $0x60] sm:$0xff]
  %v407 = vld [vmem:[#allocation3 + $0x68] sm:$0xff]
  %v408 = vld [vmem:[#allocation3 + $0x70] sm:$0xff]
  %v409 = vld [vmem:[#allocation3 + $0x78] sm:$0xff]
  %v410 = vld [vmem:[#allocation3 + $0x80] sm:$0xff]
  %v411 = vld [vmem:[#allocation3 + $0x88] sm:$0xff]
  %v412 = vpack.c.bf16 %v400, %v394
  %v413 = vpack.c.bf16 %v401, %v395
  %v414 = vpack.c.bf16 %v402, %v396
  %v415 = vpack.c.bf16 %v403, %v397
  %v416 = vpack.c.bf16 %v404, %v398
  %v417 = vpack.c.bf16 %v405, %v399
  %v418 = vpack.c.bf16 %v406, %v406
  %v419 = vpack.c.bf16 %v407, %v407
  %v420 = vpack.c.bf16 %v408, %v408
  %v421 = vpack.c.bf16 %v409, %v409
  %v422 = vpack.c.bf16 %v410, %v410
  %v423 = vpack.c.bf16 %v411, %v411
  %v424 = vld [vmem:[%s2] sm:$0xff]
  %v425 = vld [vmem:[%s2 + $0x8] sm:$0xff]
  %v426 = vld [vmem:[%s2 + $0x10] sm:$0xff]
  %v427 = vld [vmem:[%s2 + $0x18] sm:$0xff]
  %v428 = vld [vmem:[%s2 + $0x20] sm:$0xff]
  %v429 = vld [vmem:[%s2 + $0x28] sm:$0xff]
  %v430 = vld [vmem:[%s2 + $0x30] sm:$0xff]
  %v431 = vld [vmem:[%s2 + $0x38] sm:$0xff]
  %v432 = vld [vmem:[%s2 + $0x40] sm:$0xff]
  %v433 = vld [vmem:[%s2 + $0x48] sm:$0xff]
  %v434 = vld [vmem:[%s2 + $0x50] sm:$0xff]
  %v435 = vld [vmem:[%s2 + $0x58] sm:$0xff]
  %v436 = vld [vmem:[%s2 + $0x60] sm:$0xff]
  %v437 = vld [vmem:[%s2 + $0x68] sm:$0xff]
  %v438 = vld [vmem:[%s2 + $0x70] sm:$0xff]
  %v439 = vld [vmem:[%s2 + $0x78] sm:$0xff]
  %v440 = vld [vmem:[%s2 + $0x80] sm:$0xff]
  %v441 = vld [vmem:[%s2 + $0x88] sm:$0xff]
  %v442 = vld [vmem:[%s2 + $0x90] sm:$0xff]
  %v443 = vld [vmem:[%s2 + $0x98] sm:$0xff]
  %v444 = vld [vmem:[%s2 + $0xa0] sm:$0xff]
  %v445 = vld [vmem:[%s2 + $0xa8] sm:$0xff]
  %v446 = vld [vmem:[%s2 + $0xb0] sm:$0xff]
  %v447 = vld [vmem:[%s2 + $0xb8] sm:$0xff]
  %v448 = vld [vmem:[%s2 + $0xc0] sm:$0xff]
  %v449 = vld [vmem:[%s2 + $0xc8] sm:$0xff]
  %v450 = vld [vmem:[%s2 + $0xd0] sm:$0xff]
  %v451 = vld [vmem:[%s2 + $0xd8] sm:$0xff]
  %v452 = vld [vmem:[%s2 + $0xe0] sm:$0xff]
  %v453 = vld [vmem:[%s2 + $0xe8] sm:$0xff]
  %v454 = vld [vmem:[%s2 + $0xf0] sm:$0xff]
  %v455 = vld [vmem:[%s2 + $0xf8] sm:$0xff]
  %v456 = vld [vmem:[%s2 + $0x100] sm:$0xff]
  %v457 = vld [vmem:[%s2 + $0x108] sm:$0xff]
  %v458 = vld [vmem:[%s2 + $0x110] sm:$0xff]
  %v459 = vld [vmem:[%s2 + $0x118] sm:$0xff]
  %v460 = vld [vmem:[%s2 + $0x120] sm:$0xff]
  %v461 = vld [vmem:[%s2 + $0x128] sm:$0xff]
  %v462 = vld [vmem:[%s2 + $0x130] sm:$0xff]
  %v463 = vld [vmem:[%s2 + $0x138] sm:$0xff]
  %v464 = vld [vmem:[%s2 + $0x140] sm:$0xff]
  %v465 = vld [vmem:[%s2 + $0x148] sm:$0xff]
  %v466 = vld [vmem:[%s2 + $0x150] sm:$0xff]
  %v467 = vld [vmem:[%s2 + $0x158] sm:$0xff]
  %v468 = vld [vmem:[%s2 + $0x160] sm:$0xff]
  %v469 = vld [vmem:[%s2 + $0x168] sm:$0xff]
  %v470 = vld [vmem:[%s2 + $0x170] sm:$0xff]
  %v471 = vld [vmem:[%s2 + $0x178] sm:$0xff]
  %v472 = vld [vmem:[%s2 + $0x180] sm:$0xff]
  %v473 = vld [vmem:[%s2 + $0x188] sm:$0xff]
  %v474 = vld [vmem:[%s2 + $0x190] sm:$0xff]
  %v475 = vld [vmem:[%s2 + $0x198] sm:$0xff]
  %v476 = vld [vmem:[%s2 + $0x1a0] sm:$0xff]
  %v477 = vld [vmem:[%s2 + $0x1a8] sm:$0xff]
  %v478 = vld [vmem:[%s2 + $0x1b0] sm:$0xff]
  %v479 = vld [vmem:[%s2 + $0x1b8] sm:$0xff]
  %v480 = vld [vmem:[%s2 + $0x1c0] sm:$0xff]
  %v481 = vld [vmem:[%s2 + $0x1c8] sm:$0xff]
  %v482 = vld [vmem:[%s2 + $0x1d0] sm:$0xff]
  %v483 = vld [vmem:[%s2 + $0x1d8] sm:$0xff]
  %v484 = vld [vmem:[%s2 + $0x1e0] sm:$0xff]
  %v485 = vld [vmem:[%s2 + $0x1e8] sm:$0xff]
  %v486 = vld [vmem:[%s2 + $0x1f0] sm:$0xff]
  %v487 = vld [vmem:[%s2 + $0x1f8] sm:$0xff]
  %v488 = vld [vmem:[%s2 + $0x200] sm:$0xff]
  %v489 = vld [vmem:[%s2 + $0x208] sm:$0xff]
  %v490 = vld [vmem:[%s2 + $0x210] sm:$0xff]
  %v491 = vld [vmem:[%s2 + $0x218] sm:$0xff]
  %v492 = vld [vmem:[%s2 + $0x220] sm:$0xff]
  %v493 = vld [vmem:[%s2 + $0x228] sm:$0xff]
  %v494 = vld [vmem:[%s2 + $0x230] sm:$0xff]
  %v495 = vld [vmem:[%s2 + $0x238] sm:$0xff]
  %v496 = vld [vmem:[%s2 + $0x240] sm:$0xff]
  %v497 = vld [vmem:[%s2 + $0x248] sm:$0xff]
  %v498 = vld [vmem:[%s2 + $0x250] sm:$0xff]
  %v499 = vld [vmem:[%s2 + $0x258] sm:$0xff]
  %v500 = vld [vmem:[%s2 + $0x260] sm:$0xff]
  %v501 = vld [vmem:[%s2 + $0x268] sm:$0xff]
  %v502 = vld [vmem:[%s2 + $0x270] sm:$0xff]
  %v503 = vld [vmem:[%s2 + $0x278] sm:$0xff]
  %v504 = vld [vmem:[%s2 + $0x280] sm:$0xff]
  %v505 = vld [vmem:[%s2 + $0x288] sm:$0xff]
  %v506 = vld [vmem:[%s2 + $0x290] sm:$0xff]
  %v507 = vld [vmem:[%s2 + $0x298] sm:$0xff]
  %v508 = vld [vmem:[%s2 + $0x2a0] sm:$0xff]
  %v509 = vld [vmem:[%s2 + $0x2a8] sm:$0xff]
  %v510 = vld [vmem:[%s2 + $0x2b0] sm:$0xff]
  %v511 = vld [vmem:[%s2 + $0x2b8] sm:$0xff]
  %v512 = vld [vmem:[%s2 + $0x2c0] sm:$0xff]
  %v513 = vld [vmem:[%s2 + $0x2c8] sm:$0xff]
  %v514 = vld [vmem:[%s2 + $0x2d0] sm:$0xff]
  %v515 = vld [vmem:[%s2 + $0x2d8] sm:$0xff]
  %v516 = vld [vmem:[%s2 + $0x2e0] sm:$0xff]
  %v517 = vld [vmem:[%s2 + $0x2e8] sm:$0xff]
  %v518 = vld [vmem:[%s2 + $0x2f0] sm:$0xff]
  %v519 = vld [vmem:[%s2 + $0x2f8] sm:$0xff]
  %v616 = vunpack.c.l.b16 %v424
  %v617 = vunpack.c.h.b16 %v424
  %v618 = vunpack.c.l.b16 %v425
  %v619 = vunpack.c.h.b16 %v425
  %v620 = vunpack.c.l.b16 %v426
  %v621 = vunpack.c.h.b16 %v426
  %v622 = vunpack.c.l.b16 %v427
  %v623 = vunpack.c.h.b16 %v427
  %v624 = vunpack.c.l.b16 %v428
  %v625 = vunpack.c.h.b16 %v428
  %v626 = vunpack.c.l.b16 %v429
  %v627 = vunpack.c.h.b16 %v429
  %v628 = vunpack.c.l.b16 %v430
  %v629 = vunpack.c.h.b16 %v430
  %v630 = vunpack.c.l.b16 %v431
  %v631 = vunpack.c.h.b16 %v431
  %v632 = vunpack.c.l.b16 %v432
  %v633 = vunpack.c.h.b16 %v432
  %v634 = vunpack.c.l.b16 %v433
  %v635 = vunpack.c.h.b16 %v433
  %v636 = vunpack.c.l.b16 %v434
  %v637 = vunpack.c.h.b16 %v434
  %v638 = vunpack.c.l.b16 %v435
  %v639 = vunpack.c.h.b16 %v435
  %v640 = vunpack.c.l.b16 %v436
  %v641 = vunpack.c.h.b16 %v436
  %v642 = vunpack.c.l.b16 %v437
  %v643 = vunpack.c.h.b16 %v437
  %v644 = vunpack.c.l.b16 %v438
  %v645 = vunpack.c.h.b16 %v438
  %v646 = vunpack.c.l.b16 %v439
  %v647 = vunpack.c.h.b16 %v439
  %v648 = vunpack.c.l.b16 %v440
  %v649 = vunpack.c.h.b16 %v440
  %v650 = vunpack.c.l.b16 %v441
  %v651 = vunpack.c.h.b16 %v441
  %v652 = vunpack.c.l.b16 %v442
  %v653 = vunpack.c.h.b16 %v442
  %v654 = vunpack.c.l.b16 %v443
  %v655 = vunpack.c.h.b16 %v443
  %v656 = vunpack.c.l.b16 %v444
  %v657 = vunpack.c.h.b16 %v444
  %v658 = vunpack.c.l.b16 %v445
  %v659 = vunpack.c.h.b16 %v445
  %v660 = vunpack.c.l.b16 %v446
  %v661 = vunpack.c.h.b16 %v446
  %v662 = vunpack.c.l.b16 %v447
  %v663 = vunpack.c.h.b16 %v447
  %v664 = vunpack.c.l.b16 %v448
  %v665 = vunpack.c.h.b16 %v448
  %v666 = vunpack.c.l.b16 %v449
  %v667 = vunpack.c.h.b16 %v449
  %v668 = vunpack.c.l.b16 %v450
  %v669 = vunpack.c.h.b16 %v450
  %v670 = vunpack.c.l.b16 %v451
  %v671 = vunpack.c.h.b16 %v451
  %v672 = vunpack.c.l.b16 %v452
  %v673 = vunpack.c.h.b16 %v452
  %v674 = vunpack.c.l.b16 %v453
  %v675 = vunpack.c.h.b16 %v453
  %v676 = vunpack.c.l.b16 %v454
  %v677 = vunpack.c.h.b16 %v454
  %v678 = vunpack.c.l.b16 %v455
  %v679 = vunpack.c.h.b16 %v455
  %v680 = vunpack.c.l.b16 %v456
  %v681 = vunpack.c.h.b16 %v456
  %v682 = vunpack.c.l.b16 %v457
  %v683 = vunpack.c.h.b16 %v457
  %v684 = vunpack.c.l.b16 %v458
  %v685 = vunpack.c.h.b16 %v458
  %v686 = vunpack.c.l.b16 %v459
  %v687 = vunpack.c.h.b16 %v459
  %v688 = vunpack.c.l.b16 %v460
  %v689 = vunpack.c.h.b16 %v460
  %v690 = vunpack.c.l.b16 %v461
  %v691 = vunpack.c.h.b16 %v461
  %v692 = vunpack.c.l.b16 %v462
  %v693 = vunpack.c.h.b16 %v462
  %v694 = vunpack.c.l.b16 %v463
  %v695 = vunpack.c.h.b16 %v463
  %v696 = vunpack.c.l.b16 %v464
  %v697 = vunpack.c.h.b16 %v464
  %v698 = vunpack.c.l.b16 %v465
  %v699 = vunpack.c.h.b16 %v465
  %v700 = vunpack.c.l.b16 %v466
  %v701 = vunpack.c.h.b16 %v466
  %v702 = vunpack.c.l.b16 %v467
  %v703 = vunpack.c.h.b16 %v467
  %v704 = vunpack.c.l.b16 %v468
  %v705 = vunpack.c.h.b16 %v468
  %v706 = vunpack.c.l.b16 %v469
  %v707 = vunpack.c.h.b16 %v469
  %v708 = vunpack.c.l.b16 %v470
  %v709 = vunpack.c.h.b16 %v470
  %v710 = vunpack.c.l.b16 %v471
  %v711 = vunpack.c.h.b16 %v471
  %v712 = vunpack.c.l.b16 %v472
  %v713 = vunpack.c.h.b16 %v472
  %v714 = vunpack.c.l.b16 %v473
  %v715 = vunpack.c.h.b16 %v473
  %v716 = vunpack.c.l.b16 %v474
  %v717 = vunpack.c.h.b16 %v474
  %v718 = vunpack.c.l.b16 %v475
  %v719 = vunpack.c.h.b16 %v475
  %v720 = vunpack.c.l.b16 %v476
  %v721 = vunpack.c.h.b16 %v476
  %v722 = vunpack.c.l.b16 %v477
  %v723 = vunpack.c.h.b16 %v477
  %v724 = vunpack.c.l.b16 %v478
  %v725 = vunpack.c.h.b16 %v478
  %v726 = vunpack.c.l.b16 %v479
  %v727 = vunpack.c.h.b16 %v479
  %v728 = vunpack.c.l.b16 %v480
  %v729 = vunpack.c.h.b16 %v480
  %v730 = vunpack.c.l.b16 %v481
  %v731 = vunpack.c.h.b16 %v481
  %v732 = vunpack.c.l.b16 %v482
  %v733 = vunpack.c.h.b16 %v482
  %v734 = vunpack.c.l.b16 %v483
  %v735 = vunpack.c.h.b16 %v483
  %v736 = vunpack.c.l.b16 %v484
  %v737 = vunpack.c.h.b16 %v484
  %v738 = vunpack.c.l.b16 %v485
  %v739 = vunpack.c.h.b16 %v485
  %v740 = vunpack.c.l.b16 %v486
  %v741 = vunpack.c.h.b16 %v486
  %v742 = vunpack.c.l.b16 %v487
  %v743 = vunpack.c.h.b16 %v487
  %v744 = vunpack.c.l.b16 %v488
  %v745 = vunpack.c.h.b16 %v488
  %v746 = vunpack.c.l.b16 %v489
  %v747 = vunpack.c.h.b16 %v489
  %v748 = vunpack.c.l.b16 %v490
  %v749 = vunpack.c.h.b16 %v490
  %v750 = vunpack.c.l.b16 %v491
  %v751 = vunpack.c.h.b16 %v491
  %v752 = vunpack.c.l.b16 %v492
  %v753 = vunpack.c.h.b16 %v492
  %v754 = vunpack.c.l.b16 %v493
  %v755 = vunpack.c.h.b16 %v493
  %v756 = vunpack.c.l.b16 %v494
  %v757 = vunpack.c.h.b16 %v494
  %v758 = vunpack.c.l.b16 %v495
  %v759 = vunpack.c.h.b16 %v495
  %v760 = vunpack.c.l.b16 %v496
  %v761 = vunpack.c.h.b16 %v496
  %v762 = vunpack.c.l.b16 %v497
  %v763 = vunpack.c.h.b16 %v497
  %v764 = vunpack.c.l.b16 %v498
  %v765 = vunpack.c.h.b16 %v498
  %v766 = vunpack.c.l.b16 %v499
  %v767 = vunpack.c.h.b16 %v499
  %v768 = vunpack.c.l.b16 %v500
  %v769 = vunpack.c.h.b16 %v500
  %v770 = vunpack.c.l.b16 %v501
  %v771 = vunpack.c.h.b16 %v501
  %v772 = vunpack.c.l.b16 %v502
  %v773 = vunpack.c.h.b16 %v502
  %v774 = vunpack.c.l.b16 %v503
  %v775 = vunpack.c.h.b16 %v503
  %v776 = vunpack.c.l.b16 %v504
  %v777 = vunpack.c.h.b16 %v504
  %v778 = vunpack.c.l.b16 %v505
  %v779 = vunpack.c.h.b16 %v505
  %v780 = vunpack.c.l.b16 %v506
  %v781 = vunpack.c.h.b16 %v506
  %v782 = vunpack.c.l.b16 %v507
  %v783 = vunpack.c.h.b16 %v507
  %v784 = vunpack.c.l.b16 %v508
  %v785 = vunpack.c.h.b16 %v508
  %v786 = vunpack.c.l.b16 %v509
  %v787 = vunpack.c.h.b16 %v509
  %v788 = vunpack.c.l.b16 %v510
  %v789 = vunpack.c.h.b16 %v510
  %v790 = vunpack.c.l.b16 %v511
  %v791 = vunpack.c.h.b16 %v511
  %v792 = vunpack.c.l.b16 %v512
  %v793 = vunpack.c.h.b16 %v512
  %v794 = vunpack.c.l.b16 %v513
  %v795 = vunpack.c.h.b16 %v513
  %v796 = vunpack.c.l.b16 %v514
  %v797 = vunpack.c.h.b16 %v514
  %v798 = vunpack.c.l.b16 %v515
  %v799 = vunpack.c.h.b16 %v515
  %v800 = vunpack.c.l.b16 %v516
  %v801 = vunpack.c.h.b16 %v516
  %v802 = vunpack.c.l.b16 %v517
  %v803 = vunpack.c.h.b16 %v517
  %v804 = vunpack.c.l.b16 %v518
  %v805 = vunpack.c.h.b16 %v518
  %v806 = vunpack.c.l.b16 %v519
  %v807 = vunpack.c.h.b16 %v519
  %v808 = vpack.c.b16 %v618, %v616
  %v809 = vpack.c.b16 %v619, %v617
  %v810 = vpack.c.b16 %v622, %v620
  %v811 = vpack.c.b16 %v623, %v621
  %v812 = vpack.c.b16 %v626, %v624
  %v813 = vpack.c.b16 %v627, %v625
  %v814 = vpack.c.b16 %v630, %v628
  %v815 = vpack.c.b16 %v631, %v629
  %v816 = vpack.c.b16 %v634, %v632
  %v817 = vpack.c.b16 %v635, %v633
  %v818 = vpack.c.b16 %v638, %v636
  %v819 = vpack.c.b16 %v639, %v637
  %v820 = vpack.c.b16 %v642, %v640
  %v821 = vpack.c.b16 %v643, %v641
  %v822 = vpack.c.b16 %v646, %v644
  %v823 = vpack.c.b16 %v647, %v645
  %v824 = vpack.c.b16 %v650, %v648
  %v825 = vpack.c.b16 %v651, %v649
  %v826 = vpack.c.b16 %v654, %v652
  %v827 = vpack.c.b16 %v655, %v653
  %v828 = vpack.c.b16 %v658, %v656
  %v829 = vpack.c.b16 %v659, %v657
  %v830 = vpack.c.b16 %v662, %v660
  %v831 = vpack.c.b16 %v663, %v661
  %v832 = vpack.c.b16 %v666, %v664
  %v833 = vpack.c.b16 %v667, %v665
  %v834 = vpack.c.b16 %v670, %v668
  %v835 = vpack.c.b16 %v671, %v669
  %v836 = vpack.c.b16 %v674, %v672
  %v837 = vpack.c.b16 %v675, %v673
  %v838 = vpack.c.b16 %v678, %v676
  %v839 = vpack.c.b16 %v679, %v677
  %v840 = vpack.c.b16 %v682, %v680
  %v841 = vpack.c.b16 %v683, %v681
  %v842 = vpack.c.b16 %v686, %v684
  %v843 = vpack.c.b16 %v687, %v685
  %v844 = vpack.c.b16 %v690, %v688
  %v845 = vpack.c.b16 %v691, %v689
  %v846 = vpack.c.b16 %v694, %v692
  %v847 = vpack.c.b16 %v695, %v693
  %v848 = vpack.c.b16 %v698, %v696
  %v849 = vpack.c.b16 %v699, %v697
  %v850 = vpack.c.b16 %v702, %v700
  %v851 = vpack.c.b16 %v703, %v701
  %v852 = vpack.c.b16 %v706, %v704
  %v853 = vpack.c.b16 %v707, %v705
  %v854 = vpack.c.b16 %v710, %v708
  %v855 = vpack.c.b16 %v711, %v709
  %v856 = vpack.c.b16 %v714, %v712
  %v857 = vpack.c.b16 %v715, %v713
  %v858 = vpack.c.b16 %v718, %v716
  %v859 = vpack.c.b16 %v719, %v717
  %v860 = vpack.c.b16 %v722, %v720
  %v861 = vpack.c.b16 %v723, %v721
  %v862 = vpack.c.b16 %v726, %v724
  %v863 = vpack.c.b16 %v727, %v725
  %v864 = vpack.c.b16 %v730, %v728
  %v865 = vpack.c.b16 %v731, %v729
  %v866 = vpack.c.b16 %v734, %v732
  %v867 = vpack.c.b16 %v735, %v733
  %v868 = vpack.c.b16 %v738, %v736
  %v869 = vpack.c.b16 %v739, %v737
  %v870 = vpack.c.b16 %v742, %v740
  %v871 = vpack.c.b16 %v743, %v741
  %v872 = vpack.c.b16 %v746, %v744
  %v873 = vpack.c.b16 %v747, %v745
  %v874 = vpack.c.b16 %v750, %v748
  %v875 = vpack.c.b16 %v751, %v749
  %v876 = vpack.c.b16 %v754, %v752
  %v877 = vpack.c.b16 %v755, %v753
  %v878 = vpack.c.b16 %v758, %v756
  %v879 = vpack.c.b16 %v759, %v757
  %v880 = vpack.c.b16 %v762, %v760
  %v881 = vpack.c.b16 %v763, %v761
  %v882 = vpack.c.b16 %v766, %v764
  %v883 = vpack.c.b16 %v767, %v765
  %v884 = vpack.c.b16 %v770, %v768
  %v885 = vpack.c.b16 %v771, %v769
  %v886 = vpack.c.b16 %v774, %v772
  %v887 = vpack.c.b16 %v775, %v773
  %v888 = vpack.c.b16 %v778, %v776
  %v889 = vpack.c.b16 %v779, %v777
  %v890 = vpack.c.b16 %v782, %v780
  %v891 = vpack.c.b16 %v783, %v781
  %v892 = vpack.c.b16 %v786, %v784
  %v893 = vpack.c.b16 %v787, %v785
  %v894 = vpack.c.b16 %v790, %v788
  %v895 = vpack.c.b16 %v791, %v789
  %v896 = vpack.c.b16 %v794, %v792
  %v897 = vpack.c.b16 %v795, %v793
  %v898 = vpack.c.b16 %v798, %v796
  %v899 = vpack.c.b16 %v799, %v797
  %v900 = vpack.c.b16 %v802, %v800
  %v901 = vpack.c.b16 %v803, %v801
  %v902 = vpack.c.b16 %v806, %v804
  %v903 = vpack.c.b16 %v807, %v805
  %1000 = vmatprep.subr.bf16.mxu0 %v823
  %1001 = vmatpush1.bf16.msra.mxu0 %v822
  %1002 = vmatprep.subr.bf16.mxu0 %v821
  %1003 = vmatpush1.bf16.msra.mxu0 %v820
  %1004 = vmatprep.subr.bf16.mxu0 %v819
  %1005 = vmatpush1.bf16.msra.mxu0 %v818
  %1006 = vmatprep.subr.bf16.mxu0 %v817
  %1007 = vmatpush1.bf16.msra.mxu0 %v816
  %1008 = vmatprep.subr.bf16.mxu0 %v815
  %1009 = vmatpush1.bf16.msra.mxu0 %v814
  %1010 = vmatprep.subr.bf16.mxu0 %v813
  %1011 = vmatpush1.bf16.msra.mxu0 %v812
  %1012 = vmatprep.subr.bf16.mxu0 %v811
  %1013 = vmatpush1.bf16.msra.mxu0 %v810
  %1014 = vmatprep.subr.bf16.mxu0 %v809
  %1015 = vmatpush1.bf16.msra.mxu0 %v808
  %1016 = vmatprep.subr.bf16.mxu0 %v839
  %1017 = vmatpush2.bf16.msra.mxu0 %v838
  %1018 = vmatprep.subr.bf16.mxu0 %v837
  %1019 = vmatpush2.bf16.msra.mxu0 %v836
  %1020 = vmatprep.subr.bf16.mxu0 %v835
  %1021 = vmatpush2.bf16.msra.mxu0 %v834
  %1022 = vmatprep.subr.bf16.mxu0 %v833
  %1023 = vmatpush2.bf16.msra.mxu0 %v832
  %1024 = vmatprep.subr.bf16.mxu0 %v831
  %1025 = vmatpush2.bf16.msra.mxu0 %v830
  %1026 = vmatprep.subr.bf16.mxu0 %v829
  %1027 = vmatpush2.bf16.msra.mxu0 %v828
  %1028 = vmatprep.subr.bf16.mxu0 %v827
  %1029 = vmatpush2.bf16.msra.mxu0 %v826
  %1030 = vmatprep.subr.bf16.mxu0 %v825
  %1031 = vmatpush2.bf16.msra.mxu0 %v824
  %1032 = vmatprep.mubr.bf16.mxu0 %v413
  %1033 = vmatmul.mubr.bf16.gmra.mxu0 %v412
  %v1034 = vpop.f32.mrf.mxu0
  %v1035 = vadd.f32 0.0, %v1034
  %v1036 = vpop.f32.mrf.mxu0
  %v1037 = vadd.f32 0.0, %v1036
  %v1038 = vpop.f32.mrf.mxu0
  %v1039 = vadd.f32 0.0, %v1038
  %v1040 = vpop.f32.mrf.mxu0
  %v1041 = vadd.f32 0.0, %v1040
  %1042 = vmatprep.mubr.bf16.mxu0 %v419
  %1043 = vmatmul.mubr.bf16.gmra.mxu0 %v418
  %v1044 = vpop.f32.mrf.mxu0
  %v1045 = vadd.f32 0.0, %v1044
  %v1046 = vpop.f32.mrf.mxu0
  %v1047 = vadd.f32 0.0, %v1046
  %v1048 = vpop.f32.mrf.mxu0
  %v1049 = vpop.f32.mrf.mxu0
  %1050 = vdwg.mxu0
  %1051 = vmatprep.subr.bf16.mxu0 %v855
  %1052 = vmatpush1.bf16.msra.mxu0 %v854
  %1053 = vmatprep.subr.bf16.mxu0 %v853
  %1054 = vmatpush1.bf16.msra.mxu0 %v852
  %1055 = vmatprep.subr.bf16.mxu0 %v851
  %1056 = vmatpush1.bf16.msra.mxu0 %v850
  %1057 = vmatprep.subr.bf16.mxu0 %v849
  %1058 = vmatpush1.bf16.msra.mxu0 %v848
  %1059 = vmatprep.subr.bf16.mxu0 %v847
  %1060 = vmatpush1.bf16.msra.mxu0 %v846
  %1061 = vmatprep.subr.bf16.mxu0 %v845
  %1062 = vmatpush1.bf16.msra.mxu0 %v844
  %1063 = vmatprep.subr.bf16.mxu0 %v843
  %1064 = vmatpush1.bf16.msra.mxu0 %v842
  %1065 = vmatprep.subr.bf16.mxu0 %v841
  %1066 = vmatpush1.bf16.msra.mxu0 %v840
  %1067 = vmatprep.subr.bf16.mxu0 %v871
  %1068 = vmatpush2.bf16.msra.mxu0 %v870
  %1069 = vmatprep.subr.bf16.mxu0 %v869
  %1070 = vmatpush2.bf16.msra.mxu0 %v868
  %1071 = vmatprep.subr.bf16.mxu0 %v867
  %1072 = vmatpush2.bf16.msra.mxu0 %v866
  %1073 = vmatprep.subr.bf16.mxu0 %v865
  %1074 = vmatpush2.bf16.msra.mxu0 %v864
  %1075 = vmatprep.subr.bf16.mxu0 %v863
  %1076 = vmatpush2.bf16.msra.mxu0 %v862
  %1077 = vmatprep.subr.bf16.mxu0 %v861
  %1078 = vmatpush2.bf16.msra.mxu0 %v860
  %1079 = vmatprep.subr.bf16.mxu0 %v859
  %1080 = vmatpush2.bf16.msra.mxu0 %v858
  %1081 = vmatprep.subr.bf16.mxu0 %v857
  %1082 = vmatpush2.bf16.msra.mxu0 %v856
  %1083 = vmatprep.mubr.bf16.mxu0 %v415
  %1084 = vmatmul.mubr.bf16.gmra.mxu0 %v414
  %v1085 = vpop.f32.mrf.mxu0
  %v1086 = vadd.f32 %v1035, %v1085
  %v1087 = vpop.f32.mrf.mxu0
  %v1088 = vadd.f32 %v1037, %v1087
  %v1089 = vpop.f32.mrf.mxu0
  %v1090 = vadd.f32 %v1039, %v1089
  %v1091 = vpop.f32.mrf.mxu0
  %v1092 = vadd.f32 %v1041, %v1091
  %1093 = vmatprep.mubr.bf16.mxu0 %v421
  %1094 = vmatmul.mubr.bf16.gmra.mxu0 %v420
  %v1095 = vpop.f32.mrf.mxu0
  %v1096 = vadd.f32 %v1045, %v1095
  %v1097 = vpop.f32.mrf.mxu0
  %v1098 = vadd.f32 %v1047, %v1097
  %v1099 = vpop.f32.mrf.mxu0
  %v1100 = vpop.f32.mrf.mxu0
  %1101 = vdwg.mxu0
  %1102 = vmatprep.subr.bf16.mxu0 %v887
  %1103 = vmatpush1.bf16.msra.mxu0 %v886
  %1104 = vmatprep.subr.bf16.mxu0 %v885
  %1105 = vmatpush1.bf16.msra.mxu0 %v884
  %1106 = vmatprep.subr.bf16.mxu0 %v883
  %1107 = vmatpush1.bf16.msra.mxu0 %v882
  %1108 = vmatprep.subr.bf16.mxu0 %v881
  %1109 = vmatpush1.bf16.msra.mxu0 %v880
  %1110 = vmatprep.subr.bf16.mxu0 %v879
  %1111 = vmatpush1.bf16.msra.mxu0 %v878
  %1112 = vmatprep.subr.bf16.mxu0 %v877
  %1113 = vmatpush1.bf16.msra.mxu0 %v876
  %1114 = vmatprep.subr.bf16.mxu0 %v875
  %1115 = vmatpush1.bf16.msra.mxu0 %v874
  %1116 = vmatprep.subr.bf16.mxu0 %v873
  %1117 = vmatpush1.bf16.msra.mxu0 %v872
  %1118 = vmatprep.subr.bf16.mxu0 %v903
  %1119 = vmatpush2.bf16.msra.mxu0 %v902
  %1120 = vmatprep.subr.bf16.mxu0 %v901
  %1121 = vmatpush2.bf16.msra.mxu0 %v900
  %1122 = vmatprep.subr.bf16.mxu0 %v899
  %1123 = vmatpush2.bf16.msra.mxu0 %v898
  %1124 = vmatprep.subr.bf16.mxu0 %v897
  %1125 = vmatpush2.bf16.msra.mxu0 %v896
  %1126 = vmatprep.subr.bf16.mxu0 %v895
  %1127 = vmatpush2.bf16.msra.mxu0 %v894
  %1128 = vmatprep.subr.bf16.mxu0 %v893
  %1129 = vmatpush2.bf16.msra.mxu0 %v892
  %1130 = vmatprep.subr.bf16.mxu0 %v891
  %1131 = vmatpush2.bf16.msra.mxu0 %v890
  %1132 = vmatprep.subr.bf16.mxu0 %v889
  %1133 = vmatpush2.bf16.msra.mxu0 %v888
  %1134 = vmatprep.mubr.bf16.mxu0 %v417
  %1135 = vmatmul.mubr.bf16.gmra.mxu0 %v416
  %v1136 = vpop.f32.mrf.mxu0
  %v1137 = vadd.f32 %v1086, %v1136
  %v1138 = vpop.f32.mrf.mxu0
  %v1139 = vadd.f32 %v1088, %v1138
  %v1140 = vpop.f32.mrf.mxu0
  %v1141 = vadd.f32 %v1090, %v1140
  %v1142 = vpop.f32.mrf.mxu0
  %v1143 = vadd.f32 %v1092, %v1142
  %1144 = vmatprep.mubr.bf16.mxu0 %v423
  %1145 = vmatmul.mubr.bf16.gmra.mxu0 %v422
  %v1146 = vpop.f32.mrf.mxu0
  %v1147 = vadd.f32 %v1096, %v1146
  %v1148 = vpop.f32.mrf.mxu0
  %v1149 = vadd.f32 %v1098, %v1148
  %v1150 = vpop.f32.mrf.mxu0
  %v1151 = vpop.f32.mrf.mxu0
  %1152 = vdwg.mxu0
  %v1153 = vadd.f32 %v1137, %v1141
  %v1154 = vadd.f32 %v1153, %v1147
  %v1155 = vrot.slane %v1154, 4
  %v1156 = vadd.f32 %v1154, %v1155
  %v1157 = vrot.slane %v1156, 2
  %v1158 = vadd.f32 %v1156, %v1157
  %v1159 = vrot.slane %v1158, 1
  %v1160 = vadd.f32 %v1158, %v1159
  %v1161 = vadd.f32 %v1139, %v1143
  %v1162 = vadd.f32 %v1161, %v1149
  %v1163 = vrot.slane %v1162, 4
  %v1164 = vadd.f32 %v1162, %v1163
  %v1165 = vrot.slane %v1164, 2
  %v1166 = vadd.f32 %v1164, %v1165
  %v1167 = vrot.slane %v1166, 1
  %v1168 = vadd.f32 %v1166, %v1167
  %v1169 = vrcp.pop 24.0
  %v1170 = vmul.f32 %v1160, %v1169
  %v1171 = vmul.f32 %v1168, %v1169
  %v1172 = vmul.f32 %v1137, %v1137
  %v1173 = vmul.f32 %v1139, %v1139
  %v1174 = vmul.f32 %v1141, %v1141
  %v1175 = vmul.f32 %v1143, %v1143
  %v1176 = vmul.f32 %v1147, %v1147
  %v1177 = vmul.f32 %v1149, %v1149
  %v1178 = vadd.f32 %v1172, %v1174
  %v1179 = vadd.f32 %v1178, %v1176
  %v1180 = vrot.slane %v1179, 4
  %v1181 = vadd.f32 %v1179, %v1180
  %v1182 = vrot.slane %v1181, 2
  %v1183 = vadd.f32 %v1181, %v1182
  %v1184 = vrot.slane %v1183, 1
  %v1185 = vadd.f32 %v1183, %v1184
  %v1186 = vadd.f32 %v1173, %v1175
  %v1187 = vadd.f32 %v1186, %v1177
  %v1188 = vrot.slane %v1187, 4
  %v1189 = vadd.f32 %v1187, %v1188
  %v1190 = vrot.slane %v1189, 2
  %v1191 = vadd.f32 %v1189, %v1190
  %v1192 = vrot.slane %v1191, 1
  %v1193 = vadd.f32 %v1191, %v1192
  %v1194 = vmul.f32 %v1185, %v1169
  %v1195 = vmul.f32 %v1193, %v1169
  %v1196 = vmul.f32 %v1170, %v1170
  %v1197 = vmul.f32 %v1171, %v1171
  %v1198 = vsub.f32 %v1194, %v1196
  %v1199 = vsub.f32 %v1195, %v1197
  %v1200 = vmax.f32 %v1198, 0.0
  %v1201 = vmax.f32 %v1199, 0.0
  %v1202 = vsub.f32 %v1137, %v1170
  %v1203 = vsub.f32 %v1139, %v1171
  %v1204 = vsub.f32 %v1141, %v1170
  %v1205 = vsub.f32 %v1143, %v1171
  %v1206 = vsub.f32 %v1147, %v1170
  %v1207 = vsub.f32 %v1149, %v1171
  %v1208 = vadd.f32 %v1200, 1e-05
  %v1209 = vadd.f32 %v1201, 1e-05
  %v1210 = vrsqrt.pop %v1208
  %v1211 = vrsqrt.pop %v1209
  %v1212 = vmul.f32 %v1202, %v1210
  %v1213 = vmul.f32 %v1203, %v1211
  %v1214 = vmul.f32 %v1204, %v1210
  %v1215 = vmul.f32 %v1205, %v1211
  %v1216 = vmul.f32 %v1206, %v1210
  %v1217 = vmul.f32 %v1207, %v1211
  %v1218 = vmax.f32 %v1212, 0.0
  %v1219 = vmax.f32 %v1213, 0.0
  %v1220 = vmax.f32 %v1214, 0.0
  %v1221 = vmax.f32 %v1215, 0.0
  %v1222 = vmax.f32 %v1216, 0.0
  %v1223 = vmax.f32 %v1217, 0.0
  %1224 = vst [vmem:[#allocation4] sm:$0xff] %v1218
  %1225 = vst [vmem:[#allocation4 + $0x8] sm:$0xff] %v1219
  %1226 = vst [vmem:[#allocation4 + $0x10] sm:$0xff] %v1220
  %1227 = vst [vmem:[#allocation4 + $0x18] sm:$0xff] %v1221
  %1228 = vst [vmem:[#allocation4 + $0x20] sm:$0xff] %v1222
  %1229 = vst [vmem:[#allocation4 + $0x28] sm:$0xff] %v1223
  %v1230 = vld [vmem:[#allocation4] ss:$8 sm:$0x3]
  %v1231 = vlaneseq
  %vm1232 = vcmp.ge.s32.totalorder %v1231, 0
  %vm1233 = vcmp.lt.s32.totalorder %v1231, 256
  %vm1234 = vmand %vm1232, %vm1233
  %1235 = vst.msk [vmem:[#allocation5] ss:$2 sm:$0x3] %vm1234, %v1230
  %s1236 = scalar_lea.vmem [#allocation4], 1
  %v1237 = vld [vmem:[%s1236] ss:$8 sm:$0x3]
  %s1238 = scalar_lea.vmem [#allocation5], 4
  %1239 = vst.msk [vmem:[%s1238] ss:$2 sm:$0x3] %vm1234, %v1237
  %s1240 = scalar_lea.vmem [#allocation4], 2
  %v1241 = vld [vmem:[%s1240] ss:$8 sm:$0x3]
  %s1242 = scalar_lea.vmem [#allocation5], 8
  %1243 = vst.msk [vmem:[%s1242] ss:$2 sm:$0x3] %vm1234, %v1241
  %s1244 = scalar_lea.vmem [#allocation4], 3
  %v1245 = vld [vmem:[%s1244] ss:$8 sm:$0x3]
  %s1246 = scalar_lea.vmem [#allocation5], 12
  %1247 = vst.msk [vmem:[%s1246] ss:$2 sm:$0x3] %vm1234, %v1245
  %s1248 = scalar_lea.vmem [#allocation4], 4
  %v1249 = vld [vmem:[%s1248] ss:$8 sm:$0x3]
  %s1250 = scalar_lea.vmem [#allocation5], 16
  %1251 = vst.msk [vmem:[%s1250] ss:$2 sm:$0x3] %vm1234, %v1249
  %s1252 = scalar_lea.vmem [#allocation4], 5
  %v1253 = vld [vmem:[%s1252] ss:$8 sm:$0x3]
  %s1254 = scalar_lea.vmem [#allocation5], 20
  %1255 = vst.msk [vmem:[%s1254] ss:$2 sm:$0x3] %vm1234, %v1253
  %s1256 = scalar_lea.vmem [#allocation4], 6
  %v1257 = vld [vmem:[%s1256] ss:$8 sm:$0x3]
  %s1258 = scalar_lea.vmem [#allocation5], 24
  %1259 = vst.msk [vmem:[%s1258] ss:$2 sm:$0x3] %vm1234, %v1257
  %s1260 = scalar_lea.vmem [#allocation4], 7
  %v1261 = vld [vmem:[%s1260] ss:$8 sm:$0x3]
  %s1262 = scalar_lea.vmem [#allocation5], 28
  %1263 = vst.msk [vmem:[%s1262] ss:$2 sm:$0x3] %vm1234, %v1261
  %s1264 = scalar_lea.vmem [#allocation4], 16
  %v1265 = vld [vmem:[%s1264] ss:$8 sm:$0x3]
  %s1266 = scalar_lea.vmem [#allocation5], 32
  %1267 = vst.msk [vmem:[%s1266] ss:$2 sm:$0x3] %vm1234, %v1265
  %s1268 = scalar_lea.vmem [#allocation4], 17
  %v1269 = vld [vmem:[%s1268] ss:$8 sm:$0x3]
  %s1270 = scalar_lea.vmem [#allocation5], 36
  %1271 = vst.msk [vmem:[%s1270] ss:$2 sm:$0x3] %vm1234, %v1269
  %s1272 = scalar_lea.vmem [#allocation4], 18
  %v1273 = vld [vmem:[%s1272] ss:$8 sm:$0x3]
  %s1274 = scalar_lea.vmem [#allocation5], 40
  %1275 = vst.msk [vmem:[%s1274] ss:$2 sm:$0x3] %vm1234, %v1273
  %s1276 = scalar_lea.vmem [#allocation4], 19
  %v1277 = vld [vmem:[%s1276] ss:$8 sm:$0x3]
  %s1278 = scalar_lea.vmem [#allocation5], 44
  %1279 = vst.msk [vmem:[%s1278] ss:$2 sm:$0x3] %vm1234, %v1277
  %s1280 = scalar_lea.vmem [#allocation4], 20
  %v1281 = vld [vmem:[%s1280] ss:$8 sm:$0x3]
  %s1282 = scalar_lea.vmem [#allocation5], 1
  %1283 = vst.msk [vmem:[%s1282] ss:$2 sm:$0x3] %vm1234, %v1281
  %s1284 = scalar_lea.vmem [#allocation4], 21
  %v1285 = vld [vmem:[%s1284] ss:$8 sm:$0x3]
  %s1286 = scalar_lea.vmem [#allocation5], 5
  %1287 = vst.msk [vmem:[%s1286] ss:$2 sm:$0x3] %vm1234, %v1285
  %s1288 = scalar_lea.vmem [#allocation4], 22
  %v1289 = vld [vmem:[%s1288] ss:$8 sm:$0x3]
  %s1290 = scalar_lea.vmem [#allocation5], 9
  %1291 = vst.msk [vmem:[%s1290] ss:$2 sm:$0x3] %vm1234, %v1289
  %s1292 = scalar_lea.vmem [#allocation4], 23
  %v1293 = vld [vmem:[%s1292] ss:$8 sm:$0x3]
  %s1294 = scalar_lea.vmem [#allocation5], 13
  %1295 = vst.msk [vmem:[%s1294] ss:$2 sm:$0x3] %vm1234, %v1293
  %s1296 = scalar_lea.vmem [#allocation4], 32
  %v1297 = vld [vmem:[%s1296] ss:$8 sm:$0x3]
  %s1298 = scalar_lea.vmem [#allocation5], 17
  %1299 = vst.msk [vmem:[%s1298] ss:$2 sm:$0x3] %vm1234, %v1297
  %s1300 = scalar_lea.vmem [#allocation4], 33
  %v1301 = vld [vmem:[%s1300] ss:$8 sm:$0x3]
  %s1302 = scalar_lea.vmem [#allocation5], 21
  %1303 = vst.msk [vmem:[%s1302] ss:$2 sm:$0x3] %vm1234, %v1301
  %s1304 = scalar_lea.vmem [#allocation4], 34
  %v1305 = vld [vmem:[%s1304] ss:$8 sm:$0x3]
  %s1306 = scalar_lea.vmem [#allocation5], 25
  %1307 = vst.msk [vmem:[%s1306] ss:$2 sm:$0x3] %vm1234, %v1305
  %s1308 = scalar_lea.vmem [#allocation4], 35
  %v1309 = vld [vmem:[%s1308] ss:$8 sm:$0x3]
  %s1310 = scalar_lea.vmem [#allocation5], 29
  %1311 = vst.msk [vmem:[%s1310] ss:$2 sm:$0x3] %vm1234, %v1309
  %s1312 = scalar_lea.vmem [#allocation4], 36
  %v1313 = vld [vmem:[%s1312] ss:$8 sm:$0x3]
  %s1314 = scalar_lea.vmem [#allocation5], 33
  %1315 = vst.msk [vmem:[%s1314] ss:$2 sm:$0x3] %vm1234, %v1313
  %s1316 = scalar_lea.vmem [#allocation4], 37
  %v1317 = vld [vmem:[%s1316] ss:$8 sm:$0x3]
  %s1318 = scalar_lea.vmem [#allocation5], 37
  %1319 = vst.msk [vmem:[%s1318] ss:$2 sm:$0x3] %vm1234, %v1317
  %s1320 = scalar_lea.vmem [#allocation4], 38
  %v1321 = vld [vmem:[%s1320] ss:$8 sm:$0x3]
  %s1322 = scalar_lea.vmem [#allocation5], 41
  %1323 = vst.msk [vmem:[%s1322] ss:$2 sm:$0x3] %vm1234, %v1321
  %s1324 = scalar_lea.vmem [#allocation4], 39
  %v1325 = vld [vmem:[%s1324] ss:$8 sm:$0x3]
  %s1326 = scalar_lea.vmem [#allocation5], 45
  %1327 = vst.msk [vmem:[%s1326] ss:$2 sm:$0x3] %vm1234, %v1325
  %v1328 = vld [vmem:[#allocation5] sm:$0xff]
  %v1329 = vld [vmem:[#allocation5 + $0x8] sm:$0xff]
  %v1330 = vld [vmem:[#allocation5 + $0x10] sm:$0xff]
  %v1331 = vld [vmem:[#allocation5 + $0x18] sm:$0xff]
  %v1332 = vld [vmem:[#allocation5 + $0x20] sm:$0xff]
  %v1333 = vld [vmem:[#allocation5 + $0x28] sm:$0xff]
  %v1340 = vcombine.high %v1328, %v1328
  %v1342 = vunpack.c.l.s4 1983009808
  %v1343 = vunpack.c.0.s8 %v1342
  %v1344 = vlaneseq
  %v1345 = vshrl.u32 %v1344, 7
  %v1346 = vsub.s32 %v1343, %v1345
  %v1347 = vrot.slane %v1328, %v1346
  %v1349 = vunpack.c.l.s4 1983009808
  %v1350 = vunpack.c.0.s8 %v1349
  %v1351 = vlaneseq
  %v1352 = vshrl.u32 %v1351, 7
  %v1353 = vsub.s32 %v1350, %v1352
  %v1354 = vrot.slane %v1340, %v1353
  %v1355 = vcombine.high %v1347, %v1347
  %v1356 = vcombine.high %v1354, %v1354
  %v1357 = vcombine.high %v1329, %v1329
  %v1359 = vunpack.c.l.s4 1983009808
  %v1360 = vunpack.c.0.s8 %v1359
  %v1361 = vlaneseq
  %v1362 = vshrl.u32 %v1361, 7
  %v1363 = vsub.s32 %v1360, %v1362
  %v1364 = vrot.slane %v1329, %v1363
  %v1366 = vunpack.c.l.s4 1983009808
  %v1367 = vunpack.c.0.s8 %v1366
  %v1368 = vlaneseq
  %v1369 = vshrl.u32 %v1368, 7
  %v1370 = vsub.s32 %v1367, %v1369
  %v1371 = vrot.slane %v1357, %v1370
  %v1372 = vcombine.high %v1364, %v1364
  %v1373 = vcombine.high %v1371, %v1371
  %v1374 = vcombine.high %v1330, %v1330
  %v1376 = vunpack.c.l.s4 1983009808
  %v1377 = vunpack.c.0.s8 %v1376
  %v1378 = vlaneseq
  %v1379 = vshrl.u32 %v1378, 7
  %v1380 = vsub.s32 %v1377, %v1379
  %v1381 = vrot.slane %v1330, %v1380
  %v1383 = vunpack.c.l.s4 1983009808
  %v1384 = vunpack.c.0.s8 %v1383
  %v1385 = vlaneseq
  %v1386 = vshrl.u32 %v1385, 7
  %v1387 = vsub.s32 %v1384, %v1386
  %v1388 = vrot.slane %v1374, %v1387
  %v1389 = vcombine.high %v1381, %v1381
  %v1390 = vcombine.high %v1388, %v1388
  %v1391 = vcombine.high %v1331, %v1331
  %v1393 = vunpack.c.l.s4 1983009808
  %v1394 = vunpack.c.0.s8 %v1393
  %v1395 = vlaneseq
  %v1396 = vshrl.u32 %v1395, 7
  %v1397 = vsub.s32 %v1394, %v1396
  %v1398 = vrot.slane %v1331, %v1397
  %v1400 = vunpack.c.l.s4 1983009808
  %v1401 = vunpack.c.0.s8 %v1400
  %v1402 = vlaneseq
  %v1403 = vshrl.u32 %v1402, 7
  %v1404 = vsub.s32 %v1401, %v1403
  %v1405 = vrot.slane %v1391, %v1404
  %v1406 = vcombine.high %v1398, %v1398
  %v1407 = vcombine.high %v1405, %v1405
  %v1408 = vcombine.high %v1332, %v1332
  %v1410 = vunpack.c.l.s4 1983009808
  %v1411 = vunpack.c.0.s8 %v1410
  %v1412 = vlaneseq
  %v1413 = vshrl.u32 %v1412, 7
  %v1414 = vsub.s32 %v1411, %v1413
  %v1415 = vrot.slane %v1332, %v1414
  %v1417 = vunpack.c.l.s4 1983009808
  %v1418 = vunpack.c.0.s8 %v1417
  %v1419 = vlaneseq
  %v1420 = vshrl.u32 %v1419, 7
  %v1421 = vsub.s32 %v1418, %v1420
  %v1422 = vrot.slane %v1408, %v1421
  %v1423 = vcombine.high %v1415, %v1415
  %v1424 = vcombine.high %v1422, %v1422
  %v1425 = vcombine.high %v1333, %v1333
  %v1427 = vunpack.c.l.s4 1983009808
  %v1428 = vunpack.c.0.s8 %v1427
  %v1429 = vlaneseq
  %v1430 = vshrl.u32 %v1429, 7
  %v1431 = vsub.s32 %v1428, %v1430
  %v1432 = vrot.slane %v1333, %v1431
  %v1434 = vunpack.c.l.s4 1983009808
  %v1435 = vunpack.c.0.s8 %v1434
  %v1436 = vlaneseq
  %v1437 = vshrl.u32 %v1436, 7
  %v1438 = vsub.s32 %v1435, %v1437
  %v1439 = vrot.slane %v1425, %v1438
  %v1440 = vcombine.high %v1432, %v1432
  %v1441 = vcombine.high %v1439, %v1439
  %v1466 = vpack.c.bf16 %v1347, %v1347
  %v1467 = vpack.c.bf16 %v1355, %v1355
  %v1468 = vpack.c.bf16 %v1354, %v1354
  %v1469 = vpack.c.bf16 %v1356, %v1356
  %v1470 = vpack.c.bf16 %v1364, %v1364
  %v1471 = vpack.c.bf16 %v1372, %v1372
  %v1472 = vpack.c.bf16 %v1371, %v1371
  %v1473 = vpack.c.bf16 %v1373, %v1373
  %v1474 = vpack.c.bf16 %v1381, %v1381
  %v1475 = vpack.c.bf16 %v1389, %v1389
  %v1476 = vpack.c.bf16 %v1388, %v1388
  %v1477 = vpack.c.bf16 %v1390, %v1390
  %v1478 = vpack.c.bf16 %v1398, %v1398
  %v1479 = vpack.c.bf16 %v1406, %v1406
  %v1480 = vpack.c.bf16 %v1405, %v1405
  %v1481 = vpack.c.bf16 %v1407, %v1407
  %v1482 = vpack.c.bf16 %v1415, %v1415
  %v1483 = vpack.c.bf16 %v1423, %v1423
  %v1484 = vpack.c.bf16 %v1422, %v1422
  %v1485 = vpack.c.bf16 %v1424, %v1424
  %v1486 = vpack.c.bf16 %v1432, %v1432
  %v1487 = vpack.c.bf16 %v1440, %v1440
  %v1488 = vpack.c.bf16 %v1439, %v1439
  %v1489 = vpack.c.bf16 %v1441, %v1441
  %v1490 = vld [vmem:[%s3] sm:$0xf]
  %v1491 = vld [vmem:[%s3 + $0x4] sm:$0xf]
  %v1492 = vld [vmem:[%s3 + $0x8] sm:$0xf]
  %v1493 = vld [vmem:[%s3 + $0xc] sm:$0xf]
  %v1494 = vld [vmem:[%s3 + $0x10] sm:$0xf]
  %v1495 = vld [vmem:[%s3 + $0x14] sm:$0xf]
  %v1496 = vld [vmem:[%s3 + $0x18] sm:$0xf]
  %v1497 = vld [vmem:[%s3 + $0x1c] sm:$0xf]
  %v1498 = vld [vmem:[%s3 + $0x20] sm:$0xf]
  %v1499 = vld [vmem:[%s3 + $0x24] sm:$0xf]
  %v1500 = vld [vmem:[%s3 + $0x28] sm:$0xf]
  %v1501 = vld [vmem:[%s3 + $0x2c] sm:$0xf]
  %v1502 = vld [vmem:[%s3 + $0x30] sm:$0xf]
  %v1503 = vld [vmem:[%s3 + $0x34] sm:$0xf]
  %v1504 = vld [vmem:[%s3 + $0x38] sm:$0xf]
  %v1505 = vld [vmem:[%s3 + $0x3c] sm:$0xf]
  %v1506 = vld [vmem:[%s3 + $0x40] sm:$0xf]
  %v1507 = vld [vmem:[%s3 + $0x44] sm:$0xf]
  %v1508 = vld [vmem:[%s3 + $0x48] sm:$0xf]
  %v1509 = vld [vmem:[%s3 + $0x4c] sm:$0xf]
  %v1510 = vld [vmem:[%s3 + $0x50] sm:$0xf]
  %v1511 = vld [vmem:[%s3 + $0x54] sm:$0xf]
  %v1512 = vld [vmem:[%s3 + $0x58] sm:$0xf]
  %v1513 = vld [vmem:[%s3 + $0x5c] sm:$0xf]
  %v1514 = vld [vmem:[%s3 + $0x60] sm:$0xf]
  %v1515 = vld [vmem:[%s3 + $0x64] sm:$0xf]
  %v1516 = vld [vmem:[%s3 + $0x68] sm:$0xf]
  %v1517 = vld [vmem:[%s3 + $0x6c] sm:$0xf]
  %v1518 = vld [vmem:[%s3 + $0x70] sm:$0xf]
  %v1519 = vld [vmem:[%s3 + $0x74] sm:$0xf]
  %v1520 = vld [vmem:[%s3 + $0x78] sm:$0xf]
  %v1521 = vld [vmem:[%s3 + $0x7c] sm:$0xf]
  %v1522 = vld [vmem:[%s3 + $0x80] sm:$0xf]
  %v1523 = vld [vmem:[%s3 + $0x84] sm:$0xf]
  %v1524 = vld [vmem:[%s3 + $0x88] sm:$0xf]
  %v1525 = vld [vmem:[%s3 + $0x8c] sm:$0xf]
  %v1526 = vld [vmem:[%s3 + $0x90] sm:$0xf]
  %v1527 = vld [vmem:[%s3 + $0x94] sm:$0xf]
  %v1528 = vld [vmem:[%s3 + $0x98] sm:$0xf]
  %v1529 = vld [vmem:[%s3 + $0x9c] sm:$0xf]
  %v1530 = vld [vmem:[%s3 + $0xa0] sm:$0xf]
  %v1531 = vld [vmem:[%s3 + $0xa4] sm:$0xf]
  %v1532 = vld [vmem:[%s3 + $0xa8] sm:$0xf]
  %v1533 = vld [vmem:[%s3 + $0xac] sm:$0xf]
  %v1534 = vld [vmem:[%s3 + $0xb0] sm:$0xf]
  %v1535 = vld [vmem:[%s3 + $0xb4] sm:$0xf]
  %v1536 = vld [vmem:[%s3 + $0xb8] sm:$0xf]
  %v1537 = vld [vmem:[%s3 + $0xbc] sm:$0xf]
  %v1538 = vld [vmem:[%s3 + $0xc0] sm:$0xf]
  %v1539 = vld [vmem:[%s3 + $0xc4] sm:$0xf]
  %v1540 = vld [vmem:[%s3 + $0xc8] sm:$0xf]
  %v1541 = vld [vmem:[%s3 + $0xcc] sm:$0xf]
  %v1542 = vld [vmem:[%s3 + $0xd0] sm:$0xf]
  %v1543 = vld [vmem:[%s3 + $0xd4] sm:$0xf]
  %v1544 = vld [vmem:[%s3 + $0xd8] sm:$0xf]
  %v1545 = vld [vmem:[%s3 + $0xdc] sm:$0xf]
  %v1546 = vld [vmem:[%s3 + $0xe0] sm:$0xf]
  %v1547 = vld [vmem:[%s3 + $0xe4] sm:$0xf]
  %v1548 = vld [vmem:[%s3 + $0xe8] sm:$0xf]
  %v1549 = vld [vmem:[%s3 + $0xec] sm:$0xf]
  %v1550 = vld [vmem:[%s3 + $0xf0] sm:$0xf]
  %v1551 = vld [vmem:[%s3 + $0xf4] sm:$0xf]
  %v1552 = vld [vmem:[%s3 + $0xf8] sm:$0xf]
  %v1553 = vld [vmem:[%s3 + $0xfc] sm:$0xf]
  %v1554 = vld [vmem:[%s3 + $0x100] sm:$0xf]
  %v1555 = vld [vmem:[%s3 + $0x104] sm:$0xf]
  %v1556 = vld [vmem:[%s3 + $0x108] sm:$0xf]
  %v1557 = vld [vmem:[%s3 + $0x10c] sm:$0xf]
  %v1558 = vld [vmem:[%s3 + $0x110] sm:$0xf]
  %v1559 = vld [vmem:[%s3 + $0x114] sm:$0xf]
  %v1560 = vld [vmem:[%s3 + $0x118] sm:$0xf]
  %v1561 = vld [vmem:[%s3 + $0x11c] sm:$0xf]
  %v1562 = vld [vmem:[%s3 + $0x120] sm:$0xf]
  %v1563 = vld [vmem:[%s3 + $0x124] sm:$0xf]
  %v1564 = vld [vmem:[%s3 + $0x128] sm:$0xf]
  %v1565 = vld [vmem:[%s3 + $0x12c] sm:$0xf]
  %v1566 = vld [vmem:[%s3 + $0x130] sm:$0xf]
  %v1567 = vld [vmem:[%s3 + $0x134] sm:$0xf]
  %v1568 = vld [vmem:[%s3 + $0x138] sm:$0xf]
  %v1569 = vld [vmem:[%s3 + $0x13c] sm:$0xf]
  %v1570 = vld [vmem:[%s3 + $0x140] sm:$0xf]
  %v1571 = vld [vmem:[%s3 + $0x144] sm:$0xf]
  %v1572 = vld [vmem:[%s3 + $0x148] sm:$0xf]
  %v1573 = vld [vmem:[%s3 + $0x14c] sm:$0xf]
  %v1574 = vld [vmem:[%s3 + $0x150] sm:$0xf]
  %v1575 = vld [vmem:[%s3 + $0x154] sm:$0xf]
  %v1576 = vld [vmem:[%s3 + $0x158] sm:$0xf]
  %v1577 = vld [vmem:[%s3 + $0x15c] sm:$0xf]
  %v1578 = vld [vmem:[%s3 + $0x160] sm:$0xf]
  %v1579 = vld [vmem:[%s3 + $0x164] sm:$0xf]
  %v1580 = vld [vmem:[%s3 + $0x168] sm:$0xf]
  %v1581 = vld [vmem:[%s3 + $0x16c] sm:$0xf]
  %v1582 = vld [vmem:[%s3 + $0x170] sm:$0xf]
  %v1583 = vld [vmem:[%s3 + $0x174] sm:$0xf]
  %v1584 = vld [vmem:[%s3 + $0x178] sm:$0xf]
  %v1585 = vld [vmem:[%s3 + $0x17c] sm:$0xf]
  %v1586 = vld [vmem:[%s3 + $0x180] sm:$0xf]
  %v1587 = vld [vmem:[%s3 + $0x184] sm:$0xf]
  %v1588 = vld [vmem:[%s3 + $0x188] sm:$0xf]
  %v1589 = vld [vmem:[%s3 + $0x18c] sm:$0xf]
  %v1590 = vld [vmem:[%s3 + $0x190] sm:$0xf]
  %v1591 = vld [vmem:[%s3 + $0x194] sm:$0xf]
  %v1592 = vld [vmem:[%s3 + $0x198] sm:$0xf]
  %v1593 = vld [vmem:[%s3 + $0x19c] sm:$0xf]
  %v1594 = vld [vmem:[%s3 + $0x1a0] sm:$0xf]
  %v1595 = vld [vmem:[%s3 + $0x1a4] sm:$0xf]
  %v1596 = vld [vmem:[%s3 + $0x1a8] sm:$0xf]
  %v1597 = vld [vmem:[%s3 + $0x1ac] sm:$0xf]
  %v1598 = vld [vmem:[%s3 + $0x1b0] sm:$0xf]
  %v1599 = vld [vmem:[%s3 + $0x1b4] sm:$0xf]
  %v1600 = vld [vmem:[%s3 + $0x1b8] sm:$0xf]
  %v1601 = vld [vmem:[%s3 + $0x1bc] sm:$0xf]
  %v1602 = vld [vmem:[%s3 + $0x1c0] sm:$0xf]
  %v1603 = vld [vmem:[%s3 + $0x1c4] sm:$0xf]
  %v1604 = vld [vmem:[%s3 + $0x1c8] sm:$0xf]
  %v1605 = vld [vmem:[%s3 + $0x1cc] sm:$0xf]
  %v1606 = vld [vmem:[%s3 + $0x1d0] sm:$0xf]
  %v1607 = vld [vmem:[%s3 + $0x1d4] sm:$0xf]
  %v1608 = vld [vmem:[%s3 + $0x1d8] sm:$0xf]
  %v1609 = vld [vmem:[%s3 + $0x1dc] sm:$0xf]
  %v1610 = vld [vmem:[%s3 + $0x1e0] sm:$0xf]
  %v1611 = vld [vmem:[%s3 + $0x1e4] sm:$0xf]
  %v1612 = vld [vmem:[%s3 + $0x1e8] sm:$0xf]
  %v1613 = vld [vmem:[%s3 + $0x1ec] sm:$0xf]
  %v1614 = vld [vmem:[%s3 + $0x1f0] sm:$0xf]
  %v1615 = vld [vmem:[%s3 + $0x1f4] sm:$0xf]
  %v1616 = vld [vmem:[%s3 + $0x1f8] sm:$0xf]
  %v1617 = vld [vmem:[%s3 + $0x1fc] sm:$0xf]
  %v1618 = vld [vmem:[%s3 + $0x200] sm:$0xf]
  %v1619 = vld [vmem:[%s3 + $0x204] sm:$0xf]
  %v1620 = vld [vmem:[%s3 + $0x208] sm:$0xf]
  %v1621 = vld [vmem:[%s3 + $0x20c] sm:$0xf]
  %v1622 = vld [vmem:[%s3 + $0x210] sm:$0xf]
  %v1623 = vld [vmem:[%s3 + $0x214] sm:$0xf]
  %v1624 = vld [vmem:[%s3 + $0x218] sm:$0xf]
  %v1625 = vld [vmem:[%s3 + $0x21c] sm:$0xf]
  %v1626 = vld [vmem:[%s3 + $0x220] sm:$0xf]
  %v1627 = vld [vmem:[%s3 + $0x224] sm:$0xf]
  %v1628 = vld [vmem:[%s3 + $0x228] sm:$0xf]
  %v1629 = vld [vmem:[%s3 + $0x22c] sm:$0xf]
  %v1630 = vld [vmem:[%s3 + $0x230] sm:$0xf]
  %v1631 = vld [vmem:[%s3 + $0x234] sm:$0xf]
  %v1632 = vld [vmem:[%s3 + $0x238] sm:$0xf]
  %v1633 = vld [vmem:[%s3 + $0x23c] sm:$0xf]
  %v1634 = vld [vmem:[%s3 + $0x240] sm:$0xf]
  %v1635 = vld [vmem:[%s3 + $0x244] sm:$0xf]
  %v1636 = vld [vmem:[%s3 + $0x248] sm:$0xf]
  %v1637 = vld [vmem:[%s3 + $0x24c] sm:$0xf]
  %v1638 = vld [vmem:[%s3 + $0x250] sm:$0xf]
  %v1639 = vld [vmem:[%s3 + $0x254] sm:$0xf]
  %v1640 = vld [vmem:[%s3 + $0x258] sm:$0xf]
  %v1641 = vld [vmem:[%s3 + $0x25c] sm:$0xf]
  %v1642 = vld [vmem:[%s3 + $0x260] sm:$0xf]
  %v1643 = vld [vmem:[%s3 + $0x264] sm:$0xf]
  %v1644 = vld [vmem:[%s3 + $0x268] sm:$0xf]
  %v1645 = vld [vmem:[%s3 + $0x26c] sm:$0xf]
  %v1646 = vld [vmem:[%s3 + $0x270] sm:$0xf]
  %v1647 = vld [vmem:[%s3 + $0x274] sm:$0xf]
  %v1648 = vld [vmem:[%s3 + $0x278] sm:$0xf]
  %v1649 = vld [vmem:[%s3 + $0x27c] sm:$0xf]
  %v1650 = vld [vmem:[%s3 + $0x280] sm:$0xf]
  %v1651 = vld [vmem:[%s3 + $0x284] sm:$0xf]
  %v1652 = vld [vmem:[%s3 + $0x288] sm:$0xf]
  %v1653 = vld [vmem:[%s3 + $0x28c] sm:$0xf]
  %v1654 = vld [vmem:[%s3 + $0x290] sm:$0xf]
  %v1655 = vld [vmem:[%s3 + $0x294] sm:$0xf]
  %v1656 = vld [vmem:[%s3 + $0x298] sm:$0xf]
  %v1657 = vld [vmem:[%s3 + $0x29c] sm:$0xf]
  %v1658 = vld [vmem:[%s3 + $0x2a0] sm:$0xf]
  %v1659 = vld [vmem:[%s3 + $0x2a4] sm:$0xf]
  %v1660 = vld [vmem:[%s3 + $0x2a8] sm:$0xf]
  %v1661 = vld [vmem:[%s3 + $0x2ac] sm:$0xf]
  %v1662 = vld [vmem:[%s3 + $0x2b0] sm:$0xf]
  %v1663 = vld [vmem:[%s3 + $0x2b4] sm:$0xf]
  %v1664 = vld [vmem:[%s3 + $0x2b8] sm:$0xf]
  %v1665 = vld [vmem:[%s3 + $0x2bc] sm:$0xf]
  %v1666 = vld [vmem:[%s3 + $0x2c0] sm:$0xf]
  %v1667 = vld [vmem:[%s3 + $0x2c4] sm:$0xf]
  %v1668 = vld [vmem:[%s3 + $0x2c8] sm:$0xf]
  %v1669 = vld [vmem:[%s3 + $0x2cc] sm:$0xf]
  %v1670 = vld [vmem:[%s3 + $0x2d0] sm:$0xf]
  %v1671 = vld [vmem:[%s3 + $0x2d4] sm:$0xf]
  %v1672 = vld [vmem:[%s3 + $0x2d8] sm:$0xf]
  %v1673 = vld [vmem:[%s3 + $0x2dc] sm:$0xf]
  %v1674 = vld [vmem:[%s3 + $0x2e0] sm:$0xf]
  %v1675 = vld [vmem:[%s3 + $0x2e4] sm:$0xf]
  %v1676 = vld [vmem:[%s3 + $0x2e8] sm:$0xf]
  %v1677 = vld [vmem:[%s3 + $0x2ec] sm:$0xf]
  %v1678 = vld [vmem:[%s3 + $0x2f0] sm:$0xf]
  %v1679 = vld [vmem:[%s3 + $0x2f4] sm:$0xf]
  %v1680 = vld [vmem:[%s3 + $0x2f8] sm:$0xf]
  %v1681 = vld [vmem:[%s3 + $0x2fc] sm:$0xf]
  %v1682 = vld [vmem:[%s3 + $0x300] sm:$0xf]
  %v1683 = vld [vmem:[%s3 + $0x304] sm:$0xf]
  %v1684 = vld [vmem:[%s3 + $0x308] sm:$0xf]
  %v1685 = vld [vmem:[%s3 + $0x30c] sm:$0xf]
  %v1686 = vld [vmem:[%s3 + $0x310] sm:$0xf]
  %v1687 = vld [vmem:[%s3 + $0x314] sm:$0xf]
  %v1688 = vld [vmem:[%s3 + $0x318] sm:$0xf]
  %v1689 = vld [vmem:[%s3 + $0x31c] sm:$0xf]
  %v1690 = vld [vmem:[%s3 + $0x320] sm:$0xf]
  %v1691 = vld [vmem:[%s3 + $0x324] sm:$0xf]
  %v1692 = vld [vmem:[%s3 + $0x328] sm:$0xf]
  %v1693 = vld [vmem:[%s3 + $0x32c] sm:$0xf]
  %v1694 = vld [vmem:[%s3 + $0x330] sm:$0xf]
  %v1695 = vld [vmem:[%s3 + $0x334] sm:$0xf]
  %v1696 = vld [vmem:[%s3 + $0x338] sm:$0xf]
  %v1697 = vld [vmem:[%s3 + $0x33c] sm:$0xf]
  %v1698 = vld [vmem:[%s3 + $0x340] sm:$0xf]
  %v1699 = vld [vmem:[%s3 + $0x344] sm:$0xf]
  %v1700 = vld [vmem:[%s3 + $0x348] sm:$0xf]
  %v1701 = vld [vmem:[%s3 + $0x34c] sm:$0xf]
  %v1702 = vld [vmem:[%s3 + $0x350] sm:$0xf]
  %v1703 = vld [vmem:[%s3 + $0x354] sm:$0xf]
  %v1704 = vld [vmem:[%s3 + $0x358] sm:$0xf]
  %v1705 = vld [vmem:[%s3 + $0x35c] sm:$0xf]
  %v1706 = vld [vmem:[%s3 + $0x360] sm:$0xf]
  %v1707 = vld [vmem:[%s3 + $0x364] sm:$0xf]
  %v1708 = vld [vmem:[%s3 + $0x368] sm:$0xf]
  %v1709 = vld [vmem:[%s3 + $0x36c] sm:$0xf]
  %v1710 = vld [vmem:[%s3 + $0x370] sm:$0xf]
  %v1711 = vld [vmem:[%s3 + $0x374] sm:$0xf]
  %v1712 = vld [vmem:[%s3 + $0x378] sm:$0xf]
  %v1713 = vld [vmem:[%s3 + $0x37c] sm:$0xf]
  %v1714 = vld [vmem:[%s3 + $0x380] sm:$0xf]
  %v1715 = vld [vmem:[%s3 + $0x384] sm:$0xf]
  %v1716 = vld [vmem:[%s3 + $0x388] sm:$0xf]
  %v1717 = vld [vmem:[%s3 + $0x38c] sm:$0xf]
  %v1718 = vld [vmem:[%s3 + $0x390] sm:$0xf]
  %v1719 = vld [vmem:[%s3 + $0x394] sm:$0xf]
  %v1720 = vld [vmem:[%s3 + $0x398] sm:$0xf]
  %v1721 = vld [vmem:[%s3 + $0x39c] sm:$0xf]
  %v1722 = vld [vmem:[%s3 + $0x3a0] sm:$0xf]
  %v1723 = vld [vmem:[%s3 + $0x3a4] sm:$0xf]
  %v1724 = vld [vmem:[%s3 + $0x3a8] sm:$0xf]
  %v1725 = vld [vmem:[%s3 + $0x3ac] sm:$0xf]
  %v1726 = vld [vmem:[%s3 + $0x3b0] sm:$0xf]
  %v1727 = vld [vmem:[%s3 + $0x3b4] sm:$0xf]
  %v1728 = vld [vmem:[%s3 + $0x3b8] sm:$0xf]
  %v1729 = vld [vmem:[%s3 + $0x3bc] sm:$0xf]
  %v1730 = vld [vmem:[%s3 + $0x3c0] sm:$0xf]
  %v1731 = vld [vmem:[%s3 + $0x3c4] sm:$0xf]
  %v1732 = vld [vmem:[%s3 + $0x3c8] sm:$0xf]
  %v1733 = vld [vmem:[%s3 + $0x3cc] sm:$0xf]
  %v1734 = vld [vmem:[%s3 + $0x3d0] sm:$0xf]
  %v1735 = vld [vmem:[%s3 + $0x3d4] sm:$0xf]
  %v1736 = vld [vmem:[%s3 + $0x3d8] sm:$0xf]
  %v1737 = vld [vmem:[%s3 + $0x3dc] sm:$0xf]
  %v1738 = vld [vmem:[%s3 + $0x3e0] sm:$0xf]
  %v1739 = vld [vmem:[%s3 + $0x3e4] sm:$0xf]
  %v1740 = vld [vmem:[%s3 + $0x3e8] sm:$0xf]
  %v1741 = vld [vmem:[%s3 + $0x3ec] sm:$0xf]
  %v1742 = vld [vmem:[%s3 + $0x3f0] sm:$0xf]
  %v1743 = vld [vmem:[%s3 + $0x3f4] sm:$0xf]
  %v1744 = vld [vmem:[%s3 + $0x3f8] sm:$0xf]
  %v1745 = vld [vmem:[%s3 + $0x3fc] sm:$0xf]
  %v1746 = vld [vmem:[%s3 + $0x400] sm:$0xf]
  %v1747 = vld [vmem:[%s3 + $0x404] sm:$0xf]
  %v1748 = vld [vmem:[%s3 + $0x408] sm:$0xf]
  %v1749 = vld [vmem:[%s3 + $0x40c] sm:$0xf]
  %v1750 = vld [vmem:[%s3 + $0x410] sm:$0xf]
  %v1751 = vld [vmem:[%s3 + $0x414] sm:$0xf]
  %v1752 = vld [vmem:[%s3 + $0x418] sm:$0xf]
  %v1753 = vld [vmem:[%s3 + $0x41c] sm:$0xf]
  %v1754 = vld [vmem:[%s3 + $0x420] sm:$0xf]
  %v1755 = vld [vmem:[%s3 + $0x424] sm:$0xf]
  %v1756 = vld [vmem:[%s3 + $0x428] sm:$0xf]
  %v1757 = vld [vmem:[%s3 + $0x42c] sm:$0xf]
  %v1758 = vld [vmem:[%s3 + $0x430] sm:$0xf]
  %v1759 = vld [vmem:[%s3 + $0x434] sm:$0xf]
  %v1760 = vld [vmem:[%s3 + $0x438] sm:$0xf]
  %v1761 = vld [vmem:[%s3 + $0x43c] sm:$0xf]
  %v1762 = vld [vmem:[%s3 + $0x440] sm:$0xf]
  %v1763 = vld [vmem:[%s3 + $0x444] sm:$0xf]
  %v1764 = vld [vmem:[%s3 + $0x448] sm:$0xf]
  %v1765 = vld [vmem:[%s3 + $0x44c] sm:$0xf]
  %v1766 = vld [vmem:[%s3 + $0x450] sm:$0xf]
  %v1767 = vld [vmem:[%s3 + $0x454] sm:$0xf]
  %v1768 = vld [vmem:[%s3 + $0x458] sm:$0xf]
  %v1769 = vld [vmem:[%s3 + $0x45c] sm:$0xf]
  %v1770 = vld [vmem:[%s3 + $0x460] sm:$0xf]
  %v1771 = vld [vmem:[%s3 + $0x464] sm:$0xf]
  %v1772 = vld [vmem:[%s3 + $0x468] sm:$0xf]
  %v1773 = vld [vmem:[%s3 + $0x46c] sm:$0xf]
  %v1774 = vld [vmem:[%s3 + $0x470] sm:$0xf]
  %v1775 = vld [vmem:[%s3 + $0x474] sm:$0xf]
  %v1776 = vld [vmem:[%s3 + $0x478] sm:$0xf]
  %v1777 = vld [vmem:[%s3 + $0x47c] sm:$0xf]
  %v1778 = vld [vmem:[%s3 + $0x480] sm:$0xf]
  %v1779 = vld [vmem:[%s3 + $0x484] sm:$0xf]
  %v1780 = vld [vmem:[%s3 + $0x488] sm:$0xf]
  %v1781 = vld [vmem:[%s3 + $0x48c] sm:$0xf]
  %v1782 = vld [vmem:[%s3 + $0x490] sm:$0xf]
  %v1783 = vld [vmem:[%s3 + $0x494] sm:$0xf]
  %v1784 = vld [vmem:[%s3 + $0x498] sm:$0xf]
  %v1785 = vld [vmem:[%s3 + $0x49c] sm:$0xf]
  %v1786 = vld [vmem:[%s3 + $0x4a0] sm:$0xf]
  %v1787 = vld [vmem:[%s3 + $0x4a4] sm:$0xf]
  %v1788 = vld [vmem:[%s3 + $0x4a8] sm:$0xf]
  %v1789 = vld [vmem:[%s3 + $0x4ac] sm:$0xf]
  %v1790 = vld [vmem:[%s3 + $0x4b0] sm:$0xf]
  %v1791 = vld [vmem:[%s3 + $0x4b4] sm:$0xf]
  %v1792 = vld [vmem:[%s3 + $0x4b8] sm:$0xf]
  %v1793 = vld [vmem:[%s3 + $0x4bc] sm:$0xf]
  %v1794 = vld [vmem:[%s3 + $0x4c0] sm:$0xf]
  %v1795 = vld [vmem:[%s3 + $0x4c4] sm:$0xf]
  %v1796 = vld [vmem:[%s3 + $0x4c8] sm:$0xf]
  %v1797 = vld [vmem:[%s3 + $0x4cc] sm:$0xf]
  %v1798 = vld [vmem:[%s3 + $0x4d0] sm:$0xf]
  %v1799 = vld [vmem:[%s3 + $0x4d4] sm:$0xf]
  %v1800 = vld [vmem:[%s3 + $0x4d8] sm:$0xf]
  %v1801 = vld [vmem:[%s3 + $0x4dc] sm:$0xf]
  %v1802 = vld [vmem:[%s3 + $0x4e0] sm:$0xf]
  %v1803 = vld [vmem:[%s3 + $0x4e4] sm:$0xf]
  %v1804 = vld [vmem:[%s3 + $0x4e8] sm:$0xf]
  %v1805 = vld [vmem:[%s3 + $0x4ec] sm:$0xf]
  %v1806 = vld [vmem:[%s3 + $0x4f0] sm:$0xf]
  %v1807 = vld [vmem:[%s3 + $0x4f4] sm:$0xf]
  %v1808 = vld [vmem:[%s3 + $0x4f8] sm:$0xf]
  %v1809 = vld [vmem:[%s3 + $0x4fc] sm:$0xf]
  %v1810 = vld [vmem:[%s3 + $0x500] sm:$0xf]
  %v1811 = vld [vmem:[%s3 + $0x504] sm:$0xf]
  %v1812 = vld [vmem:[%s3 + $0x508] sm:$0xf]
  %v1813 = vld [vmem:[%s3 + $0x50c] sm:$0xf]
  %v1814 = vld [vmem:[%s3 + $0x510] sm:$0xf]
  %v1815 = vld [vmem:[%s3 + $0x514] sm:$0xf]
  %v1816 = vld [vmem:[%s3 + $0x518] sm:$0xf]
  %v1817 = vld [vmem:[%s3 + $0x51c] sm:$0xf]
  %v1818 = vld [vmem:[%s3 + $0x520] sm:$0xf]
  %v1819 = vld [vmem:[%s3 + $0x524] sm:$0xf]
  %v1820 = vld [vmem:[%s3 + $0x528] sm:$0xf]
  %v1821 = vld [vmem:[%s3 + $0x52c] sm:$0xf]
  %v1822 = vld [vmem:[%s3 + $0x530] sm:$0xf]
  %v1823 = vld [vmem:[%s3 + $0x534] sm:$0xf]
  %v1824 = vld [vmem:[%s3 + $0x538] sm:$0xf]
  %v1825 = vld [vmem:[%s3 + $0x53c] sm:$0xf]
  %v1826 = vld [vmem:[%s3 + $0x540] sm:$0xf]
  %v1827 = vld [vmem:[%s3 + $0x544] sm:$0xf]
  %v1828 = vld [vmem:[%s3 + $0x548] sm:$0xf]
  %v1829 = vld [vmem:[%s3 + $0x54c] sm:$0xf]
  %v1830 = vld [vmem:[%s3 + $0x550] sm:$0xf]
  %v1831 = vld [vmem:[%s3 + $0x554] sm:$0xf]
  %v1832 = vld [vmem:[%s3 + $0x558] sm:$0xf]
  %v1833 = vld [vmem:[%s3 + $0x55c] sm:$0xf]
  %v1834 = vld [vmem:[%s3 + $0x560] sm:$0xf]
  %v1835 = vld [vmem:[%s3 + $0x564] sm:$0xf]
  %v1836 = vld [vmem:[%s3 + $0x568] sm:$0xf]
  %v1837 = vld [vmem:[%s3 + $0x56c] sm:$0xf]
  %v1838 = vld [vmem:[%s3 + $0x570] sm:$0xf]
  %v1839 = vld [vmem:[%s3 + $0x574] sm:$0xf]
  %v1840 = vld [vmem:[%s3 + $0x578] sm:$0xf]
  %v1841 = vld [vmem:[%s3 + $0x57c] sm:$0xf]
  %v1842 = vld [vmem:[%s3 + $0x580] sm:$0xf]
  %v1843 = vld [vmem:[%s3 + $0x584] sm:$0xf]
  %v1844 = vld [vmem:[%s3 + $0x588] sm:$0xf]
  %v1845 = vld [vmem:[%s3 + $0x58c] sm:$0xf]
  %v1846 = vld [vmem:[%s3 + $0x590] sm:$0xf]
  %v1847 = vld [vmem:[%s3 + $0x594] sm:$0xf]
  %v1848 = vld [vmem:[%s3 + $0x598] sm:$0xf]
  %v1849 = vld [vmem:[%s3 + $0x59c] sm:$0xf]
  %v1850 = vld [vmem:[%s3 + $0x5a0] sm:$0xf]
  %v1851 = vld [vmem:[%s3 + $0x5a4] sm:$0xf]
  %v1852 = vld [vmem:[%s3 + $0x5a8] sm:$0xf]
  %v1853 = vld [vmem:[%s3 + $0x5ac] sm:$0xf]
  %v1854 = vld [vmem:[%s3 + $0x5b0] sm:$0xf]
  %v1855 = vld [vmem:[%s3 + $0x5b4] sm:$0xf]
  %v1856 = vld [vmem:[%s3 + $0x5b8] sm:$0xf]
  %v1857 = vld [vmem:[%s3 + $0x5bc] sm:$0xf]
  %v1858 = vld [vmem:[%s3 + $0x5c0] sm:$0xf]
  %v1859 = vld [vmem:[%s3 + $0x5c4] sm:$0xf]
  %v1860 = vld [vmem:[%s3 + $0x5c8] sm:$0xf]
  %v1861 = vld [vmem:[%s3 + $0x5cc] sm:$0xf]
  %v1862 = vld [vmem:[%s3 + $0x5d0] sm:$0xf]
  %v1863 = vld [vmem:[%s3 + $0x5d4] sm:$0xf]
  %v1864 = vld [vmem:[%s3 + $0x5d8] sm:$0xf]
  %v1865 = vld [vmem:[%s3 + $0x5dc] sm:$0xf]
  %v1866 = vld [vmem:[%s3 + $0x5e0] sm:$0xf]
  %v1867 = vld [vmem:[%s3 + $0x5e4] sm:$0xf]
  %v1868 = vld [vmem:[%s3 + $0x5e8] sm:$0xf]
  %v1869 = vld [vmem:[%s3 + $0x5ec] sm:$0xf]
  %v1870 = vld [vmem:[%s3 + $0x5f0] sm:$0xf]
  %v1871 = vld [vmem:[%s3 + $0x5f4] sm:$0xf]
  %v1872 = vld [vmem:[%s3 + $0x5f8] sm:$0xf]
  %v1873 = vld [vmem:[%s3 + $0x5fc] sm:$0xf]
  %v1874 = vld [vmem:[%s4] sm:$0x1]
  %v1876 = vlaneseq
  %v1877 = vshrl.u32 %v1876, 7
  %v1878 = vsub.s32 0, %v1877
  %v1879 = vrot.slane %v1874, %v1878
  %v2265 = vunpack.c.l.b16 %v1490
  %v2266 = vunpack.c.l.b16 %v1491
  %v2267 = vunpack.c.l.b16 %v1492
  %v2268 = vunpack.c.l.b16 %v1493
  %v2269 = vunpack.c.l.b16 %v1494
  %v2270 = vunpack.c.l.b16 %v1495
  %v2271 = vunpack.c.l.b16 %v1496
  %v2272 = vunpack.c.l.b16 %v1497
  %v2273 = vunpack.c.l.b16 %v1498
  %v2274 = vunpack.c.l.b16 %v1499
  %v2275 = vunpack.c.l.b16 %v1500
  %v2276 = vunpack.c.l.b16 %v1501
  %v2277 = vunpack.c.l.b16 %v1502
  %v2278 = vunpack.c.l.b16 %v1503
  %v2279 = vunpack.c.l.b16 %v1504
  %v2280 = vunpack.c.l.b16 %v1505
  %v2281 = vunpack.c.l.b16 %v1506
  %v2282 = vunpack.c.l.b16 %v1507
  %v2283 = vunpack.c.l.b16 %v1508
  %v2284 = vunpack.c.l.b16 %v1509
  %v2285 = vunpack.c.l.b16 %v1510
  %v2286 = vunpack.c.l.b16 %v1511
  %v2287 = vunpack.c.l.b16 %v1512
  %v2288 = vunpack.c.l.b16 %v1513
  %v2289 = vunpack.c.l.b16 %v1514
  %v2290 = vunpack.c.l.b16 %v1515
  %v2291 = vunpack.c.l.b16 %v1516
  %v2292 = vunpack.c.l.b16 %v1517
  %v2293 = vunpack.c.l.b16 %v1518
  %v2294 = vunpack.c.l.b16 %v1519
  %v2295 = vunpack.c.l.b16 %v1520
  %v2296 = vunpack.c.l.b16 %v1521
  %v2297 = vunpack.c.l.b16 %v1522
  %v2298 = vunpack.c.l.b16 %v1523
  %v2299 = vunpack.c.l.b16 %v1524
  %v2300 = vunpack.c.l.b16 %v1525
  %v2301 = vunpack.c.l.b16 %v1526
  %v2302 = vunpack.c.l.b16 %v1527
  %v2303 = vunpack.c.l.b16 %v1528
  %v2304 = vunpack.c.l.b16 %v1529
  %v2305 = vunpack.c.l.b16 %v1530
  %v2306 = vunpack.c.l.b16 %v1531
  %v2307 = vunpack.c.l.b16 %v1532
  %v2308 = vunpack.c.l.b16 %v1533
  %v2309 = vunpack.c.l.b16 %v1534
  %v2310 = vunpack.c.l.b16 %v1535
  %v2311 = vunpack.c.l.b16 %v1536
  %v2312 = vunpack.c.l.b16 %v1537
  %v2313 = vunpack.c.l.b16 %v1538
  %v2314 = vunpack.c.l.b16 %v1539
  %v2315 = vunpack.c.l.b16 %v1540
  %v2316 = vunpack.c.l.b16 %v1541
  %v2317 = vunpack.c.l.b16 %v1542
  %v2318 = vunpack.c.l.b16 %v1543
  %v2319 = vunpack.c.l.b16 %v1544
  %v2320 = vunpack.c.l.b16 %v1545
  %v2321 = vunpack.c.l.b16 %v1546
  %v2322 = vunpack.c.l.b16 %v1547
  %v2323 = vunpack.c.l.b16 %v1548
  %v2324 = vunpack.c.l.b16 %v1549
  %v2325 = vunpack.c.l.b16 %v1550
  %v2326 = vunpack.c.l.b16 %v1551
  %v2327 = vunpack.c.l.b16 %v1552
  %v2328 = vunpack.c.l.b16 %v1553
  %v2329 = vunpack.c.l.b16 %v1554
  %v2330 = vunpack.c.l.b16 %v1555
  %v2331 = vunpack.c.l.b16 %v1556
  %v2332 = vunpack.c.l.b16 %v1557
  %v2333 = vunpack.c.l.b16 %v1558
  %v2334 = vunpack.c.l.b16 %v1559
  %v2335 = vunpack.c.l.b16 %v1560
  %v2336 = vunpack.c.l.b16 %v1561
  %v2337 = vunpack.c.l.b16 %v1562
  %v2338 = vunpack.c.l.b16 %v1563
  %v2339 = vunpack.c.l.b16 %v1564
  %v2340 = vunpack.c.l.b16 %v1565
  %v2341 = vunpack.c.l.b16 %v1566
  %v2342 = vunpack.c.l.b16 %v1567
  %v2343 = vunpack.c.l.b16 %v1568
  %v2344 = vunpack.c.l.b16 %v1569
  %v2345 = vunpack.c.l.b16 %v1570
  %v2346 = vunpack.c.l.b16 %v1571
  %v2347 = vunpack.c.l.b16 %v1572
  %v2348 = vunpack.c.l.b16 %v1573
  %v2349 = vunpack.c.l.b16 %v1574
  %v2350 = vunpack.c.l.b16 %v1575
  %v2351 = vunpack.c.l.b16 %v1576
  %v2352 = vunpack.c.l.b16 %v1577
  %v2353 = vunpack.c.l.b16 %v1578
  %v2354 = vunpack.c.l.b16 %v1579
  %v2355 = vunpack.c.l.b16 %v1580
  %v2356 = vunpack.c.l.b16 %v1581
  %v2357 = vunpack.c.l.b16 %v1582
  %v2358 = vunpack.c.l.b16 %v1583
  %v2359 = vunpack.c.l.b16 %v1584
  %v2360 = vunpack.c.l.b16 %v1585
  %v2361 = vunpack.c.l.b16 %v1586
  %v2362 = vunpack.c.l.b16 %v1587
  %v2363 = vunpack.c.l.b16 %v1588
  %v2364 = vunpack.c.l.b16 %v1589
  %v2365 = vunpack.c.l.b16 %v1590
  %v2366 = vunpack.c.l.b16 %v1591
  %v2367 = vunpack.c.l.b16 %v1592
  %v2368 = vunpack.c.l.b16 %v1593
  %v2369 = vunpack.c.l.b16 %v1594
  %v2370 = vunpack.c.l.b16 %v1595
  %v2371 = vunpack.c.l.b16 %v1596
  %v2372 = vunpack.c.l.b16 %v1597
  %v2373 = vunpack.c.l.b16 %v1598
  %v2374 = vunpack.c.l.b16 %v1599
  %v2375 = vunpack.c.l.b16 %v1600
  %v2376 = vunpack.c.l.b16 %v1601
  %v2377 = vunpack.c.l.b16 %v1602
  %v2378 = vunpack.c.l.b16 %v1603
  %v2379 = vunpack.c.l.b16 %v1604
  %v2380 = vunpack.c.l.b16 %v1605
  %v2381 = vunpack.c.l.b16 %v1606
  %v2382 = vunpack.c.l.b16 %v1607
  %v2383 = vunpack.c.l.b16 %v1608
  %v2384 = vunpack.c.l.b16 %v1609
  %v2385 = vunpack.c.l.b16 %v1610
  %v2386 = vunpack.c.l.b16 %v1611
  %v2387 = vunpack.c.l.b16 %v1612
  %v2388 = vunpack.c.l.b16 %v1613
  %v2389 = vunpack.c.l.b16 %v1614
  %v2390 = vunpack.c.l.b16 %v1615
  %v2391 = vunpack.c.l.b16 %v1616
  %v2392 = vunpack.c.l.b16 %v1617
  %v2393 = vunpack.c.l.b16 %v1618
  %v2394 = vunpack.c.l.b16 %v1619
  %v2395 = vunpack.c.l.b16 %v1620
  %v2396 = vunpack.c.l.b16 %v1621
  %v2397 = vunpack.c.l.b16 %v1622
  %v2398 = vunpack.c.l.b16 %v1623
  %v2399 = vunpack.c.l.b16 %v1624
  %v2400 = vunpack.c.l.b16 %v1625
  %v2401 = vunpack.c.l.b16 %v1626
  %v2402 = vunpack.c.l.b16 %v1627
  %v2403 = vunpack.c.l.b16 %v1628
  %v2404 = vunpack.c.l.b16 %v1629
  %v2405 = vunpack.c.l.b16 %v1630
  %v2406 = vunpack.c.l.b16 %v1631
  %v2407 = vunpack.c.l.b16 %v1632
  %v2408 = vunpack.c.l.b16 %v1633
  %v2409 = vunpack.c.l.b16 %v1634
  %v2410 = vunpack.c.l.b16 %v1635
  %v2411 = vunpack.c.l.b16 %v1636
  %v2412 = vunpack.c.l.b16 %v1637
  %v2413 = vunpack.c.l.b16 %v1638
  %v2414 = vunpack.c.l.b16 %v1639
  %v2415 = vunpack.c.l.b16 %v1640
  %v2416 = vunpack.c.l.b16 %v1641
  %v2417 = vunpack.c.l.b16 %v1642
  %v2418 = vunpack.c.l.b16 %v1643
  %v2419 = vunpack.c.l.b16 %v1644
  %v2420 = vunpack.c.l.b16 %v1645
  %v2421 = vunpack.c.l.b16 %v1646
  %v2422 = vunpack.c.l.b16 %v1647
  %v2423 = vunpack.c.l.b16 %v1648
  %v2424 = vunpack.c.l.b16 %v1649
  %v2425 = vunpack.c.l.b16 %v1650
  %v2426 = vunpack.c.l.b16 %v1651
  %v2427 = vunpack.c.l.b16 %v1652
  %v2428 = vunpack.c.l.b16 %v1653
  %v2429 = vunpack.c.l.b16 %v1654
  %v2430 = vunpack.c.l.b16 %v1655
  %v2431 = vunpack.c.l.b16 %v1656
  %v2432 = vunpack.c.l.b16 %v1657
  %v2433 = vunpack.c.l.b16 %v1658
  %v2434 = vunpack.c.l.b16 %v1659
  %v2435 = vunpack.c.l.b16 %v1660
  %v2436 = vunpack.c.l.b16 %v1661
  %v2437 = vunpack.c.l.b16 %v1662
  %v2438 = vunpack.c.l.b16 %v1663
  %v2439 = vunpack.c.l.b16 %v1664
  %v2440 = vunpack.c.l.b16 %v1665
  %v2441 = vunpack.c.l.b16 %v1666
  %v2442 = vunpack.c.l.b16 %v1667
  %v2443 = vunpack.c.l.b16 %v1668
  %v2444 = vunpack.c.l.b16 %v1669
  %v2445 = vunpack.c.l.b16 %v1670
  %v2446 = vunpack.c.l.b16 %v1671
  %v2447 = vunpack.c.l.b16 %v1672
  %v2448 = vunpack.c.l.b16 %v1673
  %v2449 = vunpack.c.l.b16 %v1674
  %v2450 = vunpack.c.l.b16 %v1675
  %v2451 = vunpack.c.l.b16 %v1676
  %v2452 = vunpack.c.l.b16 %v1677
  %v2453 = vunpack.c.l.b16 %v1678
  %v2454 = vunpack.c.l.b16 %v1679
  %v2455 = vunpack.c.l.b16 %v1680
  %v2456 = vunpack.c.l.b16 %v1681
  %v2457 = vunpack.c.l.b16 %v1682
  %v2458 = vunpack.c.l.b16 %v1683
  %v2459 = vunpack.c.l.b16 %v1684
  %v2460 = vunpack.c.l.b16 %v1685
  %v2461 = vunpack.c.l.b16 %v1686
  %v2462 = vunpack.c.l.b16 %v1687
  %v2463 = vunpack.c.l.b16 %v1688
  %v2464 = vunpack.c.l.b16 %v1689
  %v2465 = vunpack.c.l.b16 %v1690
  %v2466 = vunpack.c.l.b16 %v1691
  %v2467 = vunpack.c.l.b16 %v1692
  %v2468 = vunpack.c.l.b16 %v1693
  %v2469 = vunpack.c.l.b16 %v1694
  %v2470 = vunpack.c.l.b16 %v1695
  %v2471 = vunpack.c.l.b16 %v1696
  %v2472 = vunpack.c.l.b16 %v1697
  %v2473 = vunpack.c.l.b16 %v1698
  %v2474 = vunpack.c.l.b16 %v1699
  %v2475 = vunpack.c.l.b16 %v1700
  %v2476 = vunpack.c.l.b16 %v1701
  %v2477 = vunpack.c.l.b16 %v1702
  %v2478 = vunpack.c.l.b16 %v1703
  %v2479 = vunpack.c.l.b16 %v1704
  %v2480 = vunpack.c.l.b16 %v1705
  %v2481 = vunpack.c.l.b16 %v1706
  %v2482 = vunpack.c.l.b16 %v1707
  %v2483 = vunpack.c.l.b16 %v1708
  %v2484 = vunpack.c.l.b16 %v1709
  %v2485 = vunpack.c.l.b16 %v1710
  %v2486 = vunpack.c.l.b16 %v1711
  %v2487 = vunpack.c.l.b16 %v1712
  %v2488 = vunpack.c.l.b16 %v1713
  %v2489 = vunpack.c.l.b16 %v1714
  %v2490 = vunpack.c.l.b16 %v1715
  %v2491 = vunpack.c.l.b16 %v1716
  %v2492 = vunpack.c.l.b16 %v1717
  %v2493 = vunpack.c.l.b16 %v1718
  %v2494 = vunpack.c.l.b16 %v1719
  %v2495 = vunpack.c.l.b16 %v1720
  %v2496 = vunpack.c.l.b16 %v1721
  %v2497 = vunpack.c.l.b16 %v1722
  %v2498 = vunpack.c.l.b16 %v1723
  %v2499 = vunpack.c.l.b16 %v1724
  %v2500 = vunpack.c.l.b16 %v1725
  %v2501 = vunpack.c.l.b16 %v1726
  %v2502 = vunpack.c.l.b16 %v1727
  %v2503 = vunpack.c.l.b16 %v1728
  %v2504 = vunpack.c.l.b16 %v1729
  %v2505 = vunpack.c.l.b16 %v1730
  %v2506 = vunpack.c.l.b16 %v1731
  %v2507 = vunpack.c.l.b16 %v1732
  %v2508 = vunpack.c.l.b16 %v1733
  %v2509 = vunpack.c.l.b16 %v1734
  %v2510 = vunpack.c.l.b16 %v1735
  %v2511 = vunpack.c.l.b16 %v1736
  %v2512 = vunpack.c.l.b16 %v1737
  %v2513 = vunpack.c.l.b16 %v1738
  %v2514 = vunpack.c.l.b16 %v1739
  %v2515 = vunpack.c.l.b16 %v1740
  %v2516 = vunpack.c.l.b16 %v1741
  %v2517 = vunpack.c.l.b16 %v1742
  %v2518 = vunpack.c.l.b16 %v1743
  %v2519 = vunpack.c.l.b16 %v1744
  %v2520 = vunpack.c.l.b16 %v1745
  %v2521 = vunpack.c.l.b16 %v1746
  %v2522 = vunpack.c.l.b16 %v1747
  %v2523 = vunpack.c.l.b16 %v1748
  %v2524 = vunpack.c.l.b16 %v1749
  %v2525 = vunpack.c.l.b16 %v1750
  %v2526 = vunpack.c.l.b16 %v1751
  %v2527 = vunpack.c.l.b16 %v1752
  %v2528 = vunpack.c.l.b16 %v1753
  %v2529 = vunpack.c.l.b16 %v1754
  %v2530 = vunpack.c.l.b16 %v1755
  %v2531 = vunpack.c.l.b16 %v1756
  %v2532 = vunpack.c.l.b16 %v1757
  %v2533 = vunpack.c.l.b16 %v1758
  %v2534 = vunpack.c.l.b16 %v1759
  %v2535 = vunpack.c.l.b16 %v1760
  %v2536 = vunpack.c.l.b16 %v1761
  %v2537 = vunpack.c.l.b16 %v1762
  %v2538 = vunpack.c.l.b16 %v1763
  %v2539 = vunpack.c.l.b16 %v1764
  %v2540 = vunpack.c.l.b16 %v1765
  %v2541 = vunpack.c.l.b16 %v1766
  %v2542 = vunpack.c.l.b16 %v1767
  %v2543 = vunpack.c.l.b16 %v1768
  %v2544 = vunpack.c.l.b16 %v1769
  %v2545 = vunpack.c.l.b16 %v1770
  %v2546 = vunpack.c.l.b16 %v1771
  %v2547 = vunpack.c.l.b16 %v1772
  %v2548 = vunpack.c.l.b16 %v1773
  %v2549 = vunpack.c.l.b16 %v1774
  %v2550 = vunpack.c.l.b16 %v1775
  %v2551 = vunpack.c.l.b16 %v1776
  %v2552 = vunpack.c.l.b16 %v1777
  %v2553 = vunpack.c.l.b16 %v1778
  %v2554 = vunpack.c.l.b16 %v1779
  %v2555 = vunpack.c.l.b16 %v1780
  %v2556 = vunpack.c.l.b16 %v1781
  %v2557 = vunpack.c.l.b16 %v1782
  %v2558 = vunpack.c.l.b16 %v1783
  %v2559 = vunpack.c.l.b16 %v1784
  %v2560 = vunpack.c.l.b16 %v1785
  %v2561 = vunpack.c.l.b16 %v1786
  %v2562 = vunpack.c.l.b16 %v1787
  %v2563 = vunpack.c.l.b16 %v1788
  %v2564 = vunpack.c.l.b16 %v1789
  %v2565 = vunpack.c.l.b16 %v1790
  %v2566 = vunpack.c.l.b16 %v1791
  %v2567 = vunpack.c.l.b16 %v1792
  %v2568 = vunpack.c.l.b16 %v1793
  %v2569 = vunpack.c.l.b16 %v1794
  %v2570 = vunpack.c.l.b16 %v1795
  %v2571 = vunpack.c.l.b16 %v1796
  %v2572 = vunpack.c.l.b16 %v1797
  %v2573 = vunpack.c.l.b16 %v1798
  %v2574 = vunpack.c.l.b16 %v1799
  %v2575 = vunpack.c.l.b16 %v1800
  %v2576 = vunpack.c.l.b16 %v1801
  %v2577 = vunpack.c.l.b16 %v1802
  %v2578 = vunpack.c.l.b16 %v1803
  %v2579 = vunpack.c.l.b16 %v1804
  %v2580 = vunpack.c.l.b16 %v1805
  %v2581 = vunpack.c.l.b16 %v1806
  %v2582 = vunpack.c.l.b16 %v1807
  %v2583 = vunpack.c.l.b16 %v1808
  %v2584 = vunpack.c.l.b16 %v1809
  %v2585 = vunpack.c.l.b16 %v1810
  %v2586 = vunpack.c.l.b16 %v1811
  %v2587 = vunpack.c.l.b16 %v1812
  %v2588 = vunpack.c.l.b16 %v1813
  %v2589 = vunpack.c.l.b16 %v1814
  %v2590 = vunpack.c.l.b16 %v1815
  %v2591 = vunpack.c.l.b16 %v1816
  %v2592 = vunpack.c.l.b16 %v1817
  %v2593 = vunpack.c.l.b16 %v1818
  %v2594 = vunpack.c.l.b16 %v1819
  %v2595 = vunpack.c.l.b16 %v1820
  %v2596 = vunpack.c.l.b16 %v1821
  %v2597 = vunpack.c.l.b16 %v1822
  %v2598 = vunpack.c.l.b16 %v1823
  %v2599 = vunpack.c.l.b16 %v1824
  %v2600 = vunpack.c.l.b16 %v1825
  %v2601 = vunpack.c.l.b16 %v1826
  %v2602 = vunpack.c.l.b16 %v1827
  %v2603 = vunpack.c.l.b16 %v1828
  %v2604 = vunpack.c.l.b16 %v1829
  %v2605 = vunpack.c.l.b16 %v1830
  %v2606 = vunpack.c.l.b16 %v1831
  %v2607 = vunpack.c.l.b16 %v1832
  %v2608 = vunpack.c.l.b16 %v1833
  %v2609 = vunpack.c.l.b16 %v1834
  %v2610 = vunpack.c.l.b16 %v1835
  %v2611 = vunpack.c.l.b16 %v1836
  %v2612 = vunpack.c.l.b16 %v1837
  %v2613 = vunpack.c.l.b16 %v1838
  %v2614 = vunpack.c.l.b16 %v1839
  %v2615 = vunpack.c.l.b16 %v1840
  %v2616 = vunpack.c.l.b16 %v1841
  %v2617 = vunpack.c.l.b16 %v1842
  %v2618 = vunpack.c.l.b16 %v1843
  %v2619 = vunpack.c.l.b16 %v1844
  %v2620 = vunpack.c.l.b16 %v1845
  %v2621 = vunpack.c.l.b16 %v1846
  %v2622 = vunpack.c.l.b16 %v1847
  %v2623 = vunpack.c.l.b16 %v1848
  %v2624 = vunpack.c.l.b16 %v1849
  %v2625 = vunpack.c.l.b16 %v1850
  %v2626 = vunpack.c.l.b16 %v1851
  %v2627 = vunpack.c.l.b16 %v1852
  %v2628 = vunpack.c.l.b16 %v1853
  %v2629 = vunpack.c.l.b16 %v1854
  %v2630 = vunpack.c.l.b16 %v1855
  %v2631 = vunpack.c.l.b16 %v1856
  %v2632 = vunpack.c.l.b16 %v1857
  %v2633 = vunpack.c.l.b16 %v1858
  %v2634 = vunpack.c.l.b16 %v1859
  %v2635 = vunpack.c.l.b16 %v1860
  %v2636 = vunpack.c.l.b16 %v1861
  %v2637 = vunpack.c.l.b16 %v1862
  %v2638 = vunpack.c.l.b16 %v1863
  %v2639 = vunpack.c.l.b16 %v1864
  %v2640 = vunpack.c.l.b16 %v1865
  %v2641 = vunpack.c.l.b16 %v1866
  %v2642 = vunpack.c.l.b16 %v1867
  %v2643 = vunpack.c.l.b16 %v1868
  %v2644 = vunpack.c.l.b16 %v1869
  %v2645 = vunpack.c.l.b16 %v1870
  %v2646 = vunpack.c.l.b16 %v1871
  %v2647 = vunpack.c.l.b16 %v1872
  %v2648 = vunpack.c.l.b16 %v1873
  %v2649 = vpack.c.b16 %v2266, %v2265
  %v2650 = vpack.c.b16 %v2268, %v2267
  %v2651 = vpack.c.b16 %v2270, %v2269
  %v2652 = vpack.c.b16 %v2272, %v2271
  %v2653 = vpack.c.b16 %v2274, %v2273
  %v2654 = vpack.c.b16 %v2276, %v2275
  %v2655 = vpack.c.b16 %v2278, %v2277
  %v2656 = vpack.c.b16 %v2280, %v2279
  %v2657 = vpack.c.b16 %v2282, %v2281
  %v2658 = vpack.c.b16 %v2284, %v2283
  %v2659 = vpack.c.b16 %v2286, %v2285
  %v2660 = vpack.c.b16 %v2288, %v2287
  %v2661 = vpack.c.b16 %v2290, %v2289
  %v2662 = vpack.c.b16 %v2292, %v2291
  %v2663 = vpack.c.b16 %v2294, %v2293
  %v2664 = vpack.c.b16 %v2296, %v2295
  %v2665 = vpack.c.b16 %v2298, %v2297
  %v2666 = vpack.c.b16 %v2300, %v2299
  %v2667 = vpack.c.b16 %v2302, %v2301
  %v2668 = vpack.c.b16 %v2304, %v2303
  %v2669 = vpack.c.b16 %v2306, %v2305
  %v2670 = vpack.c.b16 %v2308, %v2307
  %v2671 = vpack.c.b16 %v2310, %v2309
  %v2672 = vpack.c.b16 %v2312, %v2311
  %v2673 = vpack.c.b16 %v2314, %v2313
  %v2674 = vpack.c.b16 %v2316, %v2315
  %v2675 = vpack.c.b16 %v2318, %v2317
  %v2676 = vpack.c.b16 %v2320, %v2319
  %v2677 = vpack.c.b16 %v2322, %v2321
  %v2678 = vpack.c.b16 %v2324, %v2323
  %v2679 = vpack.c.b16 %v2326, %v2325
  %v2680 = vpack.c.b16 %v2328, %v2327
  %v2681 = vpack.c.b16 %v2330, %v2329
  %v2682 = vpack.c.b16 %v2332, %v2331
  %v2683 = vpack.c.b16 %v2334, %v2333
  %v2684 = vpack.c.b16 %v2336, %v2335
  %v2685 = vpack.c.b16 %v2338, %v2337
  %v2686 = vpack.c.b16 %v2340, %v2339
  %v2687 = vpack.c.b16 %v2342, %v2341
  %v2688 = vpack.c.b16 %v2344, %v2343
  %v2689 = vpack.c.b16 %v2346, %v2345
  %v2690 = vpack.c.b16 %v2348, %v2347
  %v2691 = vpack.c.b16 %v2350, %v2349
  %v2692 = vpack.c.b16 %v2352, %v2351
  %v2693 = vpack.c.b16 %v2354, %v2353
  %v2694 = vpack.c.b16 %v2356, %v2355
  %v2695 = vpack.c.b16 %v2358, %v2357
  %v2696 = vpack.c.b16 %v2360, %v2359
  %v2697 = vpack.c.b16 %v2362, %v2361
  %v2698 = vpack.c.b16 %v2364, %v2363
  %v2699 = vpack.c.b16 %v2366, %v2365
  %v2700 = vpack.c.b16 %v2368, %v2367
  %v2701 = vpack.c.b16 %v2370, %v2369
  %v2702 = vpack.c.b16 %v2372, %v2371
  %v2703 = vpack.c.b16 %v2374, %v2373
  %v2704 = vpack.c.b16 %v2376, %v2375
  %v2705 = vpack.c.b16 %v2378, %v2377
  %v2706 = vpack.c.b16 %v2380, %v2379
  %v2707 = vpack.c.b16 %v2382, %v2381
  %v2708 = vpack.c.b16 %v2384, %v2383
  %v2709 = vpack.c.b16 %v2386, %v2385
  %v2710 = vpack.c.b16 %v2388, %v2387
  %v2711 = vpack.c.b16 %v2390, %v2389
  %v2712 = vpack.c.b16 %v2392, %v2391
  %v2713 = vpack.c.b16 %v2394, %v2393
  %v2714 = vpack.c.b16 %v2396, %v2395
  %v2715 = vpack.c.b16 %v2398, %v2397
  %v2716 = vpack.c.b16 %v2400, %v2399
  %v2717 = vpack.c.b16 %v2402, %v2401
  %v2718 = vpack.c.b16 %v2404, %v2403
  %v2719 = vpack.c.b16 %v2406, %v2405
  %v2720 = vpack.c.b16 %v2408, %v2407
  %v2721 = vpack.c.b16 %v2410, %v2409
  %v2722 = vpack.c.b16 %v2412, %v2411
  %v2723 = vpack.c.b16 %v2414, %v2413
  %v2724 = vpack.c.b16 %v2416, %v2415
  %v2725 = vpack.c.b16 %v2418, %v2417
  %v2726 = vpack.c.b16 %v2420, %v2419
  %v2727 = vpack.c.b16 %v2422, %v2421
  %v2728 = vpack.c.b16 %v2424, %v2423
  %v2729 = vpack.c.b16 %v2426, %v2425
  %v2730 = vpack.c.b16 %v2428, %v2427
  %v2731 = vpack.c.b16 %v2430, %v2429
  %v2732 = vpack.c.b16 %v2432, %v2431
  %v2733 = vpack.c.b16 %v2434, %v2433
  %v2734 = vpack.c.b16 %v2436, %v2435
  %v2735 = vpack.c.b16 %v2438, %v2437
  %v2736 = vpack.c.b16 %v2440, %v2439
  %v2737 = vpack.c.b16 %v2442, %v2441
  %v2738 = vpack.c.b16 %v2444, %v2443
  %v2739 = vpack.c.b16 %v2446, %v2445
  %v2740 = vpack.c.b16 %v2448, %v2447
  %v2741 = vpack.c.b16 %v2450, %v2449
  %v2742 = vpack.c.b16 %v2452, %v2451
  %v2743 = vpack.c.b16 %v2454, %v2453
  %v2744 = vpack.c.b16 %v2456, %v2455
  %v2745 = vpack.c.b16 %v2458, %v2457
  %v2746 = vpack.c.b16 %v2460, %v2459
  %v2747 = vpack.c.b16 %v2462, %v2461
  %v2748 = vpack.c.b16 %v2464, %v2463
  %v2749 = vpack.c.b16 %v2466, %v2465
  %v2750 = vpack.c.b16 %v2468, %v2467
  %v2751 = vpack.c.b16 %v2470, %v2469
  %v2752 = vpack.c.b16 %v2472, %v2471
  %v2753 = vpack.c.b16 %v2474, %v2473
  %v2754 = vpack.c.b16 %v2476, %v2475
  %v2755 = vpack.c.b16 %v2478, %v2477
  %v2756 = vpack.c.b16 %v2480, %v2479
  %v2757 = vpack.c.b16 %v2482, %v2481
  %v2758 = vpack.c.b16 %v2484, %v2483
  %v2759 = vpack.c.b16 %v2486, %v2485
  %v2760 = vpack.c.b16 %v2488, %v2487
  %v2761 = vpack.c.b16 %v2490, %v2489
  %v2762 = vpack.c.b16 %v2492, %v2491
  %v2763 = vpack.c.b16 %v2494, %v2493
  %v2764 = vpack.c.b16 %v2496, %v2495
  %v2765 = vpack.c.b16 %v2498, %v2497
  %v2766 = vpack.c.b16 %v2500, %v2499
  %v2767 = vpack.c.b16 %v2502, %v2501
  %v2768 = vpack.c.b16 %v2504, %v2503
  %v2769 = vpack.c.b16 %v2506, %v2505
  %v2770 = vpack.c.b16 %v2508, %v2507
  %v2771 = vpack.c.b16 %v2510, %v2509
  %v2772 = vpack.c.b16 %v2512, %v2511
  %v2773 = vpack.c.b16 %v2514, %v2513
  %v2774 = vpack.c.b16 %v2516, %v2515
  %v2775 = vpack.c.b16 %v2518, %v2517
  %v2776 = vpack.c.b16 %v2520, %v2519
  %v2777 = vpack.c.b16 %v2522, %v2521
  %v2778 = vpack.c.b16 %v2524, %v2523
  %v2779 = vpack.c.b16 %v2526, %v2525
  %v2780 = vpack.c.b16 %v2528, %v2527
  %v2781 = vpack.c.b16 %v2530, %v2529
  %v2782 = vpack.c.b16 %v2532, %v2531
  %v2783 = vpack.c.b16 %v2534, %v2533
  %v2784 = vpack.c.b16 %v2536, %v2535
  %v2785 = vpack.c.b16 %v2538, %v2537
  %v2786 = vpack.c.b16 %v2540, %v2539
  %v2787 = vpack.c.b16 %v2542, %v2541
  %v2788 = vpack.c.b16 %v2544, %v2543
  %v2789 = vpack.c.b16 %v2546, %v2545
  %v2790 = vpack.c.b16 %v2548, %v2547
  %v2791 = vpack.c.b16 %v2550, %v2549
  %v2792 = vpack.c.b16 %v2552, %v2551
  %v2793 = vpack.c.b16 %v2554, %v2553
  %v2794 = vpack.c.b16 %v2556, %v2555
  %v2795 = vpack.c.b16 %v2558, %v2557
  %v2796 = vpack.c.b16 %v2560, %v2559
  %v2797 = vpack.c.b16 %v2562, %v2561
  %v2798 = vpack.c.b16 %v2564, %v2563
  %v2799 = vpack.c.b16 %v2566, %v2565
  %v2800 = vpack.c.b16 %v2568, %v2567
  %v2801 = vpack.c.b16 %v2570, %v2569
  %v2802 = vpack.c.b16 %v2572, %v2571
  %v2803 = vpack.c.b16 %v2574, %v2573
  %v2804 = vpack.c.b16 %v2576, %v2575
  %v2805 = vpack.c.b16 %v2578, %v2577
  %v2806 = vpack.c.b16 %v2580, %v2579
  %v2807 = vpack.c.b16 %v2582, %v2581
  %v2808 = vpack.c.b16 %v2584, %v2583
  %v2809 = vpack.c.b16 %v2586, %v2585
  %v2810 = vpack.c.b16 %v2588, %v2587
  %v2811 = vpack.c.b16 %v2590, %v2589
  %v2812 = vpack.c.b16 %v2592, %v2591
  %v2813 = vpack.c.b16 %v2594, %v2593
  %v2814 = vpack.c.b16 %v2596, %v2595
  %v2815 = vpack.c.b16 %v2598, %v2597
  %v2816 = vpack.c.b16 %v2600, %v2599
  %v2817 = vpack.c.b16 %v2602, %v2601
  %v2818 = vpack.c.b16 %v2604, %v2603
  %v2819 = vpack.c.b16 %v2606, %v2605
  %v2820 = vpack.c.b16 %v2608, %v2607
  %v2821 = vpack.c.b16 %v2610, %v2609
  %v2822 = vpack.c.b16 %v2612, %v2611
  %v2823 = vpack.c.b16 %v2614, %v2613
  %v2824 = vpack.c.b16 %v2616, %v2615
  %v2825 = vpack.c.b16 %v2618, %v2617
  %v2826 = vpack.c.b16 %v2620, %v2619
  %v2827 = vpack.c.b16 %v2622, %v2621
  %v2828 = vpack.c.b16 %v2624, %v2623
  %v2829 = vpack.c.b16 %v2626, %v2625
  %v2830 = vpack.c.b16 %v2628, %v2627
  %v2831 = vpack.c.b16 %v2630, %v2629
  %v2832 = vpack.c.b16 %v2632, %v2631
  %v2833 = vpack.c.b16 %v2634, %v2633
  %v2834 = vpack.c.b16 %v2636, %v2635
  %v2835 = vpack.c.b16 %v2638, %v2637
  %v2836 = vpack.c.b16 %v2640, %v2639
  %v2837 = vpack.c.b16 %v2642, %v2641
  %v2838 = vpack.c.b16 %v2644, %v2643
  %v2839 = vpack.c.b16 %v2646, %v2645
  %v2840 = vpack.c.b16 %v2648, %v2647
  %3033 = vmatprep.subr.bf16.mxu0 0
  %3034 = vmatpush1.bf16.msra.mxu0 %v2656
  %3035 = vmatprep.subr.bf16.mxu0 0
  %3036 = vmatpush1.bf16.msra.mxu0 %v2655
  %3037 = vmatprep.subr.bf16.mxu0 0
  %3038 = vmatpush1.bf16.msra.mxu0 %v2654
  %3039 = vmatprep.subr.bf16.mxu0 0
  %3040 = vmatpush1.bf16.msra.mxu0 %v2653
  %3041 = vmatprep.subr.bf16.mxu0 0
  %3042 = vmatpush1.bf16.msra.mxu0 %v2652
  %3043 = vmatprep.subr.bf16.mxu0 0
  %3044 = vmatpush1.bf16.msra.mxu0 %v2651
  %3045 = vmatprep.subr.bf16.mxu0 0
  %3046 = vmatpush1.bf16.msra.mxu0 %v2650
  %3047 = vmatprep.subr.bf16.mxu0 0
  %3048 = vmatpush1.bf16.msra.mxu0 %v2649
  %3049 = vmatprep.subr.bf16.mxu0 0
  %3050 = vmatpush2.bf16.msra.mxu0 %v2664
  %3051 = vmatprep.subr.bf16.mxu0 0
  %3052 = vmatpush2.bf16.msra.mxu0 %v2663
  %3053 = vmatprep.subr.bf16.mxu0 0
  %3054 = vmatpush2.bf16.msra.mxu0 %v2662
  %3055 = vmatprep.subr.bf16.mxu0 0
  %3056 = vmatpush2.bf16.msra.mxu0 %v2661
  %3057 = vmatprep.subr.bf16.mxu0 0
  %3058 = vmatpush2.bf16.msra.mxu0 %v2660
  %3059 = vmatprep.subr.bf16.mxu0 0
  %3060 = vmatpush2.bf16.msra.mxu0 %v2659
  %3061 = vmatprep.subr.bf16.mxu0 0
  %3062 = vmatpush2.bf16.msra.mxu0 %v2658
  %3063 = vmatprep.subr.bf16.mxu0 0
  %3064 = vmatpush2.bf16.msra.mxu0 %v2657
  %3065 = vmatprep.mubr.bf16.mxu0 %v1467
  %3066 = vmatmul.mubr.bf16.gmra.mxu0 %v1466
  %v3067 = vpop.f32.mrf.mxu0
  %v3068 = vadd.f32 %v1879, %v3067
  %v3069 = vpop.f32.mrf.mxu0
  %v3070 = vpop.f32.mrf.mxu0
  %v3071 = vpop.f32.mrf.mxu0
  %3072 = vdwg.mxu0
  %3073 = vmatprep.subr.bf16.mxu0 0
  %3074 = vmatpush1.bf16.msra.mxu0 %v2672
  %3075 = vmatprep.subr.bf16.mxu0 0
  %3076 = vmatpush1.bf16.msra.mxu0 %v2671
  %3077 = vmatprep.subr.bf16.mxu0 0
  %3078 = vmatpush1.bf16.msra.mxu0 %v2670
  %3079 = vmatprep.subr.bf16.mxu0 0
  %3080 = vmatpush1.bf16.msra.mxu0 %v2669
  %3081 = vmatprep.subr.bf16.mxu0 0
  %3082 = vmatpush1.bf16.msra.mxu0 %v2668
  %3083 = vmatprep.subr.bf16.mxu0 0
  %3084 = vmatpush1.bf16.msra.mxu0 %v2667
  %3085 = vmatprep.subr.bf16.mxu0 0
  %3086 = vmatpush1.bf16.msra.mxu0 %v2666
  %3087 = vmatprep.subr.bf16.mxu0 0
  %3088 = vmatpush1.bf16.msra.mxu0 %v2665
  %3089 = vmatprep.subr.bf16.mxu0 0
  %3090 = vmatpush2.bf16.msra.mxu0 %v2680
  %3091 = vmatprep.subr.bf16.mxu0 0
  %3092 = vmatpush2.bf16.msra.mxu0 %v2679
  %3093 = vmatprep.subr.bf16.mxu0 0
  %3094 = vmatpush2.bf16.msra.mxu0 %v2678
  %3095 = vmatprep.subr.bf16.mxu0 0
  %3096 = vmatpush2.bf16.msra.mxu0 %v2677
  %3097 = vmatprep.subr.bf16.mxu0 0
  %3098 = vmatpush2.bf16.msra.mxu0 %v2676
  %3099 = vmatprep.subr.bf16.mxu0 0
  %3100 = vmatpush2.bf16.msra.mxu0 %v2675
  %3101 = vmatprep.subr.bf16.mxu0 0
  %3102 = vmatpush2.bf16.msra.mxu0 %v2674
  %3103 = vmatprep.subr.bf16.mxu0 0
  %3104 = vmatpush2.bf16.msra.mxu0 %v2673
  %3105 = vmatprep.mubr.bf16.mxu0 %v1469
  %3106 = vmatmul.mubr.bf16.gmra.mxu0 %v1468
  %v3107 = vpop.f32.mrf.mxu0
  %v3108 = vadd.f32 %v3068, %v3107
  %v3109 = vpop.f32.mrf.mxu0
  %v3110 = vpop.f32.mrf.mxu0
  %v3111 = vpop.f32.mrf.mxu0
  %3112 = vdwg.mxu0
  %3113 = vmatprep.subr.bf16.mxu0 0
  %3114 = vmatpush1.bf16.msra.mxu0 %v2688
  %3115 = vmatprep.subr.bf16.mxu0 0
  %3116 = vmatpush1.bf16.msra.mxu0 %v2687
  %3117 = vmatprep.subr.bf16.mxu0 0
  %3118 = vmatpush1.bf16.msra.mxu0 %v2686
  %3119 = vmatprep.subr.bf16.mxu0 0
  %3120 = vmatpush1.bf16.msra.mxu0 %v2685
  %3121 = vmatprep.subr.bf16.mxu0 0
  %3122 = vmatpush1.bf16.msra.mxu0 %v2684
  %3123 = vmatprep.subr.bf16.mxu0 0
  %3124 = vmatpush1.bf16.msra.mxu0 %v2683
  %3125 = vmatprep.subr.bf16.mxu0 0
  %3126 = vmatpush1.bf16.msra.mxu0 %v2682
  %3127 = vmatprep.subr.bf16.mxu0 0
  %3128 = vmatpush1.bf16.msra.mxu0 %v2681
  %3129 = vmatprep.subr.bf16.mxu0 0
  %3130 = vmatpush2.bf16.msra.mxu0 %v2696
  %3131 = vmatprep.subr.bf16.mxu0 0
  %3132 = vmatpush2.bf16.msra.mxu0 %v2695
  %3133 = vmatprep.subr.bf16.mxu0 0
  %3134 = vmatpush2.bf16.msra.mxu0 %v2694
  %3135 = vmatprep.subr.bf16.mxu0 0
  %3136 = vmatpush2.bf16.msra.mxu0 %v2693
  %3137 = vmatprep.subr.bf16.mxu0 0
  %3138 = vmatpush2.bf16.msra.mxu0 %v2692
  %3139 = vmatprep.subr.bf16.mxu0 0
  %3140 = vmatpush2.bf16.msra.mxu0 %v2691
  %3141 = vmatprep.subr.bf16.mxu0 0
  %3142 = vmatpush2.bf16.msra.mxu0 %v2690
  %3143 = vmatprep.subr.bf16.mxu0 0
  %3144 = vmatpush2.bf16.msra.mxu0 %v2689
  %3145 = vmatprep.mubr.bf16.mxu0 %v1471
  %3146 = vmatmul.mubr.bf16.gmra.mxu0 %v1470
  %v3147 = vpop.f32.mrf.mxu0
  %v3148 = vadd.f32 %v3108, %v3147
  %v3149 = vpop.f32.mrf.mxu0
  %v3150 = vpop.f32.mrf.mxu0
  %v3151 = vpop.f32.mrf.mxu0
  %3152 = vdwg.mxu0
  %3153 = vmatprep.subr.bf16.mxu0 0
  %3154 = vmatpush1.bf16.msra.mxu0 %v2704
  %3155 = vmatprep.subr.bf16.mxu0 0
  %3156 = vmatpush1.bf16.msra.mxu0 %v2703
  %3157 = vmatprep.subr.bf16.mxu0 0
  %3158 = vmatpush1.bf16.msra.mxu0 %v2702
  %3159 = vmatprep.subr.bf16.mxu0 0
  %3160 = vmatpush1.bf16.msra.mxu0 %v2701
  %3161 = vmatprep.subr.bf16.mxu0 0
  %3162 = vmatpush1.bf16.msra.mxu0 %v2700
  %3163 = vmatprep.subr.bf16.mxu0 0
  %3164 = vmatpush1.bf16.msra.mxu0 %v2699
  %3165 = vmatprep.subr.bf16.mxu0 0
  %3166 = vmatpush1.bf16.msra.mxu0 %v2698
  %3167 = vmatprep.subr.bf16.mxu0 0
  %3168 = vmatpush1.bf16.msra.mxu0 %v2697
  %3169 = vmatprep.subr.bf16.mxu0 0
  %3170 = vmatpush2.bf16.msra.mxu0 %v2712
  %3171 = vmatprep.subr.bf16.mxu0 0
  %3172 = vmatpush2.bf16.msra.mxu0 %v2711
  %3173 = vmatprep.subr.bf16.mxu0 0
  %3174 = vmatpush2.bf16.msra.mxu0 %v2710
  %3175 = vmatprep.subr.bf16.mxu0 0
  %3176 = vmatpush2.bf16.msra.mxu0 %v2709
  %3177 = vmatprep.subr.bf16.mxu0 0
  %3178 = vmatpush2.bf16.msra.mxu0 %v2708
  %3179 = vmatprep.subr.bf16.mxu0 0
  %3180 = vmatpush2.bf16.msra.mxu0 %v2707
  %3181 = vmatprep.subr.bf16.mxu0 0
  %3182 = vmatpush2.bf16.msra.mxu0 %v2706
  %3183 = vmatprep.subr.bf16.mxu0 0
  %3184 = vmatpush2.bf16.msra.mxu0 %v2705
  %3185 = vmatprep.mubr.bf16.mxu0 %v1473
  %3186 = vmatmul.mubr.bf16.gmra.mxu0 %v1472
  %v3187 = vpop.f32.mrf.mxu0
  %v3188 = vadd.f32 %v3148, %v3187
  %v3189 = vpop.f32.mrf.mxu0
  %v3190 = vpop.f32.mrf.mxu0
  %v3191 = vpop.f32.mrf.mxu0
  %3192 = vdwg.mxu0
  %3193 = vmatprep.subr.bf16.mxu0 0
  %3194 = vmatpush1.bf16.msra.mxu0 %v2720
  %3195 = vmatprep.subr.bf16.mxu0 0
  %3196 = vmatpush1.bf16.msra.mxu0 %v2719
  %3197 = vmatprep.subr.bf16.mxu0 0
  %3198 = vmatpush1.bf16.msra.mxu0 %v2718
  %3199 = vmatprep.subr.bf16.mxu0 0
  %3200 = vmatpush1.bf16.msra.mxu0 %v2717
  %3201 = vmatprep.subr.bf16.mxu0 0
  %3202 = vmatpush1.bf16.msra.mxu0 %v2716
  %3203 = vmatprep.subr.bf16.mxu0 0
  %3204 = vmatpush1.bf16.msra.mxu0 %v2715
  %3205 = vmatprep.subr.bf16.mxu0 0
  %3206 = vmatpush1.bf16.msra.mxu0 %v2714
  %3207 = vmatprep.subr.bf16.mxu0 0
  %3208 = vmatpush1.bf16.msra.mxu0 %v2713
  %3209 = vmatprep.subr.bf16.mxu0 0
  %3210 = vmatpush2.bf16.msra.mxu0 %v2728
  %3211 = vmatprep.subr.bf16.mxu0 0
  %3212 = vmatpush2.bf16.msra.mxu0 %v2727
  %3213 = vmatprep.subr.bf16.mxu0 0
  %3214 = vmatpush2.bf16.msra.mxu0 %v2726
  %3215 = vmatprep.subr.bf16.mxu0 0
  %3216 = vmatpush2.bf16.msra.mxu0 %v2725
  %3217 = vmatprep.subr.bf16.mxu0 0
  %3218 = vmatpush2.bf16.msra.mxu0 %v2724
  %3219 = vmatprep.subr.bf16.mxu0 0
  %3220 = vmatpush2.bf16.msra.mxu0 %v2723
  %3221 = vmatprep.subr.bf16.mxu0 0
  %3222 = vmatpush2.bf16.msra.mxu0 %v2722
  %3223 = vmatprep.subr.bf16.mxu0 0
  %3224 = vmatpush2.bf16.msra.mxu0 %v2721
  %3225 = vmatprep.mubr.bf16.mxu0 %v1475
  %3226 = vmatmul.mubr.bf16.gmra.mxu0 %v1474
  %v3227 = vpop.f32.mrf.mxu0
  %v3228 = vadd.f32 %v3188, %v3227
  %v3229 = vpop.f32.mrf.mxu0
  %v3230 = vpop.f32.mrf.mxu0
  %v3231 = vpop.f32.mrf.mxu0
  %3232 = vdwg.mxu0
  %3233 = vmatprep.subr.bf16.mxu0 0
  %3234 = vmatpush1.bf16.msra.mxu0 %v2736
  %3235 = vmatprep.subr.bf16.mxu0 0
  %3236 = vmatpush1.bf16.msra.mxu0 %v2735
  %3237 = vmatprep.subr.bf16.mxu0 0
  %3238 = vmatpush1.bf16.msra.mxu0 %v2734
  %3239 = vmatprep.subr.bf16.mxu0 0
  %3240 = vmatpush1.bf16.msra.mxu0 %v2733
  %3241 = vmatprep.subr.bf16.mxu0 0
  %3242 = vmatpush1.bf16.msra.mxu0 %v2732
  %3243 = vmatprep.subr.bf16.mxu0 0
  %3244 = vmatpush1.bf16.msra.mxu0 %v2731
  %3245 = vmatprep.subr.bf16.mxu0 0
  %3246 = vmatpush1.bf16.msra.mxu0 %v2730
  %3247 = vmatprep.subr.bf16.mxu0 0
  %3248 = vmatpush1.bf16.msra.mxu0 %v2729
  %3249 = vmatprep.subr.bf16.mxu0 0
  %3250 = vmatpush2.bf16.msra.mxu0 %v2744
  %3251 = vmatprep.subr.bf16.mxu0 0
  %3252 = vmatpush2.bf16.msra.mxu0 %v2743
  %3253 = vmatprep.subr.bf16.mxu0 0
  %3254 = vmatpush2.bf16.msra.mxu0 %v2742
  %3255 = vmatprep.subr.bf16.mxu0 0
  %3256 = vmatpush2.bf16.msra.mxu0 %v2741
  %3257 = vmatprep.subr.bf16.mxu0 0
  %3258 = vmatpush2.bf16.msra.mxu0 %v2740
  %3259 = vmatprep.subr.bf16.mxu0 0
  %3260 = vmatpush2.bf16.msra.mxu0 %v2739
  %3261 = vmatprep.subr.bf16.mxu0 0
  %3262 = vmatpush2.bf16.msra.mxu0 %v2738
  %3263 = vmatprep.subr.bf16.mxu0 0
  %3264 = vmatpush2.bf16.msra.mxu0 %v2737
  %3265 = vmatprep.mubr.bf16.mxu0 %v1477
  %3266 = vmatmul.mubr.bf16.gmra.mxu0 %v1476
  %v3267 = vpop.f32.mrf.mxu0
  %v3268 = vadd.f32 %v3228, %v3267
  %v3269 = vpop.f32.mrf.mxu0
  %v3270 = vpop.f32.mrf.mxu0
  %v3271 = vpop.f32.mrf.mxu0
  %3272 = vdwg.mxu0
  %3273 = vmatprep.subr.bf16.mxu0 0
  %3274 = vmatpush1.bf16.msra.mxu0 %v2752
  %3275 = vmatprep.subr.bf16.mxu0 0
  %3276 = vmatpush1.bf16.msra.mxu0 %v2751
  %3277 = vmatprep.subr.bf16.mxu0 0
  %3278 = vmatpush1.bf16.msra.mxu0 %v2750
  %3279 = vmatprep.subr.bf16.mxu0 0
  %3280 = vmatpush1.bf16.msra.mxu0 %v2749
  %3281 = vmatprep.subr.bf16.mxu0 0
  %3282 = vmatpush1.bf16.msra.mxu0 %v2748
  %3283 = vmatprep.subr.bf16.mxu0 0
  %3284 = vmatpush1.bf16.msra.mxu0 %v2747
  %3285 = vmatprep.subr.bf16.mxu0 0
  %3286 = vmatpush1.bf16.msra.mxu0 %v2746
  %3287 = vmatprep.subr.bf16.mxu0 0
  %3288 = vmatpush1.bf16.msra.mxu0 %v2745
  %3289 = vmatprep.subr.bf16.mxu0 0
  %3290 = vmatpush2.bf16.msra.mxu0 %v2760
  %3291 = vmatprep.subr.bf16.mxu0 0
  %3292 = vmatpush2.bf16.msra.mxu0 %v2759
  %3293 = vmatprep.subr.bf16.mxu0 0
  %3294 = vmatpush2.bf16.msra.mxu0 %v2758
  %3295 = vmatprep.subr.bf16.mxu0 0
  %3296 = vmatpush2.bf16.msra.mxu0 %v2757
  %3297 = vmatprep.subr.bf16.mxu0 0
  %3298 = vmatpush2.bf16.msra.mxu0 %v2756
  %3299 = vmatprep.subr.bf16.mxu0 0
  %3300 = vmatpush2.bf16.msra.mxu0 %v2755
  %3301 = vmatprep.subr.bf16.mxu0 0
  %3302 = vmatpush2.bf16.msra.mxu0 %v2754
  %3303 = vmatprep.subr.bf16.mxu0 0
  %3304 = vmatpush2.bf16.msra.mxu0 %v2753
  %3305 = vmatprep.mubr.bf16.mxu0 %v1479
  %3306 = vmatmul.mubr.bf16.gmra.mxu0 %v1478
  %v3307 = vpop.f32.mrf.mxu0
  %v3308 = vadd.f32 %v3268, %v3307
  %v3309 = vpop.f32.mrf.mxu0
  %v3310 = vpop.f32.mrf.mxu0
  %v3311 = vpop.f32.mrf.mxu0
  %3312 = vdwg.mxu0
  %3313 = vmatprep.subr.bf16.mxu0 0
  %3314 = vmatpush1.bf16.msra.mxu0 %v2768
  %3315 = vmatprep.subr.bf16.mxu0 0
  %3316 = vmatpush1.bf16.msra.mxu0 %v2767
  %3317 = vmatprep.subr.bf16.mxu0 0
  %3318 = vmatpush1.bf16.msra.mxu0 %v2766
  %3319 = vmatprep.subr.bf16.mxu0 0
  %3320 = vmatpush1.bf16.msra.mxu0 %v2765
  %3321 = vmatprep.subr.bf16.mxu0 0
  %3322 = vmatpush1.bf16.msra.mxu0 %v2764
  %3323 = vmatprep.subr.bf16.mxu0 0
  %3324 = vmatpush1.bf16.msra.mxu0 %v2763
  %3325 = vmatprep.subr.bf16.mxu0 0
  %3326 = vmatpush1.bf16.msra.mxu0 %v2762
  %3327 = vmatprep.subr.bf16.mxu0 0
  %3328 = vmatpush1.bf16.msra.mxu0 %v2761
  %3329 = vmatprep.subr.bf16.mxu0 0
  %3330 = vmatpush2.bf16.msra.mxu0 %v2776
  %3331 = vmatprep.subr.bf16.mxu0 0
  %3332 = vmatpush2.bf16.msra.mxu0 %v2775
  %3333 = vmatprep.subr.bf16.mxu0 0
  %3334 = vmatpush2.bf16.msra.mxu0 %v2774
  %3335 = vmatprep.subr.bf16.mxu0 0
  %3336 = vmatpush2.bf16.msra.mxu0 %v2773
  %3337 = vmatprep.subr.bf16.mxu0 0
  %3338 = vmatpush2.bf16.msra.mxu0 %v2772
  %3339 = vmatprep.subr.bf16.mxu0 0
  %3340 = vmatpush2.bf16.msra.mxu0 %v2771
  %3341 = vmatprep.subr.bf16.mxu0 0
  %3342 = vmatpush2.bf16.msra.mxu0 %v2770
  %3343 = vmatprep.subr.bf16.mxu0 0
  %3344 = vmatpush2.bf16.msra.mxu0 %v2769
  %3345 = vmatprep.mubr.bf16.mxu0 %v1481
  %3346 = vmatmul.mubr.bf16.gmra.mxu0 %v1480
  %v3347 = vpop.f32.mrf.mxu0
  %v3348 = vadd.f32 %v3308, %v3347
  %v3349 = vpop.f32.mrf.mxu0
  %v3350 = vpop.f32.mrf.mxu0
  %v3351 = vpop.f32.mrf.mxu0
  %3352 = vdwg.mxu0
  %3353 = vmatprep.subr.bf16.mxu0 0
  %3354 = vmatpush1.bf16.msra.mxu0 %v2784
  %3355 = vmatprep.subr.bf16.mxu0 0
  %3356 = vmatpush1.bf16.msra.mxu0 %v2783
  %3357 = vmatprep.subr.bf16.mxu0 0
  %3358 = vmatpush1.bf16.msra.mxu0 %v2782
  %3359 = vmatprep.subr.bf16.mxu0 0
  %3360 = vmatpush1.bf16.msra.mxu0 %v2781
  %3361 = vmatprep.subr.bf16.mxu0 0
  %3362 = vmatpush1.bf16.msra.mxu0 %v2780
  %3363 = vmatprep.subr.bf16.mxu0 0
  %3364 = vmatpush1.bf16.msra.mxu0 %v2779
  %3365 = vmatprep.subr.bf16.mxu0 0
  %3366 = vmatpush1.bf16.msra.mxu0 %v2778
  %3367 = vmatprep.subr.bf16.mxu0 0
  %3368 = vmatpush1.bf16.msra.mxu0 %v2777
  %3369 = vmatprep.subr.bf16.mxu0 0
  %3370 = vmatpush2.bf16.msra.mxu0 %v2792
  %3371 = vmatprep.subr.bf16.mxu0 0
  %3372 = vmatpush2.bf16.msra.mxu0 %v2791
  %3373 = vmatprep.subr.bf16.mxu0 0
  %3374 = vmatpush2.bf16.msra.mxu0 %v2790
  %3375 = vmatprep.subr.bf16.mxu0 0
  %3376 = vmatpush2.bf16.msra.mxu0 %v2789
  %3377 = vmatprep.subr.bf16.mxu0 0
  %3378 = vmatpush2.bf16.msra.mxu0 %v2788
  %3379 = vmatprep.subr.bf16.mxu0 0
  %3380 = vmatpush2.bf16.msra.mxu0 %v2787
  %3381 = vmatprep.subr.bf16.mxu0 0
  %3382 = vmatpush2.bf16.msra.mxu0 %v2786
  %3383 = vmatprep.subr.bf16.mxu0 0
  %3384 = vmatpush2.bf16.msra.mxu0 %v2785
  %3385 = vmatprep.mubr.bf16.mxu0 %v1483
  %3386 = vmatmul.mubr.bf16.gmra.mxu0 %v1482
  %v3387 = vpop.f32.mrf.mxu0
  %v3388 = vadd.f32 %v3348, %v3387
  %v3389 = vpop.f32.mrf.mxu0
  %v3390 = vpop.f32.mrf.mxu0
  %v3391 = vpop.f32.mrf.mxu0
  %3392 = vdwg.mxu0
  %3393 = vmatprep.subr.bf16.mxu0 0
  %3394 = vmatpush1.bf16.msra.mxu0 %v2800
  %3395 = vmatprep.subr.bf16.mxu0 0
  %3396 = vmatpush1.bf16.msra.mxu0 %v2799
  %3397 = vmatprep.subr.bf16.mxu0 0
  %3398 = vmatpush1.bf16.msra.mxu0 %v2798
  %3399 = vmatprep.subr.bf16.mxu0 0
  %3400 = vmatpush1.bf16.msra.mxu0 %v2797
  %3401 = vmatprep.subr.bf16.mxu0 0
  %3402 = vmatpush1.bf16.msra.mxu0 %v2796
  %3403 = vmatprep.subr.bf16.mxu0 0
  %3404 = vmatpush1.bf16.msra.mxu0 %v2795
  %3405 = vmatprep.subr.bf16.mxu0 0
  %3406 = vmatpush1.bf16.msra.mxu0 %v2794
  %3407 = vmatprep.subr.bf16.mxu0 0
  %3408 = vmatpush1.bf16.msra.mxu0 %v2793
  %3409 = vmatprep.subr.bf16.mxu0 0
  %3410 = vmatpush2.bf16.msra.mxu0 %v2808
  %3411 = vmatprep.subr.bf16.mxu0 0
  %3412 = vmatpush2.bf16.msra.mxu0 %v2807
  %3413 = vmatprep.subr.bf16.mxu0 0
  %3414 = vmatpush2.bf16.msra.mxu0 %v2806
  %3415 = vmatprep.subr.bf16.mxu0 0
  %3416 = vmatpush2.bf16.msra.mxu0 %v2805
  %3417 = vmatprep.subr.bf16.mxu0 0
  %3418 = vmatpush2.bf16.msra.mxu0 %v2804
  %3419 = vmatprep.subr.bf16.mxu0 0
  %3420 = vmatpush2.bf16.msra.mxu0 %v2803
  %3421 = vmatprep.subr.bf16.mxu0 0
  %3422 = vmatpush2.bf16.msra.mxu0 %v2802
  %3423 = vmatprep.subr.bf16.mxu0 0
  %3424 = vmatpush2.bf16.msra.mxu0 %v2801
  %3425 = vmatprep.mubr.bf16.mxu0 %v1485
  %3426 = vmatmul.mubr.bf16.gmra.mxu0 %v1484
  %v3427 = vpop.f32.mrf.mxu0
  %v3428 = vadd.f32 %v3388, %v3427
  %v3429 = vpop.f32.mrf.mxu0
  %v3430 = vpop.f32.mrf.mxu0
  %v3431 = vpop.f32.mrf.mxu0
  %3432 = vdwg.mxu0
  %3433 = vmatprep.subr.bf16.mxu0 0
  %3434 = vmatpush1.bf16.msra.mxu0 %v2816
  %3435 = vmatprep.subr.bf16.mxu0 0
  %3436 = vmatpush1.bf16.msra.mxu0 %v2815
  %3437 = vmatprep.subr.bf16.mxu0 0
  %3438 = vmatpush1.bf16.msra.mxu0 %v2814
  %3439 = vmatprep.subr.bf16.mxu0 0
  %3440 = vmatpush1.bf16.msra.mxu0 %v2813
  %3441 = vmatprep.subr.bf16.mxu0 0
  %3442 = vmatpush1.bf16.msra.mxu0 %v2812
  %3443 = vmatprep.subr.bf16.mxu0 0
  %3444 = vmatpush1.bf16.msra.mxu0 %v2811
  %3445 = vmatprep.subr.bf16.mxu0 0
  %3446 = vmatpush1.bf16.msra.mxu0 %v2810
  %3447 = vmatprep.subr.bf16.mxu0 0
  %3448 = vmatpush1.bf16.msra.mxu0 %v2809
  %3449 = vmatprep.subr.bf16.mxu0 0
  %3450 = vmatpush2.bf16.msra.mxu0 %v2824
  %3451 = vmatprep.subr.bf16.mxu0 0
  %3452 = vmatpush2.bf16.msra.mxu0 %v2823
  %3453 = vmatprep.subr.bf16.mxu0 0
  %3454 = vmatpush2.bf16.msra.mxu0 %v2822
  %3455 = vmatprep.subr.bf16.mxu0 0
  %3456 = vmatpush2.bf16.msra.mxu0 %v2821
  %3457 = vmatprep.subr.bf16.mxu0 0
  %3458 = vmatpush2.bf16.msra.mxu0 %v2820
  %3459 = vmatprep.subr.bf16.mxu0 0
  %3460 = vmatpush2.bf16.msra.mxu0 %v2819
  %3461 = vmatprep.subr.bf16.mxu0 0
  %3462 = vmatpush2.bf16.msra.mxu0 %v2818
  %3463 = vmatprep.subr.bf16.mxu0 0
  %3464 = vmatpush2.bf16.msra.mxu0 %v2817
  %3465 = vmatprep.mubr.bf16.mxu0 %v1487
  %3466 = vmatmul.mubr.bf16.gmra.mxu0 %v1486
  %v3467 = vpop.f32.mrf.mxu0
  %v3468 = vadd.f32 %v3428, %v3467
  %v3469 = vpop.f32.mrf.mxu0
  %v3470 = vpop.f32.mrf.mxu0
  %v3471 = vpop.f32.mrf.mxu0
  %3472 = vdwg.mxu0
  %3473 = vmatprep.subr.bf16.mxu0 0
  %3474 = vmatpush1.bf16.msra.mxu0 %v2832
  %3475 = vmatprep.subr.bf16.mxu0 0
  %3476 = vmatpush1.bf16.msra.mxu0 %v2831
  %3477 = vmatprep.subr.bf16.mxu0 0
  %3478 = vmatpush1.bf16.msra.mxu0 %v2830
  %3479 = vmatprep.subr.bf16.mxu0 0
  %3480 = vmatpush1.bf16.msra.mxu0 %v2829
  %3481 = vmatprep.subr.bf16.mxu0 0
  %3482 = vmatpush1.bf16.msra.mxu0 %v2828
  %3483 = vmatprep.subr.bf16.mxu0 0
  %3484 = vmatpush1.bf16.msra.mxu0 %v2827
  %3485 = vmatprep.subr.bf16.mxu0 0
  %3486 = vmatpush1.bf16.msra.mxu0 %v2826
  %3487 = vmatprep.subr.bf16.mxu0 0
  %3488 = vmatpush1.bf16.msra.mxu0 %v2825
  %3489 = vmatprep.subr.bf16.mxu0 0
  %3490 = vmatpush2.bf16.msra.mxu0 %v2840
  %3491 = vmatprep.subr.bf16.mxu0 0
  %3492 = vmatpush2.bf16.msra.mxu0 %v2839
  %3493 = vmatprep.subr.bf16.mxu0 0
  %3494 = vmatpush2.bf16.msra.mxu0 %v2838
  %3495 = vmatprep.subr.bf16.mxu0 0
  %3496 = vmatpush2.bf16.msra.mxu0 %v2837
  %3497 = vmatprep.subr.bf16.mxu0 0
  %3498 = vmatpush2.bf16.msra.mxu0 %v2836
  %3499 = vmatprep.subr.bf16.mxu0 0
  %3500 = vmatpush2.bf16.msra.mxu0 %v2835
  %3501 = vmatprep.subr.bf16.mxu0 0
  %3502 = vmatpush2.bf16.msra.mxu0 %v2834
  %3503 = vmatprep.subr.bf16.mxu0 0
  %3504 = vmatpush2.bf16.msra.mxu0 %v2833
  %3505 = vmatprep.mubr.bf16.mxu0 %v1489
  %3506 = vmatmul.mubr.bf16.gmra.mxu0 %v1488
  %v3507 = vpop.f32.mrf.mxu0
  %v3508 = vadd.f32 %v3468, %v3507
  %v3509 = vpop.f32.mrf.mxu0
  %v3510 = vpop.f32.mrf.mxu0
  %v3511 = vpop.f32.mrf.mxu0
  %3512 = vdwg.mxu0
  %v3513 = vld [vmem:[%s5] sm:$0xff]
  %v3514 = vld [vmem:[%s5 + $0x8] sm:$0xff]
  %v3515 = vld [vmem:[%s5 + $0x10] sm:$0xff]
  %v3516 = vld [vmem:[%s5 + $0x18] sm:$0xff]
  %v3517 = vld [vmem:[%s5 + $0x20] sm:$0xff]
  %v3518 = vld [vmem:[%s5 + $0x28] sm:$0xff]
  %v3519 = vld [vmem:[%s5 + $0x30] sm:$0xff]
  %v3520 = vld [vmem:[%s5 + $0x38] sm:$0xf]
  %v3521 = vld [vmem:[%s6] sm:$0x1]
  %v3523 = vlaneseq
  %v3524 = vshrl.u32 %v3523, 7
  %v3525 = vsub.s32 0, %v3524
  %v3526 = vrot.slane %v3521, %v3525
  %v3529 = vsel %vm95, %v3508, 0
  %v3532 = vsel %vm164, %v3520, 0
  %3534 = vmatprep.subr.mxu0 0.0
  %3535 = vmatpush1.msra.mxu0 0.0
  %3536 = vmatprep.subr.mxu0 0.0
  %3537 = vmatpush1.msra.mxu0 0.0
  %3538 = vmatprep.subr.mxu0 0.0
  %3539 = vmatpush1.msra.mxu0 0.0
  %3540 = vmatprep.subr.mxu0 0.0
  %3541 = vmatpush1.msra.mxu0 0.0
  %3542 = vmatprep.subr.mxu0 0.0
  %3543 = vmatpush1.msra.mxu0 0.0
  %3544 = vmatprep.subr.mxu0 0.0
  %3545 = vmatpush1.msra.mxu0 0.0
  %3546 = vmatprep.subr.mxu0 0.0
  %3547 = vmatpush1.msra.mxu0 0.0
  %3548 = vmatprep.subr.mxu0 0.0
  %3549 = vmatpush1.msra.mxu0 0.0
  %3550 = vmatprep.subr.mxu0 0.0
  %3551 = vmatpush1.msra.mxu0 %v3532
  %3552 = vmatprep.subr.mxu0 0.0
  %3553 = vmatpush1.msra.mxu0 %v3519
  %3554 = vmatprep.subr.mxu0 0.0
  %3555 = vmatpush1.msra.mxu0 %v3518
  %3556 = vmatprep.subr.mxu0 0.0
  %3557 = vmatpush1.msra.mxu0 %v3517
  %3558 = vmatprep.subr.mxu0 0.0
  %3559 = vmatpush1.msra.mxu0 %v3516
  %3560 = vmatprep.subr.mxu0 0.0
  %3561 = vmatpush1.msra.mxu0 %v3515
  %3562 = vmatprep.subr.mxu0 0.0
  %3563 = vmatpush1.msra.mxu0 %v3514
  %3564 = vmatprep.subr.mxu0 0.0
  %3565 = vmatpush1.msra.mxu0 %v3513
  %3566 = vmatprep.subr.mxu0 0.0
  %3567 = vmatpush2.msra.mxu0 0.0
  %3568 = vmatprep.subr.mxu0 0.0
  %3569 = vmatpush2.msra.mxu0 0.0
  %3570 = vmatprep.subr.mxu0 0.0
  %3571 = vmatpush2.msra.mxu0 0.0
  %3572 = vmatprep.subr.mxu0 0.0
  %3573 = vmatpush2.msra.mxu0 0.0
  %3574 = vmatprep.subr.mxu0 0.0
  %3575 = vmatpush2.msra.mxu0 0.0
  %3576 = vmatprep.subr.mxu0 0.0
  %3577 = vmatpush2.msra.mxu0 0.0
  %3578 = vmatprep.subr.mxu0 0.0
  %3579 = vmatpush2.msra.mxu0 0.0
  %3580 = vmatprep.subr.mxu0 0.0
  %3581 = vmatpush2.msra.mxu0 0.0
  %3582 = vmatprep.subr.mxu0 0.0
  %3583 = vmatpush2.msra.mxu0 0.0
  %3584 = vmatprep.subr.mxu0 0.0
  %3585 = vmatpush2.msra.mxu0 0.0
  %3586 = vmatprep.subr.mxu0 0.0
  %3587 = vmatpush2.msra.mxu0 0.0
  %3588 = vmatprep.subr.mxu0 0.0
  %3589 = vmatpush2.msra.mxu0 0.0
  %3590 = vmatprep.subr.mxu0 0.0
  %3591 = vmatpush2.msra.mxu0 0.0
  %3592 = vmatprep.subr.mxu0 0.0
  %3593 = vmatpush2.msra.mxu0 0.0
  %3594 = vmatprep.subr.mxu0 0.0
  %3595 = vmatpush2.msra.mxu0 0.0
  %3596 = vmatprep.subr.mxu0 0.0
  %3597 = vmatpush2.msra.mxu0 0.0
  %3598 = vmatprep.mubr.f32.mxu0 0.0
  %3599 = vmatmul.mubr.f32.gmra.mxu0 %v3529
  %v3600 = vpop.f32.mrf.mxu0
  %v3601 = vadd.f32 %v3526, %v3600
  %v3602 = vpop.f32.mrf.mxu0
  %3603 = vdwg.mxu0
  %v3604 = vmax.f32 %v3601, 0.0
  %v3605 = vld [vmem:[%s7] sm:$0xff]
  %v3606 = vld [vmem:[%s7 + $0x8] sm:$0xff]
  %v3607 = vld [vmem:[%s7 + $0x10] sm:$0xf]
  %v3608 = vld [vmem:[#allocation6] sm:$0x1]
  %v3610 = vlaneseq
  %v3611 = vshrl.u32 %v3610, 7
  %v3612 = vsub.s32 0, %v3611
  %v3613 = vrot.slane %v3608, %v3612
  %vm3615 = vcmask 162816
  %v3617 = vsel %vm3615, %v3604, 0
  %v3620 = vsel %vm164, %v3607, 0
  %3622 = vmatprep.subr.mxu0 0.0
  %3623 = vmatpush1.msra.mxu0 0.0
  %3624 = vmatprep.subr.mxu0 0.0
  %3625 = vmatpush1.msra.mxu0 0.0
  %3626 = vmatprep.subr.mxu0 0.0
  %3627 = vmatpush1.msra.mxu0 0.0
  %3628 = vmatprep.subr.mxu0 0.0
  %3629 = vmatpush1.msra.mxu0 0.0
  %3630 = vmatprep.subr.mxu0 0.0
  %3631 = vmatpush1.msra.mxu0 0.0
  %3632 = vmatprep.subr.mxu0 0.0
  %3633 = vmatpush1.msra.mxu0 0.0
  %3634 = vmatprep.subr.mxu0 0.0
  %3635 = vmatpush1.msra.mxu0 0.0
  %3636 = vmatprep.subr.mxu0 0.0
  %3637 = vmatpush1.msra.mxu0 0.0
  %3638 = vmatprep.subr.mxu0 0.0
  %3639 = vmatpush1.msra.mxu0 0.0
  %3640 = vmatprep.subr.mxu0 0.0
  %3641 = vmatpush1.msra.mxu0 0.0
  %3642 = vmatprep.subr.mxu0 0.0
  %3643 = vmatpush1.msra.mxu0 0.0
  %3644 = vmatprep.subr.mxu0 0.0
  %3645 = vmatpush1.msra.mxu0 0.0
  %3646 = vmatprep.subr.mxu0 0.0
  %3647 = vmatpush1.msra.mxu0 0.0
  %3648 = vmatprep.subr.mxu0 0.0
  %3649 = vmatpush1.msra.mxu0 %v3620
  %3650 = vmatprep.subr.mxu0 0.0
  %3651 = vmatpush1.msra.mxu0 %v3606
  %3652 = vmatprep.subr.mxu0 0.0
  %3653 = vmatpush1.msra.mxu0 %v3605
  %3654 = vmatprep.subr.mxu0 0.0
  %3655 = vmatpush2.msra.mxu0 0.0
  %3656 = vmatprep.subr.mxu0 0.0
  %3657 = vmatpush2.msra.mxu0 0.0
  %3658 = vmatprep.subr.mxu0 0.0
  %3659 = vmatpush2.msra.mxu0 0.0
  %3660 = vmatprep.subr.mxu0 0.0
  %3661 = vmatpush2.msra.mxu0 0.0
  %3662 = vmatprep.subr.mxu0 0.0
  %3663 = vmatpush2.msra.mxu0 0.0
  %3664 = vmatprep.subr.mxu0 0.0
  %3665 = vmatpush2.msra.mxu0 0.0
  %3666 = vmatprep.subr.mxu0 0.0
  %3667 = vmatpush2.msra.mxu0 0.0
  %3668 = vmatprep.subr.mxu0 0.0
  %3669 = vmatpush2.msra.mxu0 0.0
  %3670 = vmatprep.subr.mxu0 0.0
  %3671 = vmatpush2.msra.mxu0 0.0
  %3672 = vmatprep.subr.mxu0 0.0
  %3673 = vmatpush2.msra.mxu0 0.0
  %3674 = vmatprep.subr.mxu0 0.0
  %3675 = vmatpush2.msra.mxu0 0.0
  %3676 = vmatprep.subr.mxu0 0.0
  %3677 = vmatpush2.msra.mxu0 0.0
  %3678 = vmatprep.subr.mxu0 0.0
  %3679 = vmatpush2.msra.mxu0 0.0
  %3680 = vmatprep.subr.mxu0 0.0
  %3681 = vmatpush2.msra.mxu0 0.0
  %3682 = vmatprep.subr.mxu0 0.0
  %3683 = vmatpush2.msra.mxu0 0.0
  %3684 = vmatprep.subr.mxu0 0.0
  %3685 = vmatpush2.msra.mxu0 0.0
  %3686 = vmatprep.mubr.f32.mxu0 0.0
  %3687 = vmatmul.mubr.f32.gmra.mxu0 %v3617
  %v3688 = vpop.f32.mrf.mxu0
  %v3689 = vadd.f32 %v3613, %v3688
  %v3690 = vpop.f32.mrf.mxu0
  %3691 = vdwg.mxu0
  %vm3692 = vcmask 1024
  %3693 = vst.msk [vmem:[%s9] sm:$0x3] %vm3692, %v3689
  // Predicated region
  $region38: #{tpu_custom_call.1} parent=0 // pred_check
    _
  $region39: #{tpu_custom_call.1} parent=0 // pred_check_branch
    %3695 = sbr.rel (0) target = $region41
  $region40: #{tpu_custom_call.1} parent=0 // pred_region
    _
  $region41: #{tpu_custom_call.1} parent=0 // pred_fallthru
    _
  // Predicated region
  $region42: #{tpu_custom_call.1} parent=0 // pred_check
    _
  $region43: #{tpu_custom_call.1} parent=0 // pred_check_branch
    %3697 = sbr.rel (0) target = $region45
  $region44: #{tpu_custom_call.1} parent=0 // pred_region
    _
  $region45: #{tpu_custom_call.1} parent=0 // pred_fallthru
    _

</llo_original>
